<compile_context>
chip_gen: v7x
topology: tpu7x:2x2x1
jax: 0.10.0
libtpu: 0.0.40
codegen_flags: <defaults>
</compile_context>

<pallas_src>
import jax
import jax.numpy as jnp
from jax.experimental import pallas as pl
from jax.experimental.pallas import tpu as pltpu


# ----------------------------------------------------------------------------
# Fused kernel
# ----------------------------------------------------------------------------
def _make_convblock_kernel(H, W, maxpool):
    """Build the fused conv-conv-pool kernel for a fixed (H, W) image size.

    Flat-row trick: an NHWC image flattened to rows (H*W, C) with row stride W
    means the 3x3 tap (ky, kx) of flat output position q is simply row
    q + ky*W + kx.  So a whole VALID conv is 9 slab matmuls; flat rows whose
    column index >= W-2 (W-4 after conv2) are don't-care values that valid
    outputs never read, and are cropped before the store.
    """
    H1, W1 = H - 2, W - 2          # after conv1
    H2, W2 = H - 4, W - 4          # after conv2
    Hp, Wp = H2 // 2, W2 // 2      # after 2x2/2 maxpool
    M1 = H1 * W + 2                # flat h1 rows conv2 needs (row stride W)
    M2 = H2 * W                    # flat h2 rows (reshaped to (H2, W) at store)

    def kernel(x_ref, w1_ref, b1_ref, w2_ref, b2_ref, *rest):
        # x_ref : (Lx, Cin)  flat image, Lx >= H*W + 4 (zero padded)
        # w*_ref: (9, Cin/Cout, Cout)  tap-major;  b*_ref: (1, Cout)
        # outs  : o2_ref (H2, W2, Cout) [, op_ref (Hp, Wp, Cout)]
        # scratch: h1_ref (M1, Cout) f32
        if maxpool:
            o2_ref, op_ref, h1_ref = rest
        else:
            o2_ref, h1_ref = rest
        Cout = o2_ref.shape[-1]

        def conv3x3_relu(src_ref, w_ref, b_ref, m):
            # Accumulator initialised with the (broadcast) bias: no per-row
            # broadcasts, no trailing add.
            acc = jnp.broadcast_to(b_ref[...].astype(jnp.float32), (m, Cout))
            for ky in range(3):              # 9 static taps only
                for kx in range(3):
                    acc = acc + jnp.dot(
                        src_ref[pl.ds(ky * W + kx, m), :],
                        w_ref[ky * 3 + kx],
                        preferred_element_type=jnp.float32)
            return jnp.maximum(acc, 0.0)

        # conv1 + ReLU -> VMEM scratch (never touches HBM).
        h1_ref[...] = conv3x3_relu(x_ref, w1_ref, b1_ref, M1)

        # conv2 + ReLU, crop the 2 don't-care columns, store once.
        h2 = conv3x3_relu(h1_ref, w2_ref, b2_ref, M2)          # (H2*W, Cout)
        h2_img = h2.reshape(H2, W, Cout)
        o2_ref[...] = h2_img[:, :W2, :].astype(o2_ref.dtype)

        if maxpool:
            # Fused 2x2 / stride-2 maxpool, read back from the VMEM output
            # block (no HBM round trip of h2, no separate kernel launch).
            a = o2_ref[pl.ds(0, Hp, 2), pl.ds(0, Wp, 2), :]
            b = o2_ref[pl.ds(0, Hp, 2), pl.ds(1, Wp, 2), :]
            c = o2_ref[pl.ds(1, Hp, 2), pl.ds(0, Wp, 2), :]
            d = o2_ref[pl.ds(1, Hp, 2), pl.ds(1, Wp, 2), :]
            op_ref[...] = jnp.maximum(jnp.maximum(a, b), jnp.maximum(c, d))

    return kernel, M1


# ----------------------------------------------------------------------------
# Wrappers
# ----------------------------------------------------------------------------
def prepare_conv_weights(w_oihw):
    """PyTorch OIHW (O, I, 3, 3) -> tap-major (9, I, O). Do once at init."""
    o, i = w_oihw.shape[0], w_oihw.shape[1]
    return jnp.transpose(w_oihw, (2, 3, 1, 0)).reshape(9, i, o)


def conv_block_nhwc(x_nhwc, w1_taps, b1, w2_taps, b2, maxpool=False):
    """Fused ConvBlock on NHWC activations; weights from prepare_conv_weights."""
    N, H, W, Cin = x_nhwc.shape
    Cout = w1_taps.shape[-1]
    H2, W2 = H - 4, W - 4
    Hp, Wp = H2 // 2, W2 // 2

    kernel, M1 = _make_convblock_kernel(H, W, maxpool)

    # Flatten to (H*W, Cin) rows (free reshape) and zero-pad a few rows so
    # every tap's slab slice stays in bounds.
    Lx = ((H * W + 4) + 7) // 8 * 8
    x_flat = jnp.pad(x_nhwc.reshape(N, H * W, Cin),
                     ((0, 0), (0, Lx - H * W), (0, 0)))

    out_shape = [jax.ShapeDtypeStruct((N, H2, W2, Cout), x_nhwc.dtype)]
    out_specs = [pl.BlockSpec((None, H2, W2, Cout), lambda n: (n, 0, 0, 0))]
    if maxpool:
        out_shape.append(jax.ShapeDtypeStruct((N, Hp, Wp, Cout), x_nhwc.dtype))
        out_specs.append(
            pl.BlockSpec((None, Hp, Wp, Cout), lambda n: (n, 0, 0, 0)))

    outs = pl.pallas_call(
        kernel,
        out_shape=tuple(out_shape) if maxpool else out_shape[0],
        grid=(N,),
        in_specs=[
            pl.BlockSpec((None, Lx, Cin), lambda n: (n, 0, 0)),
            pl.BlockSpec((9, Cin, Cout), lambda n: (0, 0, 0)),
            pl.BlockSpec((1, Cout), lambda n: (0, 0)),
            pl.BlockSpec((9, Cout, Cout), lambda n: (0, 0, 0)),
            pl.BlockSpec((1, Cout), lambda n: (0, 0)),
        ],
        out_specs=tuple(out_specs) if maxpool else out_specs[0],
        scratch_shapes=[pltpu.VMEM((M1, Cout), jnp.float32)],
        compiler_params=pltpu.CompilerParams(
            dimension_semantics=("parallel",)),
    )(x_flat, w1_taps, b1.reshape(1, -1), w2_taps, b2.reshape(1, -1))

    if maxpool:
        out_conv2, pooled = outs
        return pooled, out_conv2
    return outs


def conv_block(x_nchw, w1, b1, w2, b2, maxpool=False):
    """PyTorch-parity adapter: NCHW activations, OIHW weights, (Cout,) biases.

    The layout conversions here are model-boundary only; inside a full UNet
    keep activations NHWC end-to-end and call conv_block_nhwc directly with
    weights prepared once at load time.
    """
    x = jnp.transpose(x_nchw, (0, 2, 3, 1))            # NCHW -> NHWC
    w1_t = prepare_conv_weights(w1)
    w2_t = prepare_conv_weights(w2)
    if maxpool:
        pooled, out2 = conv_block_nhwc(x, w1_t, b1, w2_t, b2, maxpool=True)
        return (jnp.transpose(pooled, (0, 3, 1, 2)),
                jnp.transpose(out2, (0, 3, 1, 2)))
    out2 = conv_block_nhwc(x, w1_t, b1, w2_t, b2, maxpool=False)
    return jnp.transpose(out2, (0, 3, 1, 2))


# ----------------------------------------------------------------------------
# Pure-JAX reference (correctness check only)
# ----------------------------------------------------------------------------
def _ref_forward(x, w1, b1, w2, b2, maxpool):
    def conv_relu(x, w, b):
        y = jax.lax.conv_general_dilated(
            x, w, window_strides=(1, 1), padding="VALID",
            dimension_numbers=("NCHW", "OIHW", "NCHW"))
        return jnp.maximum(y + b[None, :, None, None], 0.0)

    h1 = conv_relu(x, w1, b1)
    h2 = conv_relu(h1, w2, b2)
    if maxpool:
        p = jax.lax.reduce_window(h2, -jnp.inf, jax.lax.max,
                                  (1, 1, 2, 2), (1, 1, 2, 2), "VALID")
        return p, h2
    return h2


if __name__ == "__main__":
    key = jax.random.PRNGKey(0)
    k1, k2, k3, k4, kx = jax.random.split(key, 5)

    in_c, out_c = 4, 8
    N, H, W = 2, 16, 16

    # Deterministic synthetic parameters (PyTorch Conv2d shapes: OIHW + bias).
    w1 = jax.random.normal(k1, (out_c, in_c, 3, 3), jnp.float32) * 0.1
    b1 = jax.random.normal(k2, (out_c,), jnp.float32) * 0.1
    w2 = jax.random.normal(k3, (out_c, out_c, 3, 3), jnp.float32) * 0.1
    b2 = jax.random.normal(k4, (out_c,), jnp.float32) * 0.1

    x = jax.random.normal(kx, (N, in_c, H, W), jnp.float32)

    # maxpool=True path: returns (pooled, pre-pool activations).
    pooled, out_conv2 = conv_block(x, w1, b1, w2, b2, maxpool=True)
    jax.block_until_ready((pooled, out_conv2))

    ref_pooled, ref_out2 = _ref_forward(x, w1, b1, w2, b2, maxpool=True)
    assert out_conv2.shape == (N, out_c, H - 4, W - 4)
    assert pooled.shape == (N, out_c, (H - 4) // 2, (W - 4) // 2)
    assert jnp.allclose(out_conv2, ref_out2, rtol=1e-4, atol=1e-4)
    assert jnp.allclose(pooled, ref_pooled, rtol=1e-4, atol=1e-4)

    # maxpool=False path.
    out_only = conv_block(x, w1, b1, w2, b2, maxpool=False)
    jax.block_until_ready(out_only)
    ref_only = _ref_forward(x, w1, b1, w2, b2, maxpool=False)
    assert jnp.allclose(out_only, ref_only, rtol=1e-4, atol=1e-4)

    print("KERNEL_OK")
</pallas_src>

<mosaic_0001>
module attributes {stable_mosaic.version = 11 : i64} {
  func.func @kernel(%arg0: i32, %arg1: memref<1x264x4xf32, #tpu.memory_space<vmem>>, %arg2: memref<9x4x8xf32, #tpu.memory_space<vmem>>, %arg3: memref<1x8xf32, #tpu.memory_space<vmem>>, %arg4: memref<9x8x8xf32, #tpu.memory_space<vmem>>, %arg5: memref<1x8xf32, #tpu.memory_space<vmem>>, %arg6: memref<1x12x12x8xf32, #tpu.memory_space<vmem>>, %arg7: memref<1x6x6x8xf32, #tpu.memory_space<vmem>>, %arg8: memref<226x8xf32, #tpu.memory_space<vmem>>) attributes {dimension_semantics = [#tpu.dimension_semantics<parallel>], iteration_bounds = array<i64: 2>, scalar_prefetch = 0 : i64, scratch_operands = 1 : i64, tpu.core_type = #tpu.core_type<tc>, window_params = [{transform_indices = @transform_0, window_bounds = array<i64: 1, 264, 4>}, {pipeline_mode = #tpu.pipeline_mode<synchronous>, transform_indices = @transform_1, window_bounds = array<i64: 9, 4, 8>}, {pipeline_mode = #tpu.pipeline_mode<synchronous>, transform_indices = @transform_2, window_bounds = array<i64: 1, 8>}, {pipeline_mode = #tpu.pipeline_mode<synchronous>, transform_indices = @transform_3, window_bounds = array<i64: 9, 8, 8>}, {pipeline_mode = #tpu.pipeline_mode<synchronous>, transform_indices = @transform_4, window_bounds = array<i64: 1, 8>}, {transform_indices = @transform_5, window_bounds = array<i64: 1, 12, 12, 8>}, {transform_indices = @transform_6, window_bounds = array<i64: 1, 6, 6, 8>}]} {
    %c0 = arith.constant 0 : index
    %c0_0 = arith.constant 0 : index
    %0 = vector.load %arg3[%c0, %c0_0] : memref<1x8xf32, #tpu.memory_space<vmem>>, vector<1x8xf32>
    %1 = vector.shape_cast %0 : vector<1x8xf32> to vector<1x8xf32>
    %2 = vector.broadcast %1 : vector<1x8xf32> to vector<226x8xf32>
    %c0_1 = arith.constant 0 : index
    %c0_2 = arith.constant 0 : index
    %c0_3 = arith.constant 0 : index
    %3 = vector.load %arg1[%c0_1, %c0_2, %c0_3] : memref<1x264x4xf32, #tpu.memory_space<vmem>>, vector<1x226x4xf32>
    %4 = vector.shape_cast %3 : vector<1x226x4xf32> to vector<226x4xf32>
    %c0_4 = arith.constant 0 : index
    %c0_5 = arith.constant 0 : index
    %c0_6 = arith.constant 0 : index
    %5 = vector.load %arg2[%c0_4, %c0_5, %c0_6] : memref<9x4x8xf32, #tpu.memory_space<vmem>>, vector<1x4x8xf32>
    %6 = vector.shape_cast %5 : vector<1x4x8xf32> to vector<4x8xf32>
    %cst = arith.constant dense<0.000000e+00> : vector<226x8xf32>
    %7 = tpu.matmul %4, %6, %cst {dimension_numbers = #tpu.dot_dimension_numbers<[1], [0], [0], [1], [0, 0, 1, 1], [], []>} : vector<226x4xf32>, vector<4x8xf32>, vector<226x8xf32> -> vector<226x8xf32>
    %8 = arith.addf %2, %7 : vector<226x8xf32>
    %c0_7 = arith.constant 0 : index
    %c1 = arith.constant 1 : index
    %c0_8 = arith.constant 0 : index
    %9 = vector.load %arg1[%c0_7, %c1, %c0_8] : memref<1x264x4xf32, #tpu.memory_space<vmem>>, vector<1x226x4xf32>
    %10 = vector.shape_cast %9 : vector<1x226x4xf32> to vector<226x4xf32>
    %c1_9 = arith.constant 1 : index
    %c0_10 = arith.constant 0 : index
    %c0_11 = arith.constant 0 : index
    %11 = vector.load %arg2[%c1_9, %c0_10, %c0_11] : memref<9x4x8xf32, #tpu.memory_space<vmem>>, vector<1x4x8xf32>
    %12 = vector.shape_cast %11 : vector<1x4x8xf32> to vector<4x8xf32>
    %cst_12 = arith.constant dense<0.000000e+00> : vector<226x8xf32>
    %13 = tpu.matmul %10, %12, %cst_12 {dimension_numbers = #tpu.dot_dimension_numbers<[1], [0], [0], [1], [0, 0, 1, 1], [], []>} : vector<226x4xf32>, vector<4x8xf32>, vector<226x8xf32> -> vector<226x8xf32>
    %14 = arith.addf %8, %13 : vector<226x8xf32>
    %c0_13 = arith.constant 0 : index
    %c2 = arith.constant 2 : index
    %c0_14 = arith.constant 0 : index
    %15 = vector.load %arg1[%c0_13, %c2, %c0_14] : memref<1x264x4xf32, #tpu.memory_space<vmem>>, vector<1x226x4xf32>
    %16 = vector.shape_cast %15 : vector<1x226x4xf32> to vector<226x4xf32>
    %c2_15 = arith.constant 2 : index
    %c0_16 = arith.constant 0 : index
    %c0_17 = arith.constant 0 : index
    %17 = vector.load %arg2[%c2_15, %c0_16, %c0_17] : memref<9x4x8xf32, #tpu.memory_space<vmem>>, vector<1x4x8xf32>
    %18 = vector.shape_cast %17 : vector<1x4x8xf32> to vector<4x8xf32>
    %cst_18 = arith.constant dense<0.000000e+00> : vector<226x8xf32>
    %19 = tpu.matmul %16, %18, %cst_18 {dimension_numbers = #tpu.dot_dimension_numbers<[1], [0], [0], [1], [0, 0, 1, 1], [], []>} : vector<226x4xf32>, vector<4x8xf32>, vector<226x8xf32> -> vector<226x8xf32>
    %20 = arith.addf %14, %19 : vector<226x8xf32>
    %c0_19 = arith.constant 0 : index
    %c16 = arith.constant 16 : index
    %c0_20 = arith.constant 0 : index
    %21 = vector.load %arg1[%c0_19, %c16, %c0_20] : memref<1x264x4xf32, #tpu.memory_space<vmem>>, vector<1x226x4xf32>
    %22 = vector.shape_cast %21 : vector<1x226x4xf32> to vector<226x4xf32>
    %c3 = arith.constant 3 : index
    %c0_21 = arith.constant 0 : index
    %c0_22 = arith.constant 0 : index
    %23 = vector.load %arg2[%c3, %c0_21, %c0_22] : memref<9x4x8xf32, #tpu.memory_space<vmem>>, vector<1x4x8xf32>
    %24 = vector.shape_cast %23 : vector<1x4x8xf32> to vector<4x8xf32>
    %cst_23 = arith.constant dense<0.000000e+00> : vector<226x8xf32>
    %25 = tpu.matmul %22, %24, %cst_23 {dimension_numbers = #tpu.dot_dimension_numbers<[1], [0], [0], [1], [0, 0, 1, 1], [], []>} : vector<226x4xf32>, vector<4x8xf32>, vector<226x8xf32> -> vector<226x8xf32>
    %26 = arith.addf %20, %25 : vector<226x8xf32>
    %c0_24 = arith.constant 0 : index
    %c17 = arith.constant 17 : index
    %c0_25 = arith.constant 0 : index
    %27 = vector.load %arg1[%c0_24, %c17, %c0_25] : memref<1x264x4xf32, #tpu.memory_space<vmem>>, vector<1x226x4xf32>
    %28 = vector.shape_cast %27 : vector<1x226x4xf32> to vector<226x4xf32>
    %c4 = arith.constant 4 : index
    %c0_26 = arith.constant 0 : index
    %c0_27 = arith.constant 0 : index
    %29 = vector.load %arg2[%c4, %c0_26, %c0_27] : memref<9x4x8xf32, #tpu.memory_space<vmem>>, vector<1x4x8xf32>
    %30 = vector.shape_cast %29 : vector<1x4x8xf32> to vector<4x8xf32>
    %cst_28 = arith.constant dense<0.000000e+00> : vector<226x8xf32>
    %31 = tpu.matmul %28, %30, %cst_28 {dimension_numbers = #tpu.dot_dimension_numbers<[1], [0], [0], [1], [0, 0, 1, 1], [], []>} : vector<226x4xf32>, vector<4x8xf32>, vector<226x8xf32> -> vector<226x8xf32>
    %32 = arith.addf %26, %31 : vector<226x8xf32>
    %c0_29 = arith.constant 0 : index
    %c18 = arith.constant 18 : index
    %c0_30 = arith.constant 0 : index
    %33 = vector.load %arg1[%c0_29, %c18, %c0_30] : memref<1x264x4xf32, #tpu.memory_space<vmem>>, vector<1x226x4xf32>
    %34 = vector.shape_cast %33 : vector<1x226x4xf32> to vector<226x4xf32>
    %c5 = arith.constant 5 : index
    %c0_31 = arith.constant 0 : index
    %c0_32 = arith.constant 0 : index
    %35 = vector.load %arg2[%c5, %c0_31, %c0_32] : memref<9x4x8xf32, #tpu.memory_space<vmem>>, vector<1x4x8xf32>
    %36 = vector.shape_cast %35 : vector<1x4x8xf32> to vector<4x8xf32>
    %cst_33 = arith.constant dense<0.000000e+00> : vector<226x8xf32>
    %37 = tpu.matmul %34, %36, %cst_33 {dimension_numbers = #tpu.dot_dimension_numbers<[1], [0], [0], [1], [0, 0, 1, 1], [], []>} : vector<226x4xf32>, vector<4x8xf32>, vector<226x8xf32> -> vector<226x8xf32>
    %38 = arith.addf %32, %37 : vector<226x8xf32>
    %c0_34 = arith.constant 0 : index
    %c32 = arith.constant 32 : index
    %c0_35 = arith.constant 0 : index
    %39 = vector.load %arg1[%c0_34, %c32, %c0_35] : memref<1x264x4xf32, #tpu.memory_space<vmem>>, vector<1x226x4xf32>
    %40 = vector.shape_cast %39 : vector<1x226x4xf32> to vector<226x4xf32>
    %c6 = arith.constant 6 : index
    %c0_36 = arith.constant 0 : index
    %c0_37 = arith.constant 0 : index
    %41 = vector.load %arg2[%c6, %c0_36, %c0_37] : memref<9x4x8xf32, #tpu.memory_space<vmem>>, vector<1x4x8xf32>
    %42 = vector.shape_cast %41 : vector<1x4x8xf32> to vector<4x8xf32>
    %cst_38 = arith.constant dense<0.000000e+00> : vector<226x8xf32>
    %43 = tpu.matmul %40, %42, %cst_38 {dimension_numbers = #tpu.dot_dimension_numbers<[1], [0], [0], [1], [0, 0, 1, 1], [], []>} : vector<226x4xf32>, vector<4x8xf32>, vector<226x8xf32> -> vector<226x8xf32>
    %44 = arith.addf %38, %43 : vector<226x8xf32>
    %c0_39 = arith.constant 0 : index
    %c33 = arith.constant 33 : index
    %c0_40 = arith.constant 0 : index
    %45 = vector.load %arg1[%c0_39, %c33, %c0_40] : memref<1x264x4xf32, #tpu.memory_space<vmem>>, vector<1x226x4xf32>
    %46 = vector.shape_cast %45 : vector<1x226x4xf32> to vector<226x4xf32>
    %c7 = arith.constant 7 : index
    %c0_41 = arith.constant 0 : index
    %c0_42 = arith.constant 0 : index
    %47 = vector.load %arg2[%c7, %c0_41, %c0_42] : memref<9x4x8xf32, #tpu.memory_space<vmem>>, vector<1x4x8xf32>
    %48 = vector.shape_cast %47 : vector<1x4x8xf32> to vector<4x8xf32>
    %cst_43 = arith.constant dense<0.000000e+00> : vector<226x8xf32>
    %49 = tpu.matmul %46, %48, %cst_43 {dimension_numbers = #tpu.dot_dimension_numbers<[1], [0], [0], [1], [0, 0, 1, 1], [], []>} : vector<226x4xf32>, vector<4x8xf32>, vector<226x8xf32> -> vector<226x8xf32>
    %50 = arith.addf %44, %49 : vector<226x8xf32>
    %c0_44 = arith.constant 0 : index
    %c34 = arith.constant 34 : index
    %c0_45 = arith.constant 0 : index
    %51 = vector.load %arg1[%c0_44, %c34, %c0_45] : memref<1x264x4xf32, #tpu.memory_space<vmem>>, vector<1x226x4xf32>
    %52 = vector.shape_cast %51 : vector<1x226x4xf32> to vector<226x4xf32>
    %c8 = arith.constant 8 : index
    %c0_46 = arith.constant 0 : index
    %c0_47 = arith.constant 0 : index
    %53 = vector.load %arg2[%c8, %c0_46, %c0_47] : memref<9x4x8xf32, #tpu.memory_space<vmem>>, vector<1x4x8xf32>
    %54 = vector.shape_cast %53 : vector<1x4x8xf32> to vector<4x8xf32>
    %cst_48 = arith.constant dense<0.000000e+00> : vector<226x8xf32>
    %55 = tpu.matmul %52, %54, %cst_48 {dimension_numbers = #tpu.dot_dimension_numbers<[1], [0], [0], [1], [0, 0, 1, 1], [], []>} : vector<226x4xf32>, vector<4x8xf32>, vector<226x8xf32> -> vector<226x8xf32>
    %56 = arith.addf %50, %55 : vector<226x8xf32>
    %cst_49 = arith.constant 0.000000e+00 : f32
    %57 = vector.broadcast %cst_49 : f32 to vector<226x8xf32>
    %58 = arith.maximumf %56, %57 : vector<226x8xf32>
    %c0_50 = arith.constant 0 : index
    %c0_51 = arith.constant 0 : index
    %59 = vector.load %arg8[%c0_50, %c0_51] : memref<226x8xf32, #tpu.memory_space<vmem>>, vector<226x8xf32>
    tpu.vector_store %arg8[%c0_50, %c0_51], %58 {strides = array<i32>} : memref<226x8xf32, #tpu.memory_space<vmem>>, vector<226x8xf32>,
    %c0_52 = arith.constant 0 : index
    %c0_53 = arith.constant 0 : index
    %60 = vector.load %arg5[%c0_52, %c0_53] : memref<1x8xf32, #tpu.memory_space<vmem>>, vector<1x8xf32>
    %61 = vector.shape_cast %60 : vector<1x8xf32> to vector<1x8xf32>
    %62 = vector.broadcast %61 : vector<1x8xf32> to vector<192x8xf32>
    %c0_54 = arith.constant 0 : index
    %c0_55 = arith.constant 0 : index
    %63 = vector.load %arg8[%c0_54, %c0_55] : memref<226x8xf32, #tpu.memory_space<vmem>>, vector<192x8xf32>
    %c0_56 = arith.constant 0 : index
    %c0_57 = arith.constant 0 : index
    %c0_58 = arith.constant 0 : index
    %64 = vector.load %arg4[%c0_56, %c0_57, %c0_58] : memref<9x8x8xf32, #tpu.memory_space<vmem>>, vector<1x8x8xf32>
    %65 = vector.shape_cast %64 : vector<1x8x8xf32> to vector<8x8xf32>
    %cst_59 = arith.constant dense<0.000000e+00> : vector<192x8xf32>
    %66 = tpu.matmul %63, %65, %cst_59 {dimension_numbers = #tpu.dot_dimension_numbers<[1], [0], [0], [1], [0, 0, 1, 1], [], []>} : vector<192x8xf32>, vector<8x8xf32>, vector<192x8xf32> -> vector<192x8xf32>
    %67 = arith.addf %62, %66 : vector<192x8xf32>
    %c1_60 = arith.constant 1 : index
    %c0_61 = arith.constant 0 : index
    %68 = vector.load %arg8[%c1_60, %c0_61] : memref<226x8xf32, #tpu.memory_space<vmem>>, vector<192x8xf32>
    %c1_62 = arith.constant 1 : index
    %c0_63 = arith.constant 0 : index
    %c0_64 = arith.constant 0 : index
    %69 = vector.load %arg4[%c1_62, %c0_63, %c0_64] : memref<9x8x8xf32, #tpu.memory_space<vmem>>, vector<1x8x8xf32>
    %70 = vector.shape_cast %69 : vector<1x8x8xf32> to vector<8x8xf32>
    %cst_65 = arith.constant dense<0.000000e+00> : vector<192x8xf32>
    %71 = tpu.matmul %68, %70, %cst_65 {dimension_numbers = #tpu.dot_dimension_numbers<[1], [0], [0], [1], [0, 0, 1, 1], [], []>} : vector<192x8xf32>, vector<8x8xf32>, vector<192x8xf32> -> vector<192x8xf32>
    %72 = arith.addf %67, %71 : vector<192x8xf32>
    %c2_66 = arith.constant 2 : index
    %c0_67 = arith.constant 0 : index
    %73 = vector.load %arg8[%c2_66, %c0_67] : memref<226x8xf32, #tpu.memory_space<vmem>>, vector<192x8xf32>
    %c2_68 = arith.constant 2 : index
    %c0_69 = arith.constant 0 : index
    %c0_70 = arith.constant 0 : index
    %74 = vector.load %arg4[%c2_68, %c0_69, %c0_70] : memref<9x8x8xf32, #tpu.memory_space<vmem>>, vector<1x8x8xf32>
    %75 = vector.shape_cast %74 : vector<1x8x8xf32> to vector<8x8xf32>
    %cst_71 = arith.constant dense<0.000000e+00> : vector<192x8xf32>
    %76 = tpu.matmul %73, %75, %cst_71 {dimension_numbers = #tpu.dot_dimension_numbers<[1], [0], [0], [1], [0, 0, 1, 1], [], []>} : vector<192x8xf32>, vector<8x8xf32>, vector<192x8xf32> -> vector<192x8xf32>
    %77 = arith.addf %72, %76 : vector<192x8xf32>
    %c16_72 = arith.constant 16 : index
    %c0_73 = arith.constant 0 : index
    %78 = vector.load %arg8[%c16_72, %c0_73] : memref<226x8xf32, #tpu.memory_space<vmem>>, vector<192x8xf32>
    %c3_74 = arith.constant 3 : index
    %c0_75 = arith.constant 0 : index
    %c0_76 = arith.constant 0 : index
    %79 = vector.load %arg4[%c3_74, %c0_75, %c0_76] : memref<9x8x8xf32, #tpu.memory_space<vmem>>, vector<1x8x8xf32>
    %80 = vector.shape_cast %79 : vector<1x8x8xf32> to vector<8x8xf32>
    %cst_77 = arith.constant dense<0.000000e+00> : vector<192x8xf32>
    %81 = tpu.matmul %78, %80, %cst_77 {dimension_numbers = #tpu.dot_dimension_numbers<[1], [0], [0], [1], [0, 0, 1, 1], [], []>} : vector<192x8xf32>, vector<8x8xf32>, vector<192x8xf32> -> vector<192x8xf32>
    %82 = arith.addf %77, %81 : vector<192x8xf32>
    %c17_78 = arith.constant 17 : index
    %c0_79 = arith.constant 0 : index
    %83 = vector.load %arg8[%c17_78, %c0_79] : memref<226x8xf32, #tpu.memory_space<vmem>>, vector<192x8xf32>
    %c4_80 = arith.constant 4 : index
    %c0_81 = arith.constant 0 : index
    %c0_82 = arith.constant 0 : index
    %84 = vector.load %arg4[%c4_80, %c0_81, %c0_82] : memref<9x8x8xf32, #tpu.memory_space<vmem>>, vector<1x8x8xf32>
    %85 = vector.shape_cast %84 : vector<1x8x8xf32> to vector<8x8xf32>
    %cst_83 = arith.constant dense<0.000000e+00> : vector<192x8xf32>
    %86 = tpu.matmul %83, %85, %cst_83 {dimension_numbers = #tpu.dot_dimension_numbers<[1], [0], [0], [1], [0, 0, 1, 1], [], []>} : vector<192x8xf32>, vector<8x8xf32>, vector<192x8xf32> -> vector<192x8xf32>
    %87 = arith.addf %82, %86 : vector<192x8xf32>
    %c18_84 = arith.constant 18 : index
    %c0_85 = arith.constant 0 : index
    %88 = vector.load %arg8[%c18_84, %c0_85] : memref<226x8xf32, #tpu.memory_space<vmem>>, vector<192x8xf32>
    %c5_86 = arith.constant 5 : index
    %c0_87 = arith.constant 0 : index
    %c0_88 = arith.constant 0 : index
    %89 = vector.load %arg4[%c5_86, %c0_87, %c0_88] : memref<9x8x8xf32, #tpu.memory_space<vmem>>, vector<1x8x8xf32>
    %90 = vector.shape_cast %89 : vector<1x8x8xf32> to vector<8x8xf32>
    %cst_89 = arith.constant dense<0.000000e+00> : vector<192x8xf32>
    %91 = tpu.matmul %88, %90, %cst_89 {dimension_numbers = #tpu.dot_dimension_numbers<[1], [0], [0], [1], [0, 0, 1, 1], [], []>} : vector<192x8xf32>, vector<8x8xf32>, vector<192x8xf32> -> vector<192x8xf32>
    %92 = arith.addf %87, %91 : vector<192x8xf32>
    %c32_90 = arith.constant 32 : index
    %c0_91 = arith.constant 0 : index
    %93 = vector.load %arg8[%c32_90, %c0_91] : memref<226x8xf32, #tpu.memory_space<vmem>>, vector<192x8xf32>
    %c6_92 = arith.constant 6 : index
    %c0_93 = arith.constant 0 : index
    %c0_94 = arith.constant 0 : index
    %94 = vector.load %arg4[%c6_92, %c0_93, %c0_94] : memref<9x8x8xf32, #tpu.memory_space<vmem>>, vector<1x8x8xf32>
    %95 = vector.shape_cast %94 : vector<1x8x8xf32> to vector<8x8xf32>
    %cst_95 = arith.constant dense<0.000000e+00> : vector<192x8xf32>
    %96 = tpu.matmul %93, %95, %cst_95 {dimension_numbers = #tpu.dot_dimension_numbers<[1], [0], [0], [1], [0, 0, 1, 1], [], []>} : vector<192x8xf32>, vector<8x8xf32>, vector<192x8xf32> -> vector<192x8xf32>
    %97 = arith.addf %92, %96 : vector<192x8xf32>
    %c33_96 = arith.constant 33 : index
    %c0_97 = arith.constant 0 : index
    %98 = vector.load %arg8[%c33_96, %c0_97] : memref<226x8xf32, #tpu.memory_space<vmem>>, vector<192x8xf32>
    %c7_98 = arith.constant 7 : index
    %c0_99 = arith.constant 0 : index
    %c0_100 = arith.constant 0 : index
    %99 = vector.load %arg4[%c7_98, %c0_99, %c0_100] : memref<9x8x8xf32, #tpu.memory_space<vmem>>, vector<1x8x8xf32>
    %100 = vector.shape_cast %99 : vector<1x8x8xf32> to vector<8x8xf32>
    %cst_101 = arith.constant dense<0.000000e+00> : vector<192x8xf32>
    %101 = tpu.matmul %98, %100, %cst_101 {dimension_numbers = #tpu.dot_dimension_numbers<[1], [0], [0], [1], [0, 0, 1, 1], [], []>} : vector<192x8xf32>, vector<8x8xf32>, vector<192x8xf32> -> vector<192x8xf32>
    %102 = arith.addf %97, %101 : vector<192x8xf32>
    %c34_102 = arith.constant 34 : index
    %c0_103 = arith.constant 0 : index
    %103 = vector.load %arg8[%c34_102, %c0_103] : memref<226x8xf32, #tpu.memory_space<vmem>>, vector<192x8xf32>
    %c8_104 = arith.constant 8 : index
    %c0_105 = arith.constant 0 : index
    %c0_106 = arith.constant 0 : index
    %104 = vector.load %arg4[%c8_104, %c0_105, %c0_106] : memref<9x8x8xf32, #tpu.memory_space<vmem>>, vector<1x8x8xf32>
    %105 = vector.shape_cast %104 : vector<1x8x8xf32> to vector<8x8xf32>
    %cst_107 = arith.constant dense<0.000000e+00> : vector<192x8xf32>
    %106 = tpu.matmul %103, %105, %cst_107 {dimension_numbers = #tpu.dot_dimension_numbers<[1], [0], [0], [1], [0, 0, 1, 1], [], []>} : vector<192x8xf32>, vector<8x8xf32>, vector<192x8xf32> -> vector<192x8xf32>
    %107 = arith.addf %102, %106 : vector<192x8xf32>
    %cst_108 = arith.constant 0.000000e+00 : f32
    %108 = vector.broadcast %cst_108 : f32 to vector<192x8xf32>
    %109 = arith.maximumf %107, %108 : vector<192x8xf32>
    %110 = vector.shape_cast %109 : vector<192x8xf32> to vector<12x16x8xf32>
    %111 = vector.extract_strided_slice %110 {offsets = [0, 0, 0], sizes = [12, 12, 8], strides = [1, 1, 1]} : vector<12x16x8xf32> to vector<12x12x8xf32>
    %c0_109 = arith.constant 0 : index
    %c0_110 = arith.constant 0 : index
    %c0_111 = arith.constant 0 : index
    %c0_112 = arith.constant 0 : index
    %112 = vector.load %arg6[%c0_109, %c0_110, %c0_111, %c0_112] : memref<1x12x12x8xf32, #tpu.memory_space<vmem>>, vector<1x12x12x8xf32>
    %113 = vector.shape_cast %112 : vector<1x12x12x8xf32> to vector<12x12x8xf32>
    %114 = vector.shape_cast %111 : vector<12x12x8xf32> to vector<1x12x12x8xf32>
    tpu.vector_store %arg6[%c0_109, %c0_110, %c0_111, %c0_112], %114 {strides = array<i32>} : memref<1x12x12x8xf32, #tpu.memory_space<vmem>>, vector<1x12x12x8xf32>,
    %c0_113 = arith.constant 0 : index
    %c0_114 = arith.constant 0 : index
    %c0_115 = arith.constant 0 : index
    %c0_116 = arith.constant 0 : index
    %115 = tpu.strided_load %arg6[%c0_113, %c0_114, %c0_115, %c0_116] {strides = array<i32: 1, 2, 2, 1>} : memref<1x12x12x8xf32, #tpu.memory_space<vmem>>, vector<1x6x6x8xf32>
    %116 = vector.shape_cast %115 : vector<1x6x6x8xf32> to vector<6x6x8xf32>
    %c0_117 = arith.constant 0 : index
    %c0_118 = arith.constant 0 : index
    %c1_119 = arith.constant 1 : index
    %c0_120 = arith.constant 0 : index
    %117 = tpu.strided_load %arg6[%c0_117, %c0_118, %c1_119, %c0_120] {strides = array<i32: 1, 2, 2, 1>} : memref<1x12x12x8xf32, #tpu.memory_space<vmem>>, vector<1x6x6x8xf32>
    %118 = vector.shape_cast %117 : vector<1x6x6x8xf32> to vector<6x6x8xf32>
    %c0_121 = arith.constant 0 : index
    %c1_122 = arith.constant 1 : index
    %c0_123 = arith.constant 0 : index
    %c0_124 = arith.constant 0 : index
    %119 = tpu.strided_load %arg6[%c0_121, %c1_122, %c0_123, %c0_124] {strides = array<i32: 1, 2, 2, 1>} : memref<1x12x12x8xf32, #tpu.memory_space<vmem>>, vector<1x6x6x8xf32>
    %120 = vector.shape_cast %119 : vector<1x6x6x8xf32> to vector<6x6x8xf32>
    %c0_125 = arith.constant 0 : index
    %c1_126 = arith.constant 1 : index
    %c1_127 = arith.constant 1 : index
    %c0_128 = arith.constant 0 : index
    %121 = tpu.strided_load %arg6[%c0_125, %c1_126, %c1_127, %c0_128] {strides = array<i32: 1, 2, 2, 1>} : memref<1x12x12x8xf32, #tpu.memory_space<vmem>>, vector<1x6x6x8xf32>
    %122 = vector.shape_cast %121 : vector<1x6x6x8xf32> to vector<6x6x8xf32>
    %123 = arith.maximumf %116, %118 : vector<6x6x8xf32>
    %124 = arith.maximumf %120, %122 : vector<6x6x8xf32>
    %125 = arith.maximumf %123, %124 : vector<6x6x8xf32>
    %c0_129 = arith.constant 0 : index
    %c0_130 = arith.constant 0 : index
    %c0_131 = arith.constant 0 : index
    %c0_132 = arith.constant 0 : index
    %126 = vector.load %arg7[%c0_129, %c0_130, %c0_131, %c0_132] : memref<1x6x6x8xf32, #tpu.memory_space<vmem>>, vector<1x6x6x8xf32>
    %127 = vector.shape_cast %126 : vector<1x6x6x8xf32> to vector<6x6x8xf32>
    %128 = vector.shape_cast %125 : vector<6x6x8xf32> to vector<1x6x6x8xf32>
    tpu.vector_store %arg7[%c0_129, %c0_130, %c0_131, %c0_132], %128 {strides = array<i32>} : memref<1x6x6x8xf32, #tpu.memory_space<vmem>>, vector<1x6x6x8xf32>,
    return
  }
  func.func @transform_0(%arg0: i32) -> (i32, i32, i32) {
    %c0_i32 = arith.constant 0 : i32
    %c0_i32_0 = arith.constant 0 : i32
    %c0_i32_1 = arith.constant 0 : i32
    return %arg0, %c0_i32, %c0_i32_0 : i32, i32, i32
  }
  func.func @transform_1(%arg0: i32) -> (i32, i32, i32) {
    %c0_i32 = arith.constant 0 : i32
    %c0_i32_0 = arith.constant 0 : i32
    %c0_i32_1 = arith.constant 0 : i32
    %c0_i32_2 = arith.constant 0 : i32
    return %c0_i32, %c0_i32_0, %c0_i32_1 : i32, i32, i32
  }
  func.func @transform_2(%arg0: i32) -> (i32, i32) {
    %c0_i32 = arith.constant 0 : i32
    %c0_i32_0 = arith.constant 0 : i32
    %c0_i32_1 = arith.constant 0 : i32
    return %c0_i32, %c0_i32_0 : i32, i32
  }
  func.func @transform_3(%arg0: i32) -> (i32, i32, i32) {
    %c0_i32 = arith.constant 0 : i32
    %c0_i32_0 = arith.constant 0 : i32
    %c0_i32_1 = arith.constant 0 : i32
    %c0_i32_2 = arith.constant 0 : i32
    return %c0_i32, %c0_i32_0, %c0_i32_1 : i32, i32, i32
  }
  func.func @transform_4(%arg0: i32) -> (i32, i32) {
    %c0_i32 = arith.constant 0 : i32
    %c0_i32_0 = arith.constant 0 : i32
    %c0_i32_1 = arith.constant 0 : i32
    return %c0_i32, %c0_i32_0 : i32, i32
  }
  func.func @transform_5(%arg0: i32) -> (i32, i32, i32, i32) {
    %c0_i32 = arith.constant 0 : i32
    %c0_i32_0 = arith.constant 0 : i32
    %c0_i32_1 = arith.constant 0 : i32
    %c0_i32_2 = arith.constant 0 : i32
    return %arg0, %c0_i32, %c0_i32_0, %c0_i32_1 : i32, i32, i32, i32
  }
  func.func @transform_6(%arg0: i32) -> (i32, i32, i32, i32) {
    %c0_i32 = arith.constant 0 : i32
    %c0_i32_0 = arith.constant 0 : i32
    %c0_i32_1 = arith.constant 0 : i32
    %c0_i32_2 = arith.constant 0 : i32
    return %arg0, %c0_i32, %c0_i32_0, %c0_i32_1 : i32, i32, i32, i32
  }
}

</mosaic_0001>

<llo_original>
// kernel: tpu_custom_call.1
$region0: #{tpu_custom_call.1}
  #allocation0 [shape = 'u32[]', space=smem, size = 0x4, offset = 0x4, fixed_abs, tag = 'smem constant byte address 0x4 - core index']
  #allocation1 [shape = 'u32[144,128]{1,0:T(1,128)}', space=vmem, size = 0x12000, scoped, tag = 'internal scratch']
  #allocation2 [shape = 'f32[226,8]{1,0:T(8,128)}', space=vmem, size = 0x1d000, scoped, tag = 'scratch operand']
  %s0 = inlined_call_operand.vmem [shape: f32[2,264,4], index: 0, kind: input, shape index: {}]
  %s1 = inlined_call_operand.vmem [shape: f32[9,4,8], index: 1, kind: input, shape index: {}]
  %s2 = inlined_call_operand.vmem [shape: f32[1,8], index: 2, kind: input, shape index: {}]
  %s3 = inlined_call_operand.vmem [shape: f32[9,8,8], index: 3, kind: input, shape index: {}]
  %s4 = inlined_call_operand.vmem [shape: f32[1,8], index: 4, kind: input, shape index: {}]
  %s5 = inlined_call_operand.vmem [shape: f32[2,12,12,8], index: 5, kind: output, shape index: {0}]
  %s6 = inlined_call_operand.vmem [shape: f32[2,6,6,8], index: 6, kind: output, shape index: {1}]
  %7 = xla_tuple %s5, %s6
  %s8 = sld [smem:[#allocation0]]
  $region61: #{tpu_custom_call.1} parent=0
    _
  %s10 = ssub.s32 1, %s8
  %s11 = scalar_select 0, %s10, %s8
  loop: start=0, step=1, limit=4
  $region2: #{tpu_custom_call.1} parent=0 // loop_pre_header
    _
  $region3: #{tpu_custom_call.1} parent=0 // loop_header
    %s13 = sphi 0, %s17
    %p14 = scmp.ge.s32.totalorder %s13, 4
    %s23 = sphi 0, %s25
    %s26 = sphi 0, %s23
    %s27 = sphi 0, %s26
    %s43 = sphi 0, %s27
    %s47 = sphi 0, %s47
    %s49 = sphi 0, %s47
    %s50 = sphi 0, %s49
    %s64 = sphi 0, %s50
    %s68 = sphi 0, %s68
    %s70 = sphi 0, %s68
    %s71 = sphi 0, %s70
    %s85 = sphi 0, %s71
    %s89 = sphi 0, %s89
    %s91 = sphi 0, %s89
    %s92 = sphi 0, %s91
    %s106 = sphi 0, %s92
    %s110 = sphi 0, %s110
    %s112 = sphi 0, %s110
    %s113 = sphi 0, %s112
    %s127 = sphi 0, %s113
    %s133 = sphi 0, %s135
    %s136 = sphi 0, %s133
    %s137 = sphi 0, %s136
    %s153 = sphi 0, %s137
    %s159 = sphi 0, %s161
    %s162 = sphi 0, %s159
    %s163 = sphi 0, %s162
    %s179 = sphi 0, %s163
  $region4: #{tpu_custom_call.1} parent=0 // loop_header_branch
    %16 = sbr.rel (%p14) target = $region8
  $region5: #{tpu_custom_call.1} parent=0 // loop_body
    %s18 = ssub.s32 %s13, 1
    %s19 = ssub.s32 %s13, 2
    %s20 = sadd.s32 %s13, 1
    %s21 = ssub.s32 %s13, %s20
    %p22 = scmp.eq.s32.totalorder %s21, 0
    %s24 = sadd.s32 %s23, 1
    %s25 = scalar_select %p22, %s23, %s24
    %p28 = pneg %p22
    %p29 = scmp.eq.s32.totalorder %s13, 1
    %p30 = por %p28, %p29
    %p31 = scmp.ne.s32.totalorder %s23, %s26
    %p32 = scmp.eq.s32.totalorder %s13, 0
    %p33 = por %p31, %p32
    %p34 = scmp.ne.s32.totalorder %s23, %s26
    %p35 = scmp.eq.s32.totalorder %s18, 1
    %p36 = por %p34, %p35
    %p37 = scmp.ne.s32.totalorder %s26, %s27
    %p38 = scmp.eq.s32.totalorder %s18, 0
    %p39 = por %p37, %p38
    %p40 = scmp.ne.s32.totalorder %s26, %s27
    %p41 = scmp.eq.s32.totalorder %s19, 1
    %p42 = por %p40, %p41
    %p44 = scmp.ne.s32.totalorder %s27, %s43
    %p45 = scmp.eq.s32.totalorder %s19, 0
    %p46 = por %p44, %p45
    %s48 = sadd.s32 %s47, 1
    %p51 = scmp.eq.s32.totalorder %s13, 1
    %p52 = scmp.ne.s32.totalorder %s47, %s49
    %p53 = scmp.eq.s32.totalorder %s13, 0
    %p54 = por %p52, %p53
    %p55 = scmp.ne.s32.totalorder %s47, %s49
    %p56 = scmp.eq.s32.totalorder %s18, 1
    %p57 = por %p55, %p56
    %p58 = scmp.ne.s32.totalorder %s49, %s50
    %p59 = scmp.eq.s32.totalorder %s18, 0
    %p60 = por %p58, %p59
    %p61 = scmp.ne.s32.totalorder %s49, %s50
    %p62 = scmp.eq.s32.totalorder %s19, 1
    %p63 = por %p61, %p62
    %p65 = scmp.ne.s32.totalorder %s50, %s64
    %p66 = scmp.eq.s32.totalorder %s19, 0
    %p67 = por %p65, %p66
    %s69 = sadd.s32 %s68, 1
    %p72 = scmp.eq.s32.totalorder %s13, 1
    %p73 = scmp.ne.s32.totalorder %s68, %s70
    %p74 = scmp.eq.s32.totalorder %s13, 0
    %p75 = por %p73, %p74
    %p76 = scmp.ne.s32.totalorder %s68, %s70
    %p77 = scmp.eq.s32.totalorder %s18, 1
    %p78 = por %p76, %p77
    %p79 = scmp.ne.s32.totalorder %s70, %s71
    %p80 = scmp.eq.s32.totalorder %s18, 0
    %p81 = por %p79, %p80
    %p82 = scmp.ne.s32.totalorder %s70, %s71
    %p83 = scmp.eq.s32.totalorder %s19, 1
    %p84 = por %p82, %p83
    %p86 = scmp.ne.s32.totalorder %s71, %s85
    %p87 = scmp.eq.s32.totalorder %s19, 0
    %p88 = por %p86, %p87
    %s90 = sadd.s32 %s89, 1
    %p93 = scmp.eq.s32.totalorder %s13, 1
    %p94 = scmp.ne.s32.totalorder %s89, %s91
    %p95 = scmp.eq.s32.totalorder %s13, 0
    %p96 = por %p94, %p95
    %p97 = scmp.ne.s32.totalorder %s89, %s91
    %p98 = scmp.eq.s32.totalorder %s18, 1
    %p99 = por %p97, %p98
    %p100 = scmp.ne.s32.totalorder %s91, %s92
    %p101 = scmp.eq.s32.totalorder %s18, 0
    %p102 = por %p100, %p101
    %p103 = scmp.ne.s32.totalorder %s91, %s92
    %p104 = scmp.eq.s32.totalorder %s19, 1
    %p105 = por %p103, %p104
    %p107 = scmp.ne.s32.totalorder %s92, %s106
    %p108 = scmp.eq.s32.totalorder %s19, 0
    %p109 = por %p107, %p108
    %s111 = sadd.s32 %s110, 1
    %p114 = scmp.eq.s32.totalorder %s13, 1
    %p115 = scmp.ne.s32.totalorder %s110, %s112
    %p116 = scmp.eq.s32.totalorder %s13, 0
    %p117 = por %p115, %p116
    %p118 = scmp.ne.s32.totalorder %s110, %s112
    %p119 = scmp.eq.s32.totalorder %s18, 1
    %p120 = por %p118, %p119
    %p121 = scmp.ne.s32.totalorder %s112, %s113
    %p122 = scmp.eq.s32.totalorder %s18, 0
    %p123 = por %p121, %p122
    %p124 = scmp.ne.s32.totalorder %s112, %s113
    %p125 = scmp.eq.s32.totalorder %s19, 1
    %p126 = por %p124, %p125
    %p128 = scmp.ne.s32.totalorder %s113, %s127
    %p129 = scmp.eq.s32.totalorder %s19, 0
    %p130 = por %p128, %p129
    %s131 = ssub.s32 %s13, %s20
    %p132 = scmp.eq.s32.totalorder %s131, 0
    %s134 = sadd.s32 %s133, 1
    %s135 = scalar_select %p132, %s133, %s134
    %p138 = pneg %p132
    %p139 = scmp.eq.s32.totalorder %s13, 1
    %p140 = por %p138, %p139
    %p141 = scmp.ne.s32.totalorder %s133, %s136
    %p142 = scmp.eq.s32.totalorder %s13, 0
    %p143 = por %p141, %p142
    %p144 = scmp.ne.s32.totalorder %s133, %s136
    %p145 = scmp.eq.s32.totalorder %s18, 1
    %p146 = por %p144, %p145
    %p147 = scmp.ne.s32.totalorder %s136, %s137
    %p148 = scmp.eq.s32.totalorder %s18, 0
    %p149 = por %p147, %p148
    %p150 = scmp.ne.s32.totalorder %s136, %s137
    %p151 = scmp.eq.s32.totalorder %s19, 1
    %p152 = por %p150, %p151
    %p154 = scmp.ne.s32.totalorder %s137, %s153
    %p155 = scmp.eq.s32.totalorder %s19, 0
    %p156 = por %p154, %p155
    %s157 = ssub.s32 %s13, %s20
    %p158 = scmp.eq.s32.totalorder %s157, 0
    %s160 = sadd.s32 %s159, 1
    %s161 = scalar_select %p158, %s159, %s160
    %p164 = pneg %p158
    %p165 = scmp.eq.s32.totalorder %s13, 1
    %p166 = por %p164, %p165
    %p167 = scmp.ne.s32.totalorder %s159, %s162
    %p168 = scmp.eq.s32.totalorder %s13, 0
    %p169 = por %p167, %p168
    %p170 = scmp.ne.s32.totalorder %s159, %s162
    %p171 = scmp.eq.s32.totalorder %s18, 1
    %p172 = por %p170, %p171
    %p173 = scmp.ne.s32.totalorder %s162, %s163
    %p174 = scmp.eq.s32.totalorder %s18, 0
    %p175 = por %p173, %p174
    %p176 = scmp.ne.s32.totalorder %s162, %s163
    %p177 = scmp.eq.s32.totalorder %s19, 1
    %p178 = por %p176, %p177
    %p180 = scmp.ne.s32.totalorder %s163, %s179
    %p181 = scmp.eq.s32.totalorder %s19, 0
    %p182 = por %p180, %p181
    %p183 = scmp.le.s32.totalorder 1, %s13
    %p184 = scmp.lt.s32.totalorder %s13, 3
    %p185 = pnand %p183, %p184
    %p186 = pneg %p185
    // Predicated region
    $region9: #{tpu_custom_call.1} parent=5 // pred_check
      _
    $region10: #{tpu_custom_call.1} parent=5 // pred_check_branch
      %188 = sbr.rel (%p185) target = $region12
    $region11: #{tpu_custom_call.1} parent=5 // pred_region
      %s189 = ssub.s32 %s13, 1
      // Predicated region
      $region13: #{tpu_custom_call.1} parent=11 // pred_check
        %p190 = pneg %p60
      $region14: #{tpu_custom_call.1} parent=11 // pred_check_branch
        %192 = sbr.rel (%p190) target = $region16
      $region15: #{tpu_custom_call.1} parent=11 // pred_region
        _
      $region16: #{tpu_custom_call.1} parent=11 // pred_fallthru
        _
      // Predicated region
      $region17: #{tpu_custom_call.1} parent=11 // pred_check
        %p193 = pneg %p81
      $region18: #{tpu_custom_call.1} parent=11 // pred_check_branch
        %195 = sbr.rel (%p193) target = $region20
      $region19: #{tpu_custom_call.1} parent=11 // pred_region
        _
      $region20: #{tpu_custom_call.1} parent=11 // pred_fallthru
        _
      // Predicated region
      $region21: #{tpu_custom_call.1} parent=11 // pred_check
        %p196 = pneg %p102
      $region22: #{tpu_custom_call.1} parent=11 // pred_check_branch
        %198 = sbr.rel (%p196) target = $region24
      $region23: #{tpu_custom_call.1} parent=11 // pred_region
        _
      $region24: #{tpu_custom_call.1} parent=11 // pred_fallthru
        _
      // Predicated region
      $region25: #{tpu_custom_call.1} parent=11 // pred_check
        %p199 = pneg %p123
      $region26: #{tpu_custom_call.1} parent=11 // pred_check_branch
        %201 = sbr.rel (%p199) target = $region28
      $region27: #{tpu_custom_call.1} parent=11 // pred_region
        _
      $region28: #{tpu_custom_call.1} parent=11 // pred_fallthru
        _
    $region12: #{tpu_custom_call.1} parent=5 // pred_fallthru
      _
    %p202 = scmp.lt.s32.totalorder %s13, 2
    // Predicated region
    $region29: #{tpu_custom_call.1} parent=5 // pred_check
      %p203 = pneg %p202
    $region30: #{tpu_custom_call.1} parent=5 // pred_check_branch
      %205 = sbr.rel (%p203) target = $region32
    $region31: #{tpu_custom_call.1} parent=5 // pred_region
      // Predicated region
      $region33: #{tpu_custom_call.1} parent=31 // pred_check
        %p206 = pneg %p33
      $region34: #{tpu_custom_call.1} parent=31 // pred_check_branch
        %208 = sbr.rel (%p206) target = $region36
      $region35: #{tpu_custom_call.1} parent=31 // pred_region
        %p209 = scmp.lt.s32.totalorder %s13, 1
        %s210 = scalar_select %p209, %s13, 1
        %s211 = smul.addr %s210, 33
        %s212 = smul.addr %s211, 8
        %s213 = scalar_lea.vmem %s0, %s212
      $region36: #{tpu_custom_call.1} parent=31 // pred_fallthru
        _
    $region32: #{tpu_custom_call.1} parent=5 // pred_fallthru
      _
    %p214 = scmp.le.s32.totalorder 1, %s13
    %p215 = scmp.lt.s32.totalorder %s13, 3
    %p216 = pnand %p214, %p215
    %p217 = pneg %p216
    // Predicated region
    $region37: #{tpu_custom_call.1} parent=5 // pred_check
      _
    $region38: #{tpu_custom_call.1} parent=5 // pred_check_branch
      %219 = sbr.rel (%p216) target = $region40
    $region39: #{tpu_custom_call.1} parent=5 // pred_region
      %s220 = ssub.s32 %s13, 1
      %p221 = scmp.lt.s32.totalorder %s18, 1
      %s222 = scalar_select %p221, %s18, 1
      %s223 = smul.addr %s222, 33
      %s224 = smul.addr %s223, 8
      %s225 = scalar_lea.vmem %s0, %s224
      %p226 = pneg %p39
      %p227 = pneg %p36
      %p228 = pneg %p60
      %p229 = pneg %p57
      %p230 = pneg %p81
      %p231 = pneg %p78
      %p232 = pneg %p102
      %p233 = pneg %p99
      %p234 = pneg %p123
      %p235 = pneg %p120
      %p236 = pneg %p149
      %p237 = pneg %p146
      %p238 = scmp.lt.s32.totalorder %s18, 1
      %s239 = scalar_select %p238, %s18, 1
      %s240 = smul.addr %s239, 24
      %s241 = smul.addr %s240, 8
      %s242 = scalar_lea.vmem %s5, %s241
      %p243 = pneg %p175
      %p244 = pneg %p172
      %p245 = scmp.lt.s32.totalorder %s18, 1
      %s246 = scalar_select %p245, %s18, 1
      %s247 = smul.addr %s246, 6
      %s248 = smul.addr %s247, 8
      %s249 = scalar_lea.vmem %s6, %s248
      %p250 = scmp.lt.s32.totalorder %s18, 1
      %s251 = scalar_select %p250, %s18, 1
      %s252 = smul.addr %s251, 33
      %s253 = smul.addr %s252, 8
      %s254 = scalar_lea.vmem %s0, %s253
      %p255 = scmp.lt.s32.totalorder %s18, 1
      %s256 = scalar_select %p255, %s18, 1
      %s257 = smul.addr %s256, 24
      %s258 = smul.addr %s257, 8
      %s259 = scalar_lea.vmem %s5, %s258
      %p260 = scmp.lt.s32.totalorder %s18, 1
      %s261 = scalar_select %p260, %s18, 1
      %s262 = smul.addr %s261, 6
      %s263 = smul.addr %s262, 8
      %s264 = scalar_lea.vmem %s6, %s263
      %v265 = vld [vmem:[%s2] sm:$0x1]
      %v267 = vlaneseq
      %v268 = vshrl.u32 %v267, 7
      %v269 = vsub.s32 0, %v268
      %v270 = vrot.slane %v265, %v269
      %v272 = vld [vmem:[%s254] sm:$0xff]
      %v273 = vld [vmem:[%s254 + $0x8] sm:$0xff]
      %v274 = vld [vmem:[%s254 + $0x10] sm:$0xff]
      %v275 = vld [vmem:[%s254 + $0x18] sm:$0xff]
      %v276 = vld [vmem:[%s254 + $0x20] sm:$0xff]
      %v277 = vld [vmem:[%s254 + $0x28] sm:$0xff]
      %v278 = vld [vmem:[%s254 + $0x30] sm:$0xff]
      %v279 = vld [vmem:[%s254 + $0x38] sm:$0xff]
      %v280 = vld [vmem:[%s254 + $0x40] sm:$0xff]
      %v281 = vld [vmem:[%s254 + $0x48] sm:$0xff]
      %v282 = vld [vmem:[%s254 + $0x50] sm:$0xff]
      %v283 = vld [vmem:[%s254 + $0x58] sm:$0xff]
      %v284 = vld [vmem:[%s254 + $0x60] sm:$0xff]
      %v285 = vld [vmem:[%s254 + $0x68] sm:$0xff]
      %v286 = vld [vmem:[%s254 + $0x70] sm:$0xff]
      %v287 = vld [vmem:[%s254 + $0x78] sm:$0xff]
      %v288 = vld [vmem:[%s254 + $0x80] sm:$0xff]
      %v289 = vld [vmem:[%s254 + $0x88] sm:$0xff]
      %v290 = vld [vmem:[%s254 + $0x90] sm:$0xff]
      %v291 = vld [vmem:[%s254 + $0x98] sm:$0xff]
      %v292 = vld [vmem:[%s254 + $0xa0] sm:$0xff]
      %v293 = vld [vmem:[%s254 + $0xa8] sm:$0xff]
      %v294 = vld [vmem:[%s254 + $0xb0] sm:$0xff]
      %v295 = vld [vmem:[%s254 + $0xb8] sm:$0xff]
      %v296 = vld [vmem:[%s254 + $0xc0] sm:$0xff]
      %v297 = vld [vmem:[%s254 + $0xc8] sm:$0xff]
      %v298 = vld [vmem:[%s254 + $0xd0] sm:$0xff]
      %v299 = vld [vmem:[%s254 + $0xd8] sm:$0xff]
      %v300 = vld [vmem:[%s254 + $0xe0] sm:$0x3]
      %v301 = vld [vmem:[%s1] sm:$0xf]
      %vm302 = vcmask 31744
      %v304 = vsel %vm302, %v272, 0
      %v307 = vsel %vm302, %v273, 0
      %v310 = vsel %vm302, %v274, 0
      %v313 = vsel %vm302, %v275, 0
      %v316 = vsel %vm302, %v276, 0
      %v319 = vsel %vm302, %v277, 0
      %v322 = vsel %vm302, %v278, 0
      %v325 = vsel %vm302, %v279, 0
      %v328 = vsel %vm302, %v280, 0
      %v331 = vsel %vm302, %v281, 0
      %v334 = vsel %vm302, %v282, 0
      %v337 = vsel %vm302, %v283, 0
      %v340 = vsel %vm302, %v284, 0
      %v343 = vsel %vm302, %v285, 0
      %v346 = vsel %vm302, %v286, 0
      %v349 = vsel %vm302, %v287, 0
      %v352 = vsel %vm302, %v288, 0
      %v355 = vsel %vm302, %v289, 0
      %v358 = vsel %vm302, %v290, 0
      %v361 = vsel %vm302, %v291, 0
      %v364 = vsel %vm302, %v292, 0
      %v367 = vsel %vm302, %v293, 0
      %v370 = vsel %vm302, %v294, 0
      %v373 = vsel %vm302, %v295, 0
      %v376 = vsel %vm302, %v296, 0
      %v379 = vsel %vm302, %v297, 0
      %v382 = vsel %vm302, %v298, 0
      %v385 = vsel %vm302, %v299, 0
      %v388 = vsel %vm302, %v300, 0
      %vm390 = vcmask 1043456
      %v392 = vsel %vm390, %v301, 0
      %394 = vmatprep.subr.mxu0 0.0
      %395 = vmatpush1.msra.mxu0 %v392
      %396 = vmatprep.subr.mxu0 0.0
      %397 = vmatpush1.msra.mxu0 0.0
      %398 = vmatprep.subr.mxu0 0.0
      %399 = vmatpush1.msra.mxu0 0.0
      %400 = vmatprep.subr.mxu0 0.0
      %401 = vmatpush1.msra.mxu0 0.0
      %402 = vmatprep.subr.mxu0 0.0
      %403 = vmatpush1.msra.mxu0 0.0
      %404 = vmatprep.subr.mxu0 0.0
      %405 = vmatpush1.msra.mxu0 0.0
      %406 = vmatprep.subr.mxu0 0.0
      %407 = vmatpush1.msra.mxu0 0.0
      %408 = vmatprep.subr.mxu0 0.0
      %409 = vmatpush1.msra.mxu0 0.0
      %410 = vmatprep.subr.mxu0 0.0
      %411 = vmatpush1.msra.mxu0 0.0
      %412 = vmatprep.subr.mxu0 0.0
      %413 = vmatpush1.msra.mxu0 0.0
      %414 = vmatprep.subr.mxu0 0.0
      %415 = vmatpush1.msra.mxu0 0.0
      %416 = vmatprep.subr.mxu0 0.0
      %417 = vmatpush1.msra.mxu0 0.0
      %418 = vmatprep.subr.mxu0 0.0
      %419 = vmatpush1.msra.mxu0 0.0
      %420 = vmatprep.subr.mxu0 0.0
      %421 = vmatpush1.msra.mxu0 0.0
      %422 = vmatprep.subr.mxu0 0.0
      %423 = vmatpush1.msra.mxu0 0.0
      %424 = vmatprep.subr.mxu0 0.0
      %425 = vmatpush1.msra.mxu0 0.0
      %426 = vmatprep.subr.mxu0 0.0
      %427 = vmatpush1.msra.mxu0 0.0
      %428 = vmatprep.subr.mxu0 0.0
      %429 = vmatpush1.msra.mxu0 0.0
      %430 = vmatprep.subr.mxu0 0.0
      %431 = vmatpush1.msra.mxu0 0.0
      %432 = vmatprep.subr.mxu0 0.0
      %433 = vmatpush1.msra.mxu0 0.0
      %434 = vmatprep.subr.mxu0 0.0
      %435 = vmatpush1.msra.mxu0 0.0
      %436 = vmatprep.subr.mxu0 0.0
      %437 = vmatpush1.msra.mxu0 0.0
      %438 = vmatprep.subr.mxu0 0.0
      %439 = vmatpush1.msra.mxu0 0.0
      %440 = vmatprep.subr.mxu0 0.0
      %441 = vmatpush1.msra.mxu0 0.0
      %442 = vmatprep.subr.mxu0 0.0
      %443 = vmatpush1.msra.mxu0 0.0
      %444 = vmatprep.subr.mxu0 0.0
      %445 = vmatpush1.msra.mxu0 0.0
      %446 = vmatprep.subr.mxu0 0.0
      %447 = vmatpush1.msra.mxu0 0.0
      %448 = vmatprep.subr.mxu0 0.0
      %449 = vmatpush1.msra.mxu0 0.0
      %450 = vmatprep.subr.mxu0 0.0
      %451 = vmatpush1.msra.mxu0 0.0
      %452 = vmatprep.subr.mxu0 0.0
      %453 = vmatpush1.msra.mxu0 0.0
      %454 = vmatprep.subr.mxu0 0.0
      %455 = vmatpush1.msra.mxu0 0.0
      %456 = vmatprep.subr.mxu0 0.0
      %457 = vmatpush1.msra.mxu0 0.0
      %458 = vmatprep.mubr.f32.mxu0 0.0
      %459 = vmatmul.mubr.f32.gmra.mrb[0].mxu0 %v304
      %v460 = vpop.f32.mrb[0].mxu0
      %v461 = vadd.f32 0.0, %v460
      %v462 = vpop.f32.mrb[0].mxu0
      %463 = vmatprep.mubr.f32.mxu0 0.0
      %464 = vmatmul.mubr.f32.gmra.mrb[0].mxu0 %v307
      %v465 = vpop.f32.mrb[0].mxu0
      %v466 = vadd.f32 0.0, %v465
      %v467 = vpop.f32.mrb[0].mxu0
      %468 = vmatprep.mubr.f32.mxu0 0.0
      %469 = vmatmul.mubr.f32.gmra.mrb[0].mxu0 %v310
      %v470 = vpop.f32.mrb[0].mxu0
      %v471 = vadd.f32 0.0, %v470
      %v472 = vpop.f32.mrb[0].mxu0
      %473 = vmatprep.mubr.f32.mxu0 0.0
      %474 = vmatmul.mubr.f32.gmra.mrb[0].mxu0 %v313
      %v475 = vpop.f32.mrb[0].mxu0
      %v476 = vadd.f32 0.0, %v475
      %v477 = vpop.f32.mrb[0].mxu0
      %478 = vmatprep.mubr.f32.mxu0 0.0
      %479 = vmatmul.mubr.f32.gmra.mrb[0].mxu0 %v316
      %v480 = vpop.f32.mrb[0].mxu0
      %v481 = vadd.f32 0.0, %v480
      %v482 = vpop.f32.mrb[0].mxu0
      %483 = vmatprep.mubr.f32.mxu0 0.0
      %484 = vmatmul.mubr.f32.gmra.mrb[0].mxu0 %v319
      %v485 = vpop.f32.mrb[0].mxu0
      %v486 = vadd.f32 0.0, %v485
      %v487 = vpop.f32.mrb[0].mxu0
      %488 = vmatprep.mubr.f32.mxu0 0.0
      %489 = vmatmul.mubr.f32.gmra.mrb[0].mxu0 %v322
      %v490 = vpop.f32.mrb[0].mxu0
      %v491 = vadd.f32 0.0, %v490
      %v492 = vpop.f32.mrb[0].mxu0
      %493 = vmatprep.mubr.f32.mxu0 0.0
      %494 = vmatmul.mubr.f32.gmra.mrb[0].mxu0 %v325
      %v495 = vpop.f32.mrb[0].mxu0
      %v496 = vadd.f32 0.0, %v495
      %v497 = vpop.f32.mrb[0].mxu0
      %498 = vmatprep.mubr.f32.mxu0 0.0
      %499 = vmatmul.mubr.f32.gmra.mrb[0].mxu0 %v328
      %v500 = vpop.f32.mrb[0].mxu0
      %v501 = vadd.f32 0.0, %v500
      %v502 = vpop.f32.mrb[0].mxu0
      %503 = vmatprep.mubr.f32.mxu0 0.0
      %504 = vmatmul.mubr.f32.gmra.mrb[0].mxu0 %v331
      %v505 = vpop.f32.mrb[0].mxu0
      %v506 = vadd.f32 0.0, %v505
      %v507 = vpop.f32.mrb[0].mxu0
      %508 = vmatprep.mubr.f32.mxu0 0.0
      %509 = vmatmul.mubr.f32.gmra.mrb[0].mxu0 %v334
      %v510 = vpop.f32.mrb[0].mxu0
      %v511 = vadd.f32 0.0, %v510
      %v512 = vpop.f32.mrb[0].mxu0
      %513 = vmatprep.mubr.f32.mxu0 0.0
      %514 = vmatmul.mubr.f32.gmra.mrb[0].mxu0 %v337
      %v515 = vpop.f32.mrb[0].mxu0
      %v516 = vadd.f32 0.0, %v515
      %v517 = vpop.f32.mrb[0].mxu0
      %518 = vmatprep.mubr.f32.mxu0 0.0
      %519 = vmatmul.mubr.f32.gmra.mrb[0].mxu0 %v340
      %v520 = vpop.f32.mrb[0].mxu0
      %v521 = vadd.f32 0.0, %v520
      %v522 = vpop.f32.mrb[0].mxu0
      %523 = vmatprep.mubr.f32.mxu0 0.0
      %524 = vmatmul.mubr.f32.gmra.mrb[0].mxu0 %v343
      %v525 = vpop.f32.mrb[0].mxu0
      %v526 = vadd.f32 0.0, %v525
      %v527 = vpop.f32.mrb[0].mxu0
      %528 = vmatprep.mubr.f32.mxu0 0.0
      %529 = vmatmul.mubr.f32.gmra.mrb[0].mxu0 %v346
      %v530 = vpop.f32.mrb[0].mxu0
      %v531 = vadd.f32 0.0, %v530
      %v532 = vpop.f32.mrb[0].mxu0
      %533 = vmatprep.mubr.f32.mxu0 0.0
      %534 = vmatmul.mubr.f32.gmra.mrb[0].mxu0 %v349
      %v535 = vpop.f32.mrb[0].mxu0
      %v536 = vadd.f32 0.0, %v535
      %v537 = vpop.f32.mrb[0].mxu0
      %538 = vmatprep.mubr.f32.mxu0 0.0
      %539 = vmatmul.mubr.f32.gmra.mrb[0].mxu0 %v352
      %v540 = vpop.f32.mrb[0].mxu0
      %v541 = vadd.f32 0.0, %v540
      %v542 = vpop.f32.mrb[0].mxu0
      %543 = vmatprep.mubr.f32.mxu0 0.0
      %544 = vmatmul.mubr.f32.gmra.mrb[0].mxu0 %v355
      %v545 = vpop.f32.mrb[0].mxu0
      %v546 = vadd.f32 0.0, %v545
      %v547 = vpop.f32.mrb[0].mxu0
      %548 = vmatprep.mubr.f32.mxu0 0.0
      %549 = vmatmul.mubr.f32.gmra.mrb[0].mxu0 %v358
      %v550 = vpop.f32.mrb[0].mxu0
      %v551 = vadd.f32 0.0, %v550
      %v552 = vpop.f32.mrb[0].mxu0
      %553 = vmatprep.mubr.f32.mxu0 0.0
      %554 = vmatmul.mubr.f32.gmra.mrb[0].mxu0 %v361
      %v555 = vpop.f32.mrb[0].mxu0
      %v556 = vadd.f32 0.0, %v555
      %v557 = vpop.f32.mrb[0].mxu0
      %558 = vmatprep.mubr.f32.mxu0 0.0
      %559 = vmatmul.mubr.f32.gmra.mrb[0].mxu0 %v364
      %v560 = vpop.f32.mrb[0].mxu0
      %v561 = vadd.f32 0.0, %v560
      %v562 = vpop.f32.mrb[0].mxu0
      %563 = vmatprep.mubr.f32.mxu0 0.0
      %564 = vmatmul.mubr.f32.gmra.mrb[0].mxu0 %v367
      %v565 = vpop.f32.mrb[0].mxu0
      %v566 = vadd.f32 0.0, %v565
      %v567 = vpop.f32.mrb[0].mxu0
      %568 = vmatprep.mubr.f32.mxu0 0.0
      %569 = vmatmul.mubr.f32.gmra.mrb[0].mxu0 %v370
      %v570 = vpop.f32.mrb[0].mxu0
      %v571 = vadd.f32 0.0, %v570
      %v572 = vpop.f32.mrb[0].mxu0
      %573 = vmatprep.mubr.f32.mxu0 0.0
      %574 = vmatmul.mubr.f32.gmra.mrb[0].mxu0 %v373
      %v575 = vpop.f32.mrb[0].mxu0
      %v576 = vadd.f32 0.0, %v575
      %v577 = vpop.f32.mrb[0].mxu0
      %578 = vmatprep.mubr.f32.mxu0 0.0
      %579 = vmatmul.mubr.f32.gmra.mrb[0].mxu0 %v376
      %v580 = vpop.f32.mrb[0].mxu0
      %v581 = vadd.f32 0.0, %v580
      %v582 = vpop.f32.mrb[0].mxu0
      %583 = vmatprep.mubr.f32.mxu0 0.0
      %584 = vmatmul.mubr.f32.gmra.mrb[0].mxu0 %v379
      %v585 = vpop.f32.mrb[0].mxu0
      %v586 = vadd.f32 0.0, %v585
      %v587 = vpop.f32.mrb[0].mxu0
      %588 = vmatprep.mubr.f32.mxu0 0.0
      %589 = vmatmul.mubr.f32.gmra.mrb[0].mxu0 %v382
      %v590 = vpop.f32.mrb[0].mxu0
      %v591 = vadd.f32 0.0, %v590
      %v592 = vpop.f32.mrb[0].mxu0
      %593 = vmatprep.mubr.f32.mxu0 0.0
      %594 = vmatmul.mubr.f32.gmra.mrb[0].mxu0 %v385
      %v595 = vpop.f32.mrb[0].mxu0
      %v596 = vadd.f32 0.0, %v595
      %v597 = vpop.f32.mrb[0].mxu0
      %598 = vmatprep.mubr.f32.mxu0 0.0
      %599 = vmatmul.mubr.f32.gmra.mrb[0].mxu0 %v388
      %v600 = vpop.f32.mrb[0].mxu0
      %v601 = vadd.f32 0.0, %v600
      %v602 = vpop.f32.mrb[0].mxu0
      %603 = vdwg.mxu0
      %v604 = vadd.f32 %v270, %v461
      %v605 = vadd.f32 %v270, %v466
      %v606 = vadd.f32 %v270, %v471
      %v607 = vadd.f32 %v270, %v476
      %v608 = vadd.f32 %v270, %v481
      %v609 = vadd.f32 %v270, %v486
      %v610 = vadd.f32 %v270, %v491
      %v611 = vadd.f32 %v270, %v496
      %v612 = vadd.f32 %v270, %v501
      %v613 = vadd.f32 %v270, %v506
      %v614 = vadd.f32 %v270, %v511
      %v615 = vadd.f32 %v270, %v516
      %v616 = vadd.f32 %v270, %v521
      %v617 = vadd.f32 %v270, %v526
      %v618 = vadd.f32 %v270, %v531
      %v619 = vadd.f32 %v270, %v536
      %v620 = vadd.f32 %v270, %v541
      %v621 = vadd.f32 %v270, %v546
      %v622 = vadd.f32 %v270, %v551
      %v623 = vadd.f32 %v270, %v556
      %v624 = vadd.f32 %v270, %v561
      %v625 = vadd.f32 %v270, %v566
      %v626 = vadd.f32 %v270, %v571
      %v627 = vadd.f32 %v270, %v576
      %v628 = vadd.f32 %v270, %v581
      %v629 = vadd.f32 %v270, %v586
      %v630 = vadd.f32 %v270, %v591
      %v631 = vadd.f32 %v270, %v596
      %v632 = vadd.f32 %v270, %v601
      %v633 = vld [vmem:[%s254 + $0x1] sm:$0xff]
      %v634 = vld [vmem:[%s254 + $0x9] sm:$0xff]
      %v635 = vld [vmem:[%s254 + $0x11] sm:$0xff]
      %v636 = vld [vmem:[%s254 + $0x19] sm:$0xff]
      %v637 = vld [vmem:[%s254 + $0x21] sm:$0xff]
      %v638 = vld [vmem:[%s254 + $0x29] sm:$0xff]
      %v639 = vld [vmem:[%s254 + $0x31] sm:$0xff]
      %v640 = vld [vmem:[%s254 + $0x39] sm:$0xff]
      %v641 = vld [vmem:[%s254 + $0x41] sm:$0xff]
      %v642 = vld [vmem:[%s254 + $0x49] sm:$0xff]
      %v643 = vld [vmem:[%s254 + $0x51] sm:$0xff]
      %v644 = vld [vmem:[%s254 + $0x59] sm:$0xff]
      %v645 = vld [vmem:[%s254 + $0x61] sm:$0xff]
      %v646 = vld [vmem:[%s254 + $0x69] sm:$0xff]
      %v647 = vld [vmem:[%s254 + $0x71] sm:$0xff]
      %v648 = vld [vmem:[%s254 + $0x79] sm:$0xff]
      %v649 = vld [vmem:[%s254 + $0x81] sm:$0xff]
      %v650 = vld [vmem:[%s254 + $0x89] sm:$0xff]
      %v651 = vld [vmem:[%s254 + $0x91] sm:$0xff]
      %v652 = vld [vmem:[%s254 + $0x99] sm:$0xff]
      %v653 = vld [vmem:[%s254 + $0xa1] sm:$0xff]
      %v654 = vld [vmem:[%s254 + $0xa9] sm:$0xff]
      %v655 = vld [vmem:[%s254 + $0xb1] sm:$0xff]
      %v656 = vld [vmem:[%s254 + $0xb9] sm:$0xff]
      %v657 = vld [vmem:[%s254 + $0xc1] sm:$0xff]
      %v658 = vld [vmem:[%s254 + $0xc9] sm:$0xff]
      %v659 = vld [vmem:[%s254 + $0xd1] sm:$0xff]
      %v660 = vld [vmem:[%s254 + $0xd9] sm:$0xff]
      %v661 = vld [vmem:[%s254 + $0xe1] sm:$0x3]
      %s662 = scalar_lea.vmem %s1, 4
      %v663 = vld [vmem:[%s662] sm:$0xf]
      %v665 = vsel %vm302, %v633, 0
      %v668 = vsel %vm302, %v634, 0
      %v671 = vsel %vm302, %v635, 0
      %v674 = vsel %vm302, %v636, 0
      %v677 = vsel %vm302, %v637, 0
      %v680 = vsel %vm302, %v638, 0
      %v683 = vsel %vm302, %v639, 0
      %v686 = vsel %vm302, %v640, 0
      %v689 = vsel %vm302, %v641, 0
      %v692 = vsel %vm302, %v642, 0
      %v695 = vsel %vm302, %v643, 0
      %v698 = vsel %vm302, %v644, 0
      %v701 = vsel %vm302, %v645, 0
      %v704 = vsel %vm302, %v646, 0
      %v707 = vsel %vm302, %v647, 0
      %v710 = vsel %vm302, %v648, 0
      %v713 = vsel %vm302, %v649, 0
      %v716 = vsel %vm302, %v650, 0
      %v719 = vsel %vm302, %v651, 0
      %v722 = vsel %vm302, %v652, 0
      %v725 = vsel %vm302, %v653, 0
      %v728 = vsel %vm302, %v654, 0
      %v731 = vsel %vm302, %v655, 0
      %v734 = vsel %vm302, %v656, 0
      %v737 = vsel %vm302, %v657, 0
      %v740 = vsel %vm302, %v658, 0
      %v743 = vsel %vm302, %v659, 0
      %v746 = vsel %vm302, %v660, 0
      %v749 = vsel %vm302, %v661, 0
      %v752 = vsel %vm390, %v663, 0
      %754 = vmatprep.subr.mxu0 0.0
      %755 = vmatpush1.msra.mxu0 %v752
      %756 = vmatprep.subr.mxu0 0.0
      %757 = vmatpush1.msra.mxu0 0.0
      %758 = vmatprep.subr.mxu0 0.0
      %759 = vmatpush1.msra.mxu0 0.0
      %760 = vmatprep.subr.mxu0 0.0
      %761 = vmatpush1.msra.mxu0 0.0
      %762 = vmatprep.subr.mxu0 0.0
      %763 = vmatpush1.msra.mxu0 0.0
      %764 = vmatprep.subr.mxu0 0.0
      %765 = vmatpush1.msra.mxu0 0.0
      %766 = vmatprep.subr.mxu0 0.0
      %767 = vmatpush1.msra.mxu0 0.0
      %768 = vmatprep.subr.mxu0 0.0
      %769 = vmatpush1.msra.mxu0 0.0
      %770 = vmatprep.subr.mxu0 0.0
      %771 = vmatpush1.msra.mxu0 0.0
      %772 = vmatprep.subr.mxu0 0.0
      %773 = vmatpush1.msra.mxu0 0.0
      %774 = vmatprep.subr.mxu0 0.0
      %775 = vmatpush1.msra.mxu0 0.0
      %776 = vmatprep.subr.mxu0 0.0
      %777 = vmatpush1.msra.mxu0 0.0
      %778 = vmatprep.subr.mxu0 0.0
      %779 = vmatpush1.msra.mxu0 0.0
      %780 = vmatprep.subr.mxu0 0.0
      %781 = vmatpush1.msra.mxu0 0.0
      %782 = vmatprep.subr.mxu0 0.0
      %783 = vmatpush1.msra.mxu0 0.0
      %784 = vmatprep.subr.mxu0 0.0
      %785 = vmatpush1.msra.mxu0 0.0
      %786 = vmatprep.subr.mxu0 0.0
      %787 = vmatpush1.msra.mxu0 0.0
      %788 = vmatprep.subr.mxu0 0.0
      %789 = vmatpush1.msra.mxu0 0.0
      %790 = vmatprep.subr.mxu0 0.0
      %791 = vmatpush1.msra.mxu0 0.0
      %792 = vmatprep.subr.mxu0 0.0
      %793 = vmatpush1.msra.mxu0 0.0
      %794 = vmatprep.subr.mxu0 0.0
      %795 = vmatpush1.msra.mxu0 0.0
      %796 = vmatprep.subr.mxu0 0.0
      %797 = vmatpush1.msra.mxu0 0.0
      %798 = vmatprep.subr.mxu0 0.0
      %799 = vmatpush1.msra.mxu0 0.0
      %800 = vmatprep.subr.mxu0 0.0
      %801 = vmatpush1.msra.mxu0 0.0
      %802 = vmatprep.subr.mxu0 0.0
      %803 = vmatpush1.msra.mxu0 0.0
      %804 = vmatprep.subr.mxu0 0.0
      %805 = vmatpush1.msra.mxu0 0.0
      %806 = vmatprep.subr.mxu0 0.0
      %807 = vmatpush1.msra.mxu0 0.0
      %808 = vmatprep.subr.mxu0 0.0
      %809 = vmatpush1.msra.mxu0 0.0
      %810 = vmatprep.subr.mxu0 0.0
      %811 = vmatpush1.msra.mxu0 0.0
      %812 = vmatprep.subr.mxu0 0.0
      %813 = vmatpush1.msra.mxu0 0.0
      %814 = vmatprep.subr.mxu0 0.0
      %815 = vmatpush1.msra.mxu0 0.0
      %816 = vmatprep.subr.mxu0 0.0
      %817 = vmatpush1.msra.mxu0 0.0
      %818 = vmatprep.mubr.f32.mxu0 0.0
      %819 = vmatmul.mubr.f32.gmra.mrb[0].mxu0 %v665
      %v820 = vpop.f32.mrb[0].mxu0
      %v821 = vadd.f32 0.0, %v820
      %v822 = vpop.f32.mrb[0].mxu0
      %823 = vmatprep.mubr.f32.mxu0 0.0
      %824 = vmatmul.mubr.f32.gmra.mrb[0].mxu0 %v668
      %v825 = vpop.f32.mrb[0].mxu0
      %v826 = vadd.f32 0.0, %v825
      %v827 = vpop.f32.mrb[0].mxu0
      %828 = vmatprep.mubr.f32.mxu0 0.0
      %829 = vmatmul.mubr.f32.gmra.mrb[0].mxu0 %v671
      %v830 = vpop.f32.mrb[0].mxu0
      %v831 = vadd.f32 0.0, %v830
      %v832 = vpop.f32.mrb[0].mxu0
      %833 = vmatprep.mubr.f32.mxu0 0.0
      %834 = vmatmul.mubr.f32.gmra.mrb[0].mxu0 %v674
      %v835 = vpop.f32.mrb[0].mxu0
      %v836 = vadd.f32 0.0, %v835
      %v837 = vpop.f32.mrb[0].mxu0
      %838 = vmatprep.mubr.f32.mxu0 0.0
      %839 = vmatmul.mubr.f32.gmra.mrb[0].mxu0 %v677
      %v840 = vpop.f32.mrb[0].mxu0
      %v841 = vadd.f32 0.0, %v840
      %v842 = vpop.f32.mrb[0].mxu0
      %843 = vmatprep.mubr.f32.mxu0 0.0
      %844 = vmatmul.mubr.f32.gmra.mrb[0].mxu0 %v680
      %v845 = vpop.f32.mrb[0].mxu0
      %v846 = vadd.f32 0.0, %v845
      %v847 = vpop.f32.mrb[0].mxu0
      %848 = vmatprep.mubr.f32.mxu0 0.0
      %849 = vmatmul.mubr.f32.gmra.mrb[0].mxu0 %v683
      %v850 = vpop.f32.mrb[0].mxu0
      %v851 = vadd.f32 0.0, %v850
      %v852 = vpop.f32.mrb[0].mxu0
      %853 = vmatprep.mubr.f32.mxu0 0.0
      %854 = vmatmul.mubr.f32.gmra.mrb[0].mxu0 %v686
      %v855 = vpop.f32.mrb[0].mxu0
      %v856 = vadd.f32 0.0, %v855
      %v857 = vpop.f32.mrb[0].mxu0
      %858 = vmatprep.mubr.f32.mxu0 0.0
      %859 = vmatmul.mubr.f32.gmra.mrb[0].mxu0 %v689
      %v860 = vpop.f32.mrb[0].mxu0
      %v861 = vadd.f32 0.0, %v860
      %v862 = vpop.f32.mrb[0].mxu0
      %863 = vmatprep.mubr.f32.mxu0 0.0
      %864 = vmatmul.mubr.f32.gmra.mrb[0].mxu0 %v692
      %v865 = vpop.f32.mrb[0].mxu0
      %v866 = vadd.f32 0.0, %v865
      %v867 = vpop.f32.mrb[0].mxu0
      %868 = vmatprep.mubr.f32.mxu0 0.0
      %869 = vmatmul.mubr.f32.gmra.mrb[0].mxu0 %v695
      %v870 = vpop.f32.mrb[0].mxu0
      %v871 = vadd.f32 0.0, %v870
      %v872 = vpop.f32.mrb[0].mxu0
      %873 = vmatprep.mubr.f32.mxu0 0.0
      %874 = vmatmul.mubr.f32.gmra.mrb[0].mxu0 %v698
      %v875 = vpop.f32.mrb[0].mxu0
      %v876 = vadd.f32 0.0, %v875
      %v877 = vpop.f32.mrb[0].mxu0
      %878 = vmatprep.mubr.f32.mxu0 0.0
      %879 = vmatmul.mubr.f32.gmra.mrb[0].mxu0 %v701
      %v880 = vpop.f32.mrb[0].mxu0
      %v881 = vadd.f32 0.0, %v880
      %v882 = vpop.f32.mrb[0].mxu0
      %883 = vmatprep.mubr.f32.mxu0 0.0
      %884 = vmatmul.mubr.f32.gmra.mrb[0].mxu0 %v704
      %v885 = vpop.f32.mrb[0].mxu0
      %v886 = vadd.f32 0.0, %v885
      %v887 = vpop.f32.mrb[0].mxu0
      %888 = vmatprep.mubr.f32.mxu0 0.0
      %889 = vmatmul.mubr.f32.gmra.mrb[0].mxu0 %v707
      %v890 = vpop.f32.mrb[0].mxu0
      %v891 = vadd.f32 0.0, %v890
      %v892 = vpop.f32.mrb[0].mxu0
      %893 = vmatprep.mubr.f32.mxu0 0.0
      %894 = vmatmul.mubr.f32.gmra.mrb[0].mxu0 %v710
      %v895 = vpop.f32.mrb[0].mxu0
      %v896 = vadd.f32 0.0, %v895
      %v897 = vpop.f32.mrb[0].mxu0
      %898 = vmatprep.mubr.f32.mxu0 0.0
      %899 = vmatmul.mubr.f32.gmra.mrb[0].mxu0 %v713
      %v900 = vpop.f32.mrb[0].mxu0
      %v901 = vadd.f32 0.0, %v900
      %v902 = vpop.f32.mrb[0].mxu0
      %903 = vmatprep.mubr.f32.mxu0 0.0
      %904 = vmatmul.mubr.f32.gmra.mrb[0].mxu0 %v716
      %v905 = vpop.f32.mrb[0].mxu0
      %v906 = vadd.f32 0.0, %v905
      %v907 = vpop.f32.mrb[0].mxu0
      %908 = vmatprep.mubr.f32.mxu0 0.0
      %909 = vmatmul.mubr.f32.gmra.mrb[0].mxu0 %v719
      %v910 = vpop.f32.mrb[0].mxu0
      %v911 = vadd.f32 0.0, %v910
      %v912 = vpop.f32.mrb[0].mxu0
      %913 = vmatprep.mubr.f32.mxu0 0.0
      %914 = vmatmul.mubr.f32.gmra.mrb[0].mxu0 %v722
      %v915 = vpop.f32.mrb[0].mxu0
      %v916 = vadd.f32 0.0, %v915
      %v917 = vpop.f32.mrb[0].mxu0
      %918 = vmatprep.mubr.f32.mxu0 0.0
      %919 = vmatmul.mubr.f32.gmra.mrb[0].mxu0 %v725
      %v920 = vpop.f32.mrb[0].mxu0
      %v921 = vadd.f32 0.0, %v920
      %v922 = vpop.f32.mrb[0].mxu0
      %923 = vmatprep.mubr.f32.mxu0 0.0
      %924 = vmatmul.mubr.f32.gmra.mrb[0].mxu0 %v728
      %v925 = vpop.f32.mrb[0].mxu0
      %v926 = vadd.f32 0.0, %v925
      %v927 = vpop.f32.mrb[0].mxu0
      %928 = vmatprep.mubr.f32.mxu0 0.0
      %929 = vmatmul.mubr.f32.gmra.mrb[0].mxu0 %v731
      %v930 = vpop.f32.mrb[0].mxu0
      %v931 = vadd.f32 0.0, %v930
      %v932 = vpop.f32.mrb[0].mxu0
      %933 = vmatprep.mubr.f32.mxu0 0.0
      %934 = vmatmul.mubr.f32.gmra.mrb[0].mxu0 %v734
      %v935 = vpop.f32.mrb[0].mxu0
      %v936 = vadd.f32 0.0, %v935
      %v937 = vpop.f32.mrb[0].mxu0
      %938 = vmatprep.mubr.f32.mxu0 0.0
      %939 = vmatmul.mubr.f32.gmra.mrb[0].mxu0 %v737
      %v940 = vpop.f32.mrb[0].mxu0
      %v941 = vadd.f32 0.0, %v940
      %v942 = vpop.f32.mrb[0].mxu0
      %943 = vmatprep.mubr.f32.mxu0 0.0
      %944 = vmatmul.mubr.f32.gmra.mrb[0].mxu0 %v740
      %v945 = vpop.f32.mrb[0].mxu0
      %v946 = vadd.f32 0.0, %v945
      %v947 = vpop.f32.mrb[0].mxu0
      %948 = vmatprep.mubr.f32.mxu0 0.0
      %949 = vmatmul.mubr.f32.gmra.mrb[0].mxu0 %v743
      %v950 = vpop.f32.mrb[0].mxu0
      %v951 = vadd.f32 0.0, %v950
      %v952 = vpop.f32.mrb[0].mxu0
      %953 = vmatprep.mubr.f32.mxu0 0.0
      %954 = vmatmul.mubr.f32.gmra.mrb[0].mxu0 %v746
      %v955 = vpop.f32.mrb[0].mxu0
      %v956 = vadd.f32 0.0, %v955
      %v957 = vpop.f32.mrb[0].mxu0
      %958 = vmatprep.mubr.f32.mxu0 0.0
      %959 = vmatmul.mubr.f32.gmra.mrb[0].mxu0 %v749
      %v960 = vpop.f32.mrb[0].mxu0
      %v961 = vadd.f32 0.0, %v960
      %v962 = vpop.f32.mrb[0].mxu0
      %963 = vdwg.mxu0
      %v964 = vadd.f32 %v604, %v821
      %v965 = vadd.f32 %v605, %v826
      %v966 = vadd.f32 %v606, %v831
      %v967 = vadd.f32 %v607, %v836
      %v968 = vadd.f32 %v608, %v841
      %v969 = vadd.f32 %v609, %v846
      %v970 = vadd.f32 %v610, %v851
      %v971 = vadd.f32 %v611, %v856
      %v972 = vadd.f32 %v612, %v861
      %v973 = vadd.f32 %v613, %v866
      %v974 = vadd.f32 %v614, %v871
      %v975 = vadd.f32 %v615, %v876
      %v976 = vadd.f32 %v616, %v881
      %v977 = vadd.f32 %v617, %v886
      %v978 = vadd.f32 %v618, %v891
      %v979 = vadd.f32 %v619, %v896
      %v980 = vadd.f32 %v620, %v901
      %v981 = vadd.f32 %v621, %v906
      %v982 = vadd.f32 %v622, %v911
      %v983 = vadd.f32 %v623, %v916
      %v984 = vadd.f32 %v624, %v921
      %v985 = vadd.f32 %v625, %v926
      %v986 = vadd.f32 %v626, %v931
      %v987 = vadd.f32 %v627, %v936
      %v988 = vadd.f32 %v628, %v941
      %v989 = vadd.f32 %v629, %v946
      %v990 = vadd.f32 %v630, %v951
      %v991 = vadd.f32 %v631, %v956
      %v992 = vadd.f32 %v632, %v961
      %v993 = vld [vmem:[%s254 + $0x2] sm:$0xff]
      %v994 = vld [vmem:[%s254 + $0xa] sm:$0xff]
      %v995 = vld [vmem:[%s254 + $0x12] sm:$0xff]
      %v996 = vld [vmem:[%s254 + $0x1a] sm:$0xff]
      %v997 = vld [vmem:[%s254 + $0x22] sm:$0xff]
      %v998 = vld [vmem:[%s254 + $0x2a] sm:$0xff]
      %v999 = vld [vmem:[%s254 + $0x32] sm:$0xff]
      %v1000 = vld [vmem:[%s254 + $0x3a] sm:$0xff]
      %v1001 = vld [vmem:[%s254 + $0x42] sm:$0xff]
      %v1002 = vld [vmem:[%s254 + $0x4a] sm:$0xff]
      %v1003 = vld [vmem:[%s254 + $0x52] sm:$0xff]
      %v1004 = vld [vmem:[%s254 + $0x5a] sm:$0xff]
      %v1005 = vld [vmem:[%s254 + $0x62] sm:$0xff]
      %v1006 = vld [vmem:[%s254 + $0x6a] sm:$0xff]
      %v1007 = vld [vmem:[%s254 + $0x72] sm:$0xff]
      %v1008 = vld [vmem:[%s254 + $0x7a] sm:$0xff]
      %v1009 = vld [vmem:[%s254 + $0x82] sm:$0xff]
      %v1010 = vld [vmem:[%s254 + $0x8a] sm:$0xff]
      %v1011 = vld [vmem:[%s254 + $0x92] sm:$0xff]
      %v1012 = vld [vmem:[%s254 + $0x9a] sm:$0xff]
      %v1013 = vld [vmem:[%s254 + $0xa2] sm:$0xff]
      %v1014 = vld [vmem:[%s254 + $0xaa] sm:$0xff]
      %v1015 = vld [vmem:[%s254 + $0xb2] sm:$0xff]
      %v1016 = vld [vmem:[%s254 + $0xba] sm:$0xff]
      %v1017 = vld [vmem:[%s254 + $0xc2] sm:$0xff]
      %v1018 = vld [vmem:[%s254 + $0xca] sm:$0xff]
      %v1019 = vld [vmem:[%s254 + $0xd2] sm:$0xff]
      %v1020 = vld [vmem:[%s254 + $0xda] sm:$0xff]
      %v1021 = vld [vmem:[%s254 + $0xe2] sm:$0x3]
      %s1022 = scalar_lea.vmem %s1, 8
      %v1023 = vld [vmem:[%s1022] sm:$0xf]
      %v1025 = vsel %vm302, %v993, 0
      %v1028 = vsel %vm302, %v994, 0
      %v1031 = vsel %vm302, %v995, 0
      %v1034 = vsel %vm302, %v996, 0
      %v1037 = vsel %vm302, %v997, 0
      %v1040 = vsel %vm302, %v998, 0
      %v1043 = vsel %vm302, %v999, 0
      %v1046 = vsel %vm302, %v1000, 0
      %v1049 = vsel %vm302, %v1001, 0
      %v1052 = vsel %vm302, %v1002, 0
      %v1055 = vsel %vm302, %v1003, 0
      %v1058 = vsel %vm302, %v1004, 0
      %v1061 = vsel %vm302, %v1005, 0
      %v1064 = vsel %vm302, %v1006, 0
      %v1067 = vsel %vm302, %v1007, 0
      %v1070 = vsel %vm302, %v1008, 0
      %v1073 = vsel %vm302, %v1009, 0
      %v1076 = vsel %vm302, %v1010, 0
      %v1079 = vsel %vm302, %v1011, 0
      %v1082 = vsel %vm302, %v1012, 0
      %v1085 = vsel %vm302, %v1013, 0
      %v1088 = vsel %vm302, %v1014, 0
      %v1091 = vsel %vm302, %v1015, 0
      %v1094 = vsel %vm302, %v1016, 0
      %v1097 = vsel %vm302, %v1017, 0
      %v1100 = vsel %vm302, %v1018, 0
      %v1103 = vsel %vm302, %v1019, 0
      %v1106 = vsel %vm302, %v1020, 0
      %v1109 = vsel %vm302, %v1021, 0
      %v1112 = vsel %vm390, %v1023, 0
      %1114 = vmatprep.subr.mxu0 0.0
      %1115 = vmatpush1.msra.mxu0 %v1112
      %1116 = vmatprep.subr.mxu0 0.0
      %1117 = vmatpush1.msra.mxu0 0.0
      %1118 = vmatprep.subr.mxu0 0.0
      %1119 = vmatpush1.msra.mxu0 0.0
      %1120 = vmatprep.subr.mxu0 0.0
      %1121 = vmatpush1.msra.mxu0 0.0
      %1122 = vmatprep.subr.mxu0 0.0
      %1123 = vmatpush1.msra.mxu0 0.0
      %1124 = vmatprep.subr.mxu0 0.0
      %1125 = vmatpush1.msra.mxu0 0.0
      %1126 = vmatprep.subr.mxu0 0.0
      %1127 = vmatpush1.msra.mxu0 0.0
      %1128 = vmatprep.subr.mxu0 0.0
      %1129 = vmatpush1.msra.mxu0 0.0
      %1130 = vmatprep.subr.mxu0 0.0
      %1131 = vmatpush1.msra.mxu0 0.0
      %1132 = vmatprep.subr.mxu0 0.0
      %1133 = vmatpush1.msra.mxu0 0.0
      %1134 = vmatprep.subr.mxu0 0.0
      %1135 = vmatpush1.msra.mxu0 0.0
      %1136 = vmatprep.subr.mxu0 0.0
      %1137 = vmatpush1.msra.mxu0 0.0
      %1138 = vmatprep.subr.mxu0 0.0
      %1139 = vmatpush1.msra.mxu0 0.0
      %1140 = vmatprep.subr.mxu0 0.0
      %1141 = vmatpush1.msra.mxu0 0.0
      %1142 = vmatprep.subr.mxu0 0.0
      %1143 = vmatpush1.msra.mxu0 0.0
      %1144 = vmatprep.subr.mxu0 0.0
      %1145 = vmatpush1.msra.mxu0 0.0
      %1146 = vmatprep.subr.mxu0 0.0
      %1147 = vmatpush1.msra.mxu0 0.0
      %1148 = vmatprep.subr.mxu0 0.0
      %1149 = vmatpush1.msra.mxu0 0.0
      %1150 = vmatprep.subr.mxu0 0.0
      %1151 = vmatpush1.msra.mxu0 0.0
      %1152 = vmatprep.subr.mxu0 0.0
      %1153 = vmatpush1.msra.mxu0 0.0
      %1154 = vmatprep.subr.mxu0 0.0
      %1155 = vmatpush1.msra.mxu0 0.0
      %1156 = vmatprep.subr.mxu0 0.0
      %1157 = vmatpush1.msra.mxu0 0.0
      %1158 = vmatprep.subr.mxu0 0.0
      %1159 = vmatpush1.msra.mxu0 0.0
      %1160 = vmatprep.subr.mxu0 0.0
      %1161 = vmatpush1.msra.mxu0 0.0
      %1162 = vmatprep.subr.mxu0 0.0
      %1163 = vmatpush1.msra.mxu0 0.0
      %1164 = vmatprep.subr.mxu0 0.0
      %1165 = vmatpush1.msra.mxu0 0.0
      %1166 = vmatprep.subr.mxu0 0.0
      %1167 = vmatpush1.msra.mxu0 0.0
      %1168 = vmatprep.subr.mxu0 0.0
      %1169 = vmatpush1.msra.mxu0 0.0
      %1170 = vmatprep.subr.mxu0 0.0
      %1171 = vmatpush1.msra.mxu0 0.0
      %1172 = vmatprep.subr.mxu0 0.0
      %1173 = vmatpush1.msra.mxu0 0.0
      %1174 = vmatprep.subr.mxu0 0.0
      %1175 = vmatpush1.msra.mxu0 0.0
      %1176 = vmatprep.subr.mxu0 0.0
      %1177 = vmatpush1.msra.mxu0 0.0
      %1178 = vmatprep.mubr.f32.mxu0 0.0
      %1179 = vmatmul.mubr.f32.gmra.mrb[0].mxu0 %v1025
      %v1180 = vpop.f32.mrb[0].mxu0
      %v1181 = vadd.f32 0.0, %v1180
      %v1182 = vpop.f32.mrb[0].mxu0
      %1183 = vmatprep.mubr.f32.mxu0 0.0
      %1184 = vmatmul.mubr.f32.gmra.mrb[0].mxu0 %v1028
      %v1185 = vpop.f32.mrb[0].mxu0
      %v1186 = vadd.f32 0.0, %v1185
      %v1187 = vpop.f32.mrb[0].mxu0
      %1188 = vmatprep.mubr.f32.mxu0 0.0
      %1189 = vmatmul.mubr.f32.gmra.mrb[0].mxu0 %v1031
      %v1190 = vpop.f32.mrb[0].mxu0
      %v1191 = vadd.f32 0.0, %v1190
      %v1192 = vpop.f32.mrb[0].mxu0
      %1193 = vmatprep.mubr.f32.mxu0 0.0
      %1194 = vmatmul.mubr.f32.gmra.mrb[0].mxu0 %v1034
      %v1195 = vpop.f32.mrb[0].mxu0
      %v1196 = vadd.f32 0.0, %v1195
      %v1197 = vpop.f32.mrb[0].mxu0
      %1198 = vmatprep.mubr.f32.mxu0 0.0
      %1199 = vmatmul.mubr.f32.gmra.mrb[0].mxu0 %v1037
      %v1200 = vpop.f32.mrb[0].mxu0
      %v1201 = vadd.f32 0.0, %v1200
      %v1202 = vpop.f32.mrb[0].mxu0
      %1203 = vmatprep.mubr.f32.mxu0 0.0
      %1204 = vmatmul.mubr.f32.gmra.mrb[0].mxu0 %v1040
      %v1205 = vpop.f32.mrb[0].mxu0
      %v1206 = vadd.f32 0.0, %v1205
      %v1207 = vpop.f32.mrb[0].mxu0
      %1208 = vmatprep.mubr.f32.mxu0 0.0
      %1209 = vmatmul.mubr.f32.gmra.mrb[0].mxu0 %v1043
      %v1210 = vpop.f32.mrb[0].mxu0
      %v1211 = vadd.f32 0.0, %v1210
      %v1212 = vpop.f32.mrb[0].mxu0
      %1213 = vmatprep.mubr.f32.mxu0 0.0
      %1214 = vmatmul.mubr.f32.gmra.mrb[0].mxu0 %v1046
      %v1215 = vpop.f32.mrb[0].mxu0
      %v1216 = vadd.f32 0.0, %v1215
      %v1217 = vpop.f32.mrb[0].mxu0
      %1218 = vmatprep.mubr.f32.mxu0 0.0
      %1219 = vmatmul.mubr.f32.gmra.mrb[0].mxu0 %v1049
      %v1220 = vpop.f32.mrb[0].mxu0
      %v1221 = vadd.f32 0.0, %v1220
      %v1222 = vpop.f32.mrb[0].mxu0
      %1223 = vmatprep.mubr.f32.mxu0 0.0
      %1224 = vmatmul.mubr.f32.gmra.mrb[0].mxu0 %v1052
      %v1225 = vpop.f32.mrb[0].mxu0
      %v1226 = vadd.f32 0.0, %v1225
      %v1227 = vpop.f32.mrb[0].mxu0
      %1228 = vmatprep.mubr.f32.mxu0 0.0
      %1229 = vmatmul.mubr.f32.gmra.mrb[0].mxu0 %v1055
      %v1230 = vpop.f32.mrb[0].mxu0
      %v1231 = vadd.f32 0.0, %v1230
      %v1232 = vpop.f32.mrb[0].mxu0
      %1233 = vmatprep.mubr.f32.mxu0 0.0
      %1234 = vmatmul.mubr.f32.gmra.mrb[0].mxu0 %v1058
      %v1235 = vpop.f32.mrb[0].mxu0
      %v1236 = vadd.f32 0.0, %v1235
      %v1237 = vpop.f32.mrb[0].mxu0
      %1238 = vmatprep.mubr.f32.mxu0 0.0
      %1239 = vmatmul.mubr.f32.gmra.mrb[0].mxu0 %v1061
      %v1240 = vpop.f32.mrb[0].mxu0
      %v1241 = vadd.f32 0.0, %v1240
      %v1242 = vpop.f32.mrb[0].mxu0
      %1243 = vmatprep.mubr.f32.mxu0 0.0
      %1244 = vmatmul.mubr.f32.gmra.mrb[0].mxu0 %v1064
      %v1245 = vpop.f32.mrb[0].mxu0
      %v1246 = vadd.f32 0.0, %v1245
      %v1247 = vpop.f32.mrb[0].mxu0
      %1248 = vmatprep.mubr.f32.mxu0 0.0
      %1249 = vmatmul.mubr.f32.gmra.mrb[0].mxu0 %v1067
      %v1250 = vpop.f32.mrb[0].mxu0
      %v1251 = vadd.f32 0.0, %v1250
      %v1252 = vpop.f32.mrb[0].mxu0
      %1253 = vmatprep.mubr.f32.mxu0 0.0
      %1254 = vmatmul.mubr.f32.gmra.mrb[0].mxu0 %v1070
      %v1255 = vpop.f32.mrb[0].mxu0
      %v1256 = vadd.f32 0.0, %v1255
      %v1257 = vpop.f32.mrb[0].mxu0
      %1258 = vmatprep.mubr.f32.mxu0 0.0
      %1259 = vmatmul.mubr.f32.gmra.mrb[0].mxu0 %v1073
      %v1260 = vpop.f32.mrb[0].mxu0
      %v1261 = vadd.f32 0.0, %v1260
      %v1262 = vpop.f32.mrb[0].mxu0
      %1263 = vmatprep.mubr.f32.mxu0 0.0
      %1264 = vmatmul.mubr.f32.gmra.mrb[0].mxu0 %v1076
      %v1265 = vpop.f32.mrb[0].mxu0
      %v1266 = vadd.f32 0.0, %v1265
      %v1267 = vpop.f32.mrb[0].mxu0
      %1268 = vmatprep.mubr.f32.mxu0 0.0
      %1269 = vmatmul.mubr.f32.gmra.mrb[0].mxu0 %v1079
      %v1270 = vpop.f32.mrb[0].mxu0
      %v1271 = vadd.f32 0.0, %v1270
      %v1272 = vpop.f32.mrb[0].mxu0
      %1273 = vmatprep.mubr.f32.mxu0 0.0
      %1274 = vmatmul.mubr.f32.gmra.mrb[0].mxu0 %v1082
      %v1275 = vpop.f32.mrb[0].mxu0
      %v1276 = vadd.f32 0.0, %v1275
      %v1277 = vpop.f32.mrb[0].mxu0
      %1278 = vmatprep.mubr.f32.mxu0 0.0
      %1279 = vmatmul.mubr.f32.gmra.mrb[0].mxu0 %v1085
      %v1280 = vpop.f32.mrb[0].mxu0
      %v1281 = vadd.f32 0.0, %v1280
      %v1282 = vpop.f32.mrb[0].mxu0
      %1283 = vmatprep.mubr.f32.mxu0 0.0
      %1284 = vmatmul.mubr.f32.gmra.mrb[0].mxu0 %v1088
      %v1285 = vpop.f32.mrb[0].mxu0
      %v1286 = vadd.f32 0.0, %v1285
      %v1287 = vpop.f32.mrb[0].mxu0
      %1288 = vmatprep.mubr.f32.mxu0 0.0
      %1289 = vmatmul.mubr.f32.gmra.mrb[0].mxu0 %v1091
      %v1290 = vpop.f32.mrb[0].mxu0
      %v1291 = vadd.f32 0.0, %v1290
      %v1292 = vpop.f32.mrb[0].mxu0
      %1293 = vmatprep.mubr.f32.mxu0 0.0
      %1294 = vmatmul.mubr.f32.gmra.mrb[0].mxu0 %v1094
      %v1295 = vpop.f32.mrb[0].mxu0
      %v1296 = vadd.f32 0.0, %v1295
      %v1297 = vpop.f32.mrb[0].mxu0
      %1298 = vmatprep.mubr.f32.mxu0 0.0
      %1299 = vmatmul.mubr.f32.gmra.mrb[0].mxu0 %v1097
      %v1300 = vpop.f32.mrb[0].mxu0
      %v1301 = vadd.f32 0.0, %v1300
      %v1302 = vpop.f32.mrb[0].mxu0
      %1303 = vmatprep.mubr.f32.mxu0 0.0
      %1304 = vmatmul.mubr.f32.gmra.mrb[0].mxu0 %v1100
      %v1305 = vpop.f32.mrb[0].mxu0
      %v1306 = vadd.f32 0.0, %v1305
      %v1307 = vpop.f32.mrb[0].mxu0
      %1308 = vmatprep.mubr.f32.mxu0 0.0
      %1309 = vmatmul.mubr.f32.gmra.mrb[0].mxu0 %v1103
      %v1310 = vpop.f32.mrb[0].mxu0
      %v1311 = vadd.f32 0.0, %v1310
      %v1312 = vpop.f32.mrb[0].mxu0
      %1313 = vmatprep.mubr.f32.mxu0 0.0
      %1314 = vmatmul.mubr.f32.gmra.mrb[0].mxu0 %v1106
      %v1315 = vpop.f32.mrb[0].mxu0
      %v1316 = vadd.f32 0.0, %v1315
      %v1317 = vpop.f32.mrb[0].mxu0
      %1318 = vmatprep.mubr.f32.mxu0 0.0
      %1319 = vmatmul.mubr.f32.gmra.mrb[0].mxu0 %v1109
      %v1320 = vpop.f32.mrb[0].mxu0
      %v1321 = vadd.f32 0.0, %v1320
      %v1322 = vpop.f32.mrb[0].mxu0
      %1323 = vdwg.mxu0
      %v1324 = vadd.f32 %v964, %v1181
      %v1325 = vadd.f32 %v965, %v1186
      %v1326 = vadd.f32 %v966, %v1191
      %v1327 = vadd.f32 %v967, %v1196
      %v1328 = vadd.f32 %v968, %v1201
      %v1329 = vadd.f32 %v969, %v1206
      %v1330 = vadd.f32 %v970, %v1211
      %v1331 = vadd.f32 %v971, %v1216
      %v1332 = vadd.f32 %v972, %v1221
      %v1333 = vadd.f32 %v973, %v1226
      %v1334 = vadd.f32 %v974, %v1231
      %v1335 = vadd.f32 %v975, %v1236
      %v1336 = vadd.f32 %v976, %v1241
      %v1337 = vadd.f32 %v977, %v1246
      %v1338 = vadd.f32 %v978, %v1251
      %v1339 = vadd.f32 %v979, %v1256
      %v1340 = vadd.f32 %v980, %v1261
      %v1341 = vadd.f32 %v981, %v1266
      %v1342 = vadd.f32 %v982, %v1271
      %v1343 = vadd.f32 %v983, %v1276
      %v1344 = vadd.f32 %v984, %v1281
      %v1345 = vadd.f32 %v985, %v1286
      %v1346 = vadd.f32 %v986, %v1291
      %v1347 = vadd.f32 %v987, %v1296
      %v1348 = vadd.f32 %v988, %v1301
      %v1349 = vadd.f32 %v989, %v1306
      %v1350 = vadd.f32 %v990, %v1311
      %v1351 = vadd.f32 %v991, %v1316
      %v1352 = vadd.f32 %v992, %v1321
      %v1353 = vld [vmem:[%s254 + $0x10] sm:$0xff]
      %v1354 = vld [vmem:[%s254 + $0x18] sm:$0xff]
      %v1355 = vld [vmem:[%s254 + $0x20] sm:$0xff]
      %v1356 = vld [vmem:[%s254 + $0x28] sm:$0xff]
      %v1357 = vld [vmem:[%s254 + $0x30] sm:$0xff]
      %v1358 = vld [vmem:[%s254 + $0x38] sm:$0xff]
      %v1359 = vld [vmem:[%s254 + $0x40] sm:$0xff]
      %v1360 = vld [vmem:[%s254 + $0x48] sm:$0xff]
      %v1361 = vld [vmem:[%s254 + $0x50] sm:$0xff]
      %v1362 = vld [vmem:[%s254 + $0x58] sm:$0xff]
      %v1363 = vld [vmem:[%s254 + $0x60] sm:$0xff]
      %v1364 = vld [vmem:[%s254 + $0x68] sm:$0xff]
      %v1365 = vld [vmem:[%s254 + $0x70] sm:$0xff]
      %v1366 = vld [vmem:[%s254 + $0x78] sm:$0xff]
      %v1367 = vld [vmem:[%s254 + $0x80] sm:$0xff]
      %v1368 = vld [vmem:[%s254 + $0x88] sm:$0xff]
      %v1369 = vld [vmem:[%s254 + $0x90] sm:$0xff]
      %v1370 = vld [vmem:[%s254 + $0x98] sm:$0xff]
      %v1371 = vld [vmem:[%s254 + $0xa0] sm:$0xff]
      %v1372 = vld [vmem:[%s254 + $0xa8] sm:$0xff]
      %v1373 = vld [vmem:[%s254 + $0xb0] sm:$0xff]
      %v1374 = vld [vmem:[%s254 + $0xb8] sm:$0xff]
      %v1375 = vld [vmem:[%s254 + $0xc0] sm:$0xff]
      %v1376 = vld [vmem:[%s254 + $0xc8] sm:$0xff]
      %v1377 = vld [vmem:[%s254 + $0xd0] sm:$0xff]
      %v1378 = vld [vmem:[%s254 + $0xd8] sm:$0xff]
      %v1379 = vld [vmem:[%s254 + $0xe0] sm:$0xff]
      %v1380 = vld [vmem:[%s254 + $0xe8] sm:$0xff]
      %v1381 = vld [vmem:[%s254 + $0xf0] sm:$0x3]
      %s1382 = scalar_lea.vmem %s1, 12
      %v1383 = vld [vmem:[%s1382] sm:$0xf]
      %v1385 = vsel %vm302, %v1353, 0
      %v1388 = vsel %vm302, %v1354, 0
      %v1391 = vsel %vm302, %v1355, 0
      %v1394 = vsel %vm302, %v1356, 0
      %v1397 = vsel %vm302, %v1357, 0
      %v1400 = vsel %vm302, %v1358, 0
      %v1403 = vsel %vm302, %v1359, 0
      %v1406 = vsel %vm302, %v1360, 0
      %v1409 = vsel %vm302, %v1361, 0
      %v1412 = vsel %vm302, %v1362, 0
      %v1415 = vsel %vm302, %v1363, 0
      %v1418 = vsel %vm302, %v1364, 0
      %v1421 = vsel %vm302, %v1365, 0
      %v1424 = vsel %vm302, %v1366, 0
      %v1427 = vsel %vm302, %v1367, 0
      %v1430 = vsel %vm302, %v1368, 0
      %v1433 = vsel %vm302, %v1369, 0
      %v1436 = vsel %vm302, %v1370, 0
      %v1439 = vsel %vm302, %v1371, 0
      %v1442 = vsel %vm302, %v1372, 0
      %v1445 = vsel %vm302, %v1373, 0
      %v1448 = vsel %vm302, %v1374, 0
      %v1451 = vsel %vm302, %v1375, 0
      %v1454 = vsel %vm302, %v1376, 0
      %v1457 = vsel %vm302, %v1377, 0
      %v1460 = vsel %vm302, %v1378, 0
      %v1463 = vsel %vm302, %v1379, 0
      %v1466 = vsel %vm302, %v1380, 0
      %v1469 = vsel %vm302, %v1381, 0
      %v1472 = vsel %vm390, %v1383, 0
      %1474 = vmatprep.subr.mxu0 0.0
      %1475 = vmatpush1.msra.mxu0 %v1472
      %1476 = vmatprep.subr.mxu0 0.0
      %1477 = vmatpush1.msra.mxu0 0.0
      %1478 = vmatprep.subr.mxu0 0.0
      %1479 = vmatpush1.msra.mxu0 0.0
      %1480 = vmatprep.subr.mxu0 0.0
      %1481 = vmatpush1.msra.mxu0 0.0
      %1482 = vmatprep.subr.mxu0 0.0
      %1483 = vmatpush1.msra.mxu0 0.0
      %1484 = vmatprep.subr.mxu0 0.0
      %1485 = vmatpush1.msra.mxu0 0.0
      %1486 = vmatprep.subr.mxu0 0.0
      %1487 = vmatpush1.msra.mxu0 0.0
      %1488 = vmatprep.subr.mxu0 0.0
      %1489 = vmatpush1.msra.mxu0 0.0
      %1490 = vmatprep.subr.mxu0 0.0
      %1491 = vmatpush1.msra.mxu0 0.0
      %1492 = vmatprep.subr.mxu0 0.0
      %1493 = vmatpush1.msra.mxu0 0.0
      %1494 = vmatprep.subr.mxu0 0.0
      %1495 = vmatpush1.msra.mxu0 0.0
      %1496 = vmatprep.subr.mxu0 0.0
      %1497 = vmatpush1.msra.mxu0 0.0
      %1498 = vmatprep.subr.mxu0 0.0
      %1499 = vmatpush1.msra.mxu0 0.0
      %1500 = vmatprep.subr.mxu0 0.0
      %1501 = vmatpush1.msra.mxu0 0.0
      %1502 = vmatprep.subr.mxu0 0.0
      %1503 = vmatpush1.msra.mxu0 0.0
      %1504 = vmatprep.subr.mxu0 0.0
      %1505 = vmatpush1.msra.mxu0 0.0
      %1506 = vmatprep.subr.mxu0 0.0
      %1507 = vmatpush1.msra.mxu0 0.0
      %1508 = vmatprep.subr.mxu0 0.0
      %1509 = vmatpush1.msra.mxu0 0.0
      %1510 = vmatprep.subr.mxu0 0.0
      %1511 = vmatpush1.msra.mxu0 0.0
      %1512 = vmatprep.subr.mxu0 0.0
      %1513 = vmatpush1.msra.mxu0 0.0
      %1514 = vmatprep.subr.mxu0 0.0
      %1515 = vmatpush1.msra.mxu0 0.0
      %1516 = vmatprep.subr.mxu0 0.0
      %1517 = vmatpush1.msra.mxu0 0.0
      %1518 = vmatprep.subr.mxu0 0.0
      %1519 = vmatpush1.msra.mxu0 0.0
      %1520 = vmatprep.subr.mxu0 0.0
      %1521 = vmatpush1.msra.mxu0 0.0
      %1522 = vmatprep.subr.mxu0 0.0
      %1523 = vmatpush1.msra.mxu0 0.0
      %1524 = vmatprep.subr.mxu0 0.0
      %1525 = vmatpush1.msra.mxu0 0.0
      %1526 = vmatprep.subr.mxu0 0.0
      %1527 = vmatpush1.msra.mxu0 0.0
      %1528 = vmatprep.subr.mxu0 0.0
      %1529 = vmatpush1.msra.mxu0 0.0
      %1530 = vmatprep.subr.mxu0 0.0
      %1531 = vmatpush1.msra.mxu0 0.0
      %1532 = vmatprep.subr.mxu0 0.0
      %1533 = vmatpush1.msra.mxu0 0.0
      %1534 = vmatprep.subr.mxu0 0.0
      %1535 = vmatpush1.msra.mxu0 0.0
      %1536 = vmatprep.subr.mxu0 0.0
      %1537 = vmatpush1.msra.mxu0 0.0
      %1538 = vmatprep.mubr.f32.mxu0 0.0
      %1539 = vmatmul.mubr.f32.gmra.mrb[0].mxu0 %v1385
      %v1540 = vpop.f32.mrb[0].mxu0
      %v1541 = vadd.f32 0.0, %v1540
      %v1542 = vpop.f32.mrb[0].mxu0
      %1543 = vmatprep.mubr.f32.mxu0 0.0
      %1544 = vmatmul.mubr.f32.gmra.mrb[0].mxu0 %v1388
      %v1545 = vpop.f32.mrb[0].mxu0
      %v1546 = vadd.f32 0.0, %v1545
      %v1547 = vpop.f32.mrb[0].mxu0
      %1548 = vmatprep.mubr.f32.mxu0 0.0
      %1549 = vmatmul.mubr.f32.gmra.mrb[0].mxu0 %v1391
      %v1550 = vpop.f32.mrb[0].mxu0
      %v1551 = vadd.f32 0.0, %v1550
      %v1552 = vpop.f32.mrb[0].mxu0
      %1553 = vmatprep.mubr.f32.mxu0 0.0
      %1554 = vmatmul.mubr.f32.gmra.mrb[0].mxu0 %v1394
      %v1555 = vpop.f32.mrb[0].mxu0
      %v1556 = vadd.f32 0.0, %v1555
      %v1557 = vpop.f32.mrb[0].mxu0
      %1558 = vmatprep.mubr.f32.mxu0 0.0
      %1559 = vmatmul.mubr.f32.gmra.mrb[0].mxu0 %v1397
      %v1560 = vpop.f32.mrb[0].mxu0
      %v1561 = vadd.f32 0.0, %v1560
      %v1562 = vpop.f32.mrb[0].mxu0
      %1563 = vmatprep.mubr.f32.mxu0 0.0
      %1564 = vmatmul.mubr.f32.gmra.mrb[0].mxu0 %v1400
      %v1565 = vpop.f32.mrb[0].mxu0
      %v1566 = vadd.f32 0.0, %v1565
      %v1567 = vpop.f32.mrb[0].mxu0
      %1568 = vmatprep.mubr.f32.mxu0 0.0
      %1569 = vmatmul.mubr.f32.gmra.mrb[0].mxu0 %v1403
      %v1570 = vpop.f32.mrb[0].mxu0
      %v1571 = vadd.f32 0.0, %v1570
      %v1572 = vpop.f32.mrb[0].mxu0
      %1573 = vmatprep.mubr.f32.mxu0 0.0
      %1574 = vmatmul.mubr.f32.gmra.mrb[0].mxu0 %v1406
      %v1575 = vpop.f32.mrb[0].mxu0
      %v1576 = vadd.f32 0.0, %v1575
      %v1577 = vpop.f32.mrb[0].mxu0
      %1578 = vmatprep.mubr.f32.mxu0 0.0
      %1579 = vmatmul.mubr.f32.gmra.mrb[0].mxu0 %v1409
      %v1580 = vpop.f32.mrb[0].mxu0
      %v1581 = vadd.f32 0.0, %v1580
      %v1582 = vpop.f32.mrb[0].mxu0
      %1583 = vmatprep.mubr.f32.mxu0 0.0
      %1584 = vmatmul.mubr.f32.gmra.mrb[0].mxu0 %v1412
      %v1585 = vpop.f32.mrb[0].mxu0
      %v1586 = vadd.f32 0.0, %v1585
      %v1587 = vpop.f32.mrb[0].mxu0
      %1588 = vmatprep.mubr.f32.mxu0 0.0
      %1589 = vmatmul.mubr.f32.gmra.mrb[0].mxu0 %v1415
      %v1590 = vpop.f32.mrb[0].mxu0
      %v1591 = vadd.f32 0.0, %v1590
      %v1592 = vpop.f32.mrb[0].mxu0
      %1593 = vmatprep.mubr.f32.mxu0 0.0
      %1594 = vmatmul.mubr.f32.gmra.mrb[0].mxu0 %v1418
      %v1595 = vpop.f32.mrb[0].mxu0
      %v1596 = vadd.f32 0.0, %v1595
      %v1597 = vpop.f32.mrb[0].mxu0
      %1598 = vmatprep.mubr.f32.mxu0 0.0
      %1599 = vmatmul.mubr.f32.gmra.mrb[0].mxu0 %v1421
      %v1600 = vpop.f32.mrb[0].mxu0
      %v1601 = vadd.f32 0.0, %v1600
      %v1602 = vpop.f32.mrb[0].mxu0
      %1603 = vmatprep.mubr.f32.mxu0 0.0
      %1604 = vmatmul.mubr.f32.gmra.mrb[0].mxu0 %v1424
      %v1605 = vpop.f32.mrb[0].mxu0
      %v1606 = vadd.f32 0.0, %v1605
      %v1607 = vpop.f32.mrb[0].mxu0
      %1608 = vmatprep.mubr.f32.mxu0 0.0
      %1609 = vmatmul.mubr.f32.gmra.mrb[0].mxu0 %v1427
      %v1610 = vpop.f32.mrb[0].mxu0
      %v1611 = vadd.f32 0.0, %v1610
      %v1612 = vpop.f32.mrb[0].mxu0
      %1613 = vmatprep.mubr.f32.mxu0 0.0
      %1614 = vmatmul.mubr.f32.gmra.mrb[0].mxu0 %v1430
      %v1615 = vpop.f32.mrb[0].mxu0
      %v1616 = vadd.f32 0.0, %v1615
      %v1617 = vpop.f32.mrb[0].mxu0
      %1618 = vmatprep.mubr.f32.mxu0 0.0
      %1619 = vmatmul.mubr.f32.gmra.mrb[0].mxu0 %v1433
      %v1620 = vpop.f32.mrb[0].mxu0
      %v1621 = vadd.f32 0.0, %v1620
      %v1622 = vpop.f32.mrb[0].mxu0
      %1623 = vmatprep.mubr.f32.mxu0 0.0
      %1624 = vmatmul.mubr.f32.gmra.mrb[0].mxu0 %v1436
      %v1625 = vpop.f32.mrb[0].mxu0
      %v1626 = vadd.f32 0.0, %v1625
      %v1627 = vpop.f32.mrb[0].mxu0
      %1628 = vmatprep.mubr.f32.mxu0 0.0
      %1629 = vmatmul.mubr.f32.gmra.mrb[0].mxu0 %v1439
      %v1630 = vpop.f32.mrb[0].mxu0
      %v1631 = vadd.f32 0.0, %v1630
      %v1632 = vpop.f32.mrb[0].mxu0
      %1633 = vmatprep.mubr.f32.mxu0 0.0
      %1634 = vmatmul.mubr.f32.gmra.mrb[0].mxu0 %v1442
      %v1635 = vpop.f32.mrb[0].mxu0
      %v1636 = vadd.f32 0.0, %v1635
      %v1637 = vpop.f32.mrb[0].mxu0
      %1638 = vmatprep.mubr.f32.mxu0 0.0
      %1639 = vmatmul.mubr.f32.gmra.mrb[0].mxu0 %v1445
      %v1640 = vpop.f32.mrb[0].mxu0
      %v1641 = vadd.f32 0.0, %v1640
      %v1642 = vpop.f32.mrb[0].mxu0
      %1643 = vmatprep.mubr.f32.mxu0 0.0
      %1644 = vmatmul.mubr.f32.gmra.mrb[0].mxu0 %v1448
      %v1645 = vpop.f32.mrb[0].mxu0
      %v1646 = vadd.f32 0.0, %v1645
      %v1647 = vpop.f32.mrb[0].mxu0
      %1648 = vmatprep.mubr.f32.mxu0 0.0
      %1649 = vmatmul.mubr.f32.gmra.mrb[0].mxu0 %v1451
      %v1650 = vpop.f32.mrb[0].mxu0
      %v1651 = vadd.f32 0.0, %v1650
      %v1652 = vpop.f32.mrb[0].mxu0
      %1653 = vmatprep.mubr.f32.mxu0 0.0
      %1654 = vmatmul.mubr.f32.gmra.mrb[0].mxu0 %v1454
      %v1655 = vpop.f32.mrb[0].mxu0
      %v1656 = vadd.f32 0.0, %v1655
      %v1657 = vpop.f32.mrb[0].mxu0
      %1658 = vmatprep.mubr.f32.mxu0 0.0
      %1659 = vmatmul.mubr.f32.gmra.mrb[0].mxu0 %v1457
      %v1660 = vpop.f32.mrb[0].mxu0
      %v1661 = vadd.f32 0.0, %v1660
      %v1662 = vpop.f32.mrb[0].mxu0
      %1663 = vmatprep.mubr.f32.mxu0 0.0
      %1664 = vmatmul.mubr.f32.gmra.mrb[0].mxu0 %v1460
      %v1665 = vpop.f32.mrb[0].mxu0
      %v1666 = vadd.f32 0.0, %v1665
      %v1667 = vpop.f32.mrb[0].mxu0
      %1668 = vmatprep.mubr.f32.mxu0 0.0
      %1669 = vmatmul.mubr.f32.gmra.mrb[0].mxu0 %v1463
      %v1670 = vpop.f32.mrb[0].mxu0
      %v1671 = vadd.f32 0.0, %v1670
      %v1672 = vpop.f32.mrb[0].mxu0
      %1673 = vmatprep.mubr.f32.mxu0 0.0
      %1674 = vmatmul.mubr.f32.gmra.mrb[0].mxu0 %v1466
      %v1675 = vpop.f32.mrb[0].mxu0
      %v1676 = vadd.f32 0.0, %v1675
      %v1677 = vpop.f32.mrb[0].mxu0
      %1678 = vmatprep.mubr.f32.mxu0 0.0
      %1679 = vmatmul.mubr.f32.gmra.mrb[0].mxu0 %v1469
      %v1680 = vpop.f32.mrb[0].mxu0
      %v1681 = vadd.f32 0.0, %v1680
      %v1682 = vpop.f32.mrb[0].mxu0
      %1683 = vdwg.mxu0
      %v1684 = vadd.f32 %v1324, %v1541
      %v1685 = vadd.f32 %v1325, %v1546
      %v1686 = vadd.f32 %v1326, %v1551
      %v1687 = vadd.f32 %v1327, %v1556
      %v1688 = vadd.f32 %v1328, %v1561
      %v1689 = vadd.f32 %v1329, %v1566
      %v1690 = vadd.f32 %v1330, %v1571
      %v1691 = vadd.f32 %v1331, %v1576
      %v1692 = vadd.f32 %v1332, %v1581
      %v1693 = vadd.f32 %v1333, %v1586
      %v1694 = vadd.f32 %v1334, %v1591
      %v1695 = vadd.f32 %v1335, %v1596
      %v1696 = vadd.f32 %v1336, %v1601
      %v1697 = vadd.f32 %v1337, %v1606
      %v1698 = vadd.f32 %v1338, %v1611
      %v1699 = vadd.f32 %v1339, %v1616
      %v1700 = vadd.f32 %v1340, %v1621
      %v1701 = vadd.f32 %v1341, %v1626
      %v1702 = vadd.f32 %v1342, %v1631
      %v1703 = vadd.f32 %v1343, %v1636
      %v1704 = vadd.f32 %v1344, %v1641
      %v1705 = vadd.f32 %v1345, %v1646
      %v1706 = vadd.f32 %v1346, %v1651
      %v1707 = vadd.f32 %v1347, %v1656
      %v1708 = vadd.f32 %v1348, %v1661
      %v1709 = vadd.f32 %v1349, %v1666
      %v1710 = vadd.f32 %v1350, %v1671
      %v1711 = vadd.f32 %v1351, %v1676
      %v1712 = vadd.f32 %v1352, %v1681
      %v1713 = vld [vmem:[%s254 + $0x11] sm:$0xff]
      %v1714 = vld [vmem:[%s254 + $0x19] sm:$0xff]
      %v1715 = vld [vmem:[%s254 + $0x21] sm:$0xff]
      %v1716 = vld [vmem:[%s254 + $0x29] sm:$0xff]
      %v1717 = vld [vmem:[%s254 + $0x31] sm:$0xff]
      %v1718 = vld [vmem:[%s254 + $0x39] sm:$0xff]
      %v1719 = vld [vmem:[%s254 + $0x41] sm:$0xff]
      %v1720 = vld [vmem:[%s254 + $0x49] sm:$0xff]
      %v1721 = vld [vmem:[%s254 + $0x51] sm:$0xff]
      %v1722 = vld [vmem:[%s254 + $0x59] sm:$0xff]
      %v1723 = vld [vmem:[%s254 + $0x61] sm:$0xff]
      %v1724 = vld [vmem:[%s254 + $0x69] sm:$0xff]
      %v1725 = vld [vmem:[%s254 + $0x71] sm:$0xff]
      %v1726 = vld [vmem:[%s254 + $0x79] sm:$0xff]
      %v1727 = vld [vmem:[%s254 + $0x81] sm:$0xff]
      %v1728 = vld [vmem:[%s254 + $0x89] sm:$0xff]
      %v1729 = vld [vmem:[%s254 + $0x91] sm:$0xff]
      %v1730 = vld [vmem:[%s254 + $0x99] sm:$0xff]
      %v1731 = vld [vmem:[%s254 + $0xa1] sm:$0xff]
      %v1732 = vld [vmem:[%s254 + $0xa9] sm:$0xff]
      %v1733 = vld [vmem:[%s254 + $0xb1] sm:$0xff]
      %v1734 = vld [vmem:[%s254 + $0xb9] sm:$0xff]
      %v1735 = vld [vmem:[%s254 + $0xc1] sm:$0xff]
      %v1736 = vld [vmem:[%s254 + $0xc9] sm:$0xff]
      %v1737 = vld [vmem:[%s254 + $0xd1] sm:$0xff]
      %v1738 = vld [vmem:[%s254 + $0xd9] sm:$0xff]
      %v1739 = vld [vmem:[%s254 + $0xe1] sm:$0xff]
      %v1740 = vld [vmem:[%s254 + $0xe9] sm:$0xff]
      %v1741 = vld [vmem:[%s254 + $0xf1] sm:$0x3]
      %s1742 = scalar_lea.vmem %s1, 16
      %v1743 = vld [vmem:[%s1742] sm:$0xf]
      %v1745 = vsel %vm302, %v1713, 0
      %v1748 = vsel %vm302, %v1714, 0
      %v1751 = vsel %vm302, %v1715, 0
      %v1754 = vsel %vm302, %v1716, 0
      %v1757 = vsel %vm302, %v1717, 0
      %v1760 = vsel %vm302, %v1718, 0
      %v1763 = vsel %vm302, %v1719, 0
      %v1766 = vsel %vm302, %v1720, 0
      %v1769 = vsel %vm302, %v1721, 0
      %v1772 = vsel %vm302, %v1722, 0
      %v1775 = vsel %vm302, %v1723, 0
      %v1778 = vsel %vm302, %v1724, 0
      %v1781 = vsel %vm302, %v1725, 0
      %v1784 = vsel %vm302, %v1726, 0
      %v1787 = vsel %vm302, %v1727, 0
      %v1790 = vsel %vm302, %v1728, 0
      %v1793 = vsel %vm302, %v1729, 0
      %v1796 = vsel %vm302, %v1730, 0
      %v1799 = vsel %vm302, %v1731, 0
      %v1802 = vsel %vm302, %v1732, 0
      %v1805 = vsel %vm302, %v1733, 0
      %v1808 = vsel %vm302, %v1734, 0
      %v1811 = vsel %vm302, %v1735, 0
      %v1814 = vsel %vm302, %v1736, 0
      %v1817 = vsel %vm302, %v1737, 0
      %v1820 = vsel %vm302, %v1738, 0
      %v1823 = vsel %vm302, %v1739, 0
      %v1826 = vsel %vm302, %v1740, 0
      %v1829 = vsel %vm302, %v1741, 0
      %v1832 = vsel %vm390, %v1743, 0
      %1834 = vmatprep.subr.mxu0 0.0
      %1835 = vmatpush1.msra.mxu0 %v1832
      %1836 = vmatprep.subr.mxu0 0.0
      %1837 = vmatpush1.msra.mxu0 0.0
      %1838 = vmatprep.subr.mxu0 0.0
      %1839 = vmatpush1.msra.mxu0 0.0
      %1840 = vmatprep.subr.mxu0 0.0
      %1841 = vmatpush1.msra.mxu0 0.0
      %1842 = vmatprep.subr.mxu0 0.0
      %1843 = vmatpush1.msra.mxu0 0.0
      %1844 = vmatprep.subr.mxu0 0.0
      %1845 = vmatpush1.msra.mxu0 0.0
      %1846 = vmatprep.subr.mxu0 0.0
      %1847 = vmatpush1.msra.mxu0 0.0
      %1848 = vmatprep.subr.mxu0 0.0
      %1849 = vmatpush1.msra.mxu0 0.0
      %1850 = vmatprep.subr.mxu0 0.0
      %1851 = vmatpush1.msra.mxu0 0.0
      %1852 = vmatprep.subr.mxu0 0.0
      %1853 = vmatpush1.msra.mxu0 0.0
      %1854 = vmatprep.subr.mxu0 0.0
      %1855 = vmatpush1.msra.mxu0 0.0
      %1856 = vmatprep.subr.mxu0 0.0
      %1857 = vmatpush1.msra.mxu0 0.0
      %1858 = vmatprep.subr.mxu0 0.0
      %1859 = vmatpush1.msra.mxu0 0.0
      %1860 = vmatprep.subr.mxu0 0.0
      %1861 = vmatpush1.msra.mxu0 0.0
      %1862 = vmatprep.subr.mxu0 0.0
      %1863 = vmatpush1.msra.mxu0 0.0
      %1864 = vmatprep.subr.mxu0 0.0
      %1865 = vmatpush1.msra.mxu0 0.0
      %1866 = vmatprep.subr.mxu0 0.0
      %1867 = vmatpush1.msra.mxu0 0.0
      %1868 = vmatprep.subr.mxu0 0.0
      %1869 = vmatpush1.msra.mxu0 0.0
      %1870 = vmatprep.subr.mxu0 0.0
      %1871 = vmatpush1.msra.mxu0 0.0
      %1872 = vmatprep.subr.mxu0 0.0
      %1873 = vmatpush1.msra.mxu0 0.0
      %1874 = vmatprep.subr.mxu0 0.0
      %1875 = vmatpush1.msra.mxu0 0.0
      %1876 = vmatprep.subr.mxu0 0.0
      %1877 = vmatpush1.msra.mxu0 0.0
      %1878 = vmatprep.subr.mxu0 0.0
      %1879 = vmatpush1.msra.mxu0 0.0
      %1880 = vmatprep.subr.mxu0 0.0
      %1881 = vmatpush1.msra.mxu0 0.0
      %1882 = vmatprep.subr.mxu0 0.0
      %1883 = vmatpush1.msra.mxu0 0.0
      %1884 = vmatprep.subr.mxu0 0.0
      %1885 = vmatpush1.msra.mxu0 0.0
      %1886 = vmatprep.subr.mxu0 0.0
      %1887 = vmatpush1.msra.mxu0 0.0
      %1888 = vmatprep.subr.mxu0 0.0
      %1889 = vmatpush1.msra.mxu0 0.0
      %1890 = vmatprep.subr.mxu0 0.0
      %1891 = vmatpush1.msra.mxu0 0.0
      %1892 = vmatprep.subr.mxu0 0.0
      %1893 = vmatpush1.msra.mxu0 0.0
      %1894 = vmatprep.subr.mxu0 0.0
      %1895 = vmatpush1.msra.mxu0 0.0
      %1896 = vmatprep.subr.mxu0 0.0
      %1897 = vmatpush1.msra.mxu0 0.0
      %1898 = vmatprep.mubr.f32.mxu0 0.0
      %1899 = vmatmul.mubr.f32.gmra.mrb[0].mxu0 %v1745
      %v1900 = vpop.f32.mrb[0].mxu0
      %v1901 = vadd.f32 0.0, %v1900
      %v1902 = vpop.f32.mrb[0].mxu0
      %1903 = vmatprep.mubr.f32.mxu0 0.0
      %1904 = vmatmul.mubr.f32.gmra.mrb[0].mxu0 %v1748
      %v1905 = vpop.f32.mrb[0].mxu0
      %v1906 = vadd.f32 0.0, %v1905
      %v1907 = vpop.f32.mrb[0].mxu0
      %1908 = vmatprep.mubr.f32.mxu0 0.0
      %1909 = vmatmul.mubr.f32.gmra.mrb[0].mxu0 %v1751
      %v1910 = vpop.f32.mrb[0].mxu0
      %v1911 = vadd.f32 0.0, %v1910
      %v1912 = vpop.f32.mrb[0].mxu0
      %1913 = vmatprep.mubr.f32.mxu0 0.0
      %1914 = vmatmul.mubr.f32.gmra.mrb[0].mxu0 %v1754
      %v1915 = vpop.f32.mrb[0].mxu0
      %v1916 = vadd.f32 0.0, %v1915
      %v1917 = vpop.f32.mrb[0].mxu0
      %1918 = vmatprep.mubr.f32.mxu0 0.0
      %1919 = vmatmul.mubr.f32.gmra.mrb[0].mxu0 %v1757
      %v1920 = vpop.f32.mrb[0].mxu0
      %v1921 = vadd.f32 0.0, %v1920
      %v1922 = vpop.f32.mrb[0].mxu0
      %1923 = vmatprep.mubr.f32.mxu0 0.0
      %1924 = vmatmul.mubr.f32.gmra.mrb[0].mxu0 %v1760
      %v1925 = vpop.f32.mrb[0].mxu0
      %v1926 = vadd.f32 0.0, %v1925
      %v1927 = vpop.f32.mrb[0].mxu0
      %1928 = vmatprep.mubr.f32.mxu0 0.0
      %1929 = vmatmul.mubr.f32.gmra.mrb[0].mxu0 %v1763
      %v1930 = vpop.f32.mrb[0].mxu0
      %v1931 = vadd.f32 0.0, %v1930
      %v1932 = vpop.f32.mrb[0].mxu0
      %1933 = vmatprep.mubr.f32.mxu0 0.0
      %1934 = vmatmul.mubr.f32.gmra.mrb[0].mxu0 %v1766
      %v1935 = vpop.f32.mrb[0].mxu0
      %v1936 = vadd.f32 0.0, %v1935
      %v1937 = vpop.f32.mrb[0].mxu0
      %1938 = vmatprep.mubr.f32.mxu0 0.0
      %1939 = vmatmul.mubr.f32.gmra.mrb[0].mxu0 %v1769
      %v1940 = vpop.f32.mrb[0].mxu0
      %v1941 = vadd.f32 0.0, %v1940
      %v1942 = vpop.f32.mrb[0].mxu0
      %1943 = vmatprep.mubr.f32.mxu0 0.0
      %1944 = vmatmul.mubr.f32.gmra.mrb[0].mxu0 %v1772
      %v1945 = vpop.f32.mrb[0].mxu0
      %v1946 = vadd.f32 0.0, %v1945
      %v1947 = vpop.f32.mrb[0].mxu0
      %1948 = vmatprep.mubr.f32.mxu0 0.0
      %1949 = vmatmul.mubr.f32.gmra.mrb[0].mxu0 %v1775
      %v1950 = vpop.f32.mrb[0].mxu0
      %v1951 = vadd.f32 0.0, %v1950
      %v1952 = vpop.f32.mrb[0].mxu0
      %1953 = vmatprep.mubr.f32.mxu0 0.0
      %1954 = vmatmul.mubr.f32.gmra.mrb[0].mxu0 %v1778
      %v1955 = vpop.f32.mrb[0].mxu0
      %v1956 = vadd.f32 0.0, %v1955
      %v1957 = vpop.f32.mrb[0].mxu0
      %1958 = vmatprep.mubr.f32.mxu0 0.0
      %1959 = vmatmul.mubr.f32.gmra.mrb[0].mxu0 %v1781
      %v1960 = vpop.f32.mrb[0].mxu0
      %v1961 = vadd.f32 0.0, %v1960
      %v1962 = vpop.f32.mrb[0].mxu0
      %1963 = vmatprep.mubr.f32.mxu0 0.0
      %1964 = vmatmul.mubr.f32.gmra.mrb[0].mxu0 %v1784
      %v1965 = vpop.f32.mrb[0].mxu0
      %v1966 = vadd.f32 0.0, %v1965
      %v1967 = vpop.f32.mrb[0].mxu0
      %1968 = vmatprep.mubr.f32.mxu0 0.0
      %1969 = vmatmul.mubr.f32.gmra.mrb[0].mxu0 %v1787
      %v1970 = vpop.f32.mrb[0].mxu0
      %v1971 = vadd.f32 0.0, %v1970
      %v1972 = vpop.f32.mrb[0].mxu0
      %1973 = vmatprep.mubr.f32.mxu0 0.0
      %1974 = vmatmul.mubr.f32.gmra.mrb[0].mxu0 %v1790
      %v1975 = vpop.f32.mrb[0].mxu0
      %v1976 = vadd.f32 0.0, %v1975
      %v1977 = vpop.f32.mrb[0].mxu0
      %1978 = vmatprep.mubr.f32.mxu0 0.0
      %1979 = vmatmul.mubr.f32.gmra.mrb[0].mxu0 %v1793
      %v1980 = vpop.f32.mrb[0].mxu0
      %v1981 = vadd.f32 0.0, %v1980
      %v1982 = vpop.f32.mrb[0].mxu0
      %1983 = vmatprep.mubr.f32.mxu0 0.0
      %1984 = vmatmul.mubr.f32.gmra.mrb[0].mxu0 %v1796
      %v1985 = vpop.f32.mrb[0].mxu0
      %v1986 = vadd.f32 0.0, %v1985
      %v1987 = vpop.f32.mrb[0].mxu0
      %1988 = vmatprep.mubr.f32.mxu0 0.0
      %1989 = vmatmul.mubr.f32.gmra.mrb[0].mxu0 %v1799
      %v1990 = vpop.f32.mrb[0].mxu0
      %v1991 = vadd.f32 0.0, %v1990
      %v1992 = vpop.f32.mrb[0].mxu0
      %1993 = vmatprep.mubr.f32.mxu0 0.0
      %1994 = vmatmul.mubr.f32.gmra.mrb[0].mxu0 %v1802
      %v1995 = vpop.f32.mrb[0].mxu0
      %v1996 = vadd.f32 0.0, %v1995
      %v1997 = vpop.f32.mrb[0].mxu0
      %1998 = vmatprep.mubr.f32.mxu0 0.0
      %1999 = vmatmul.mubr.f32.gmra.mrb[0].mxu0 %v1805
      %v2000 = vpop.f32.mrb[0].mxu0
      %v2001 = vadd.f32 0.0, %v2000
      %v2002 = vpop.f32.mrb[0].mxu0
      %2003 = vmatprep.mubr.f32.mxu0 0.0
      %2004 = vmatmul.mubr.f32.gmra.mrb[0].mxu0 %v1808
      %v2005 = vpop.f32.mrb[0].mxu0
      %v2006 = vadd.f32 0.0, %v2005
      %v2007 = vpop.f32.mrb[0].mxu0
      %2008 = vmatprep.mubr.f32.mxu0 0.0
      %2009 = vmatmul.mubr.f32.gmra.mrb[0].mxu0 %v1811
      %v2010 = vpop.f32.mrb[0].mxu0
      %v2011 = vadd.f32 0.0, %v2010
      %v2012 = vpop.f32.mrb[0].mxu0
      %2013 = vmatprep.mubr.f32.mxu0 0.0
      %2014 = vmatmul.mubr.f32.gmra.mrb[0].mxu0 %v1814
      %v2015 = vpop.f32.mrb[0].mxu0
      %v2016 = vadd.f32 0.0, %v2015
      %v2017 = vpop.f32.mrb[0].mxu0
      %2018 = vmatprep.mubr.f32.mxu0 0.0
      %2019 = vmatmul.mubr.f32.gmra.mrb[0].mxu0 %v1817
      %v2020 = vpop.f32.mrb[0].mxu0
      %v2021 = vadd.f32 0.0, %v2020
      %v2022 = vpop.f32.mrb[0].mxu0
      %2023 = vmatprep.mubr.f32.mxu0 0.0
      %2024 = vmatmul.mubr.f32.gmra.mrb[0].mxu0 %v1820
      %v2025 = vpop.f32.mrb[0].mxu0
      %v2026 = vadd.f32 0.0, %v2025
      %v2027 = vpop.f32.mrb[0].mxu0
      %2028 = vmatprep.mubr.f32.mxu0 0.0
      %2029 = vmatmul.mubr.f32.gmra.mrb[0].mxu0 %v1823
      %v2030 = vpop.f32.mrb[0].mxu0
      %v2031 = vadd.f32 0.0, %v2030
      %v2032 = vpop.f32.mrb[0].mxu0
      %2033 = vmatprep.mubr.f32.mxu0 0.0
      %2034 = vmatmul.mubr.f32.gmra.mrb[0].mxu0 %v1826
      %v2035 = vpop.f32.mrb[0].mxu0
      %v2036 = vadd.f32 0.0, %v2035
      %v2037 = vpop.f32.mrb[0].mxu0
      %2038 = vmatprep.mubr.f32.mxu0 0.0
      %2039 = vmatmul.mubr.f32.gmra.mrb[0].mxu0 %v1829
      %v2040 = vpop.f32.mrb[0].mxu0
      %v2041 = vadd.f32 0.0, %v2040
      %v2042 = vpop.f32.mrb[0].mxu0
      %2043 = vdwg.mxu0
      %v2044 = vadd.f32 %v1684, %v1901
      %v2045 = vadd.f32 %v1685, %v1906
      %v2046 = vadd.f32 %v1686, %v1911
      %v2047 = vadd.f32 %v1687, %v1916
      %v2048 = vadd.f32 %v1688, %v1921
      %v2049 = vadd.f32 %v1689, %v1926
      %v2050 = vadd.f32 %v1690, %v1931
      %v2051 = vadd.f32 %v1691, %v1936
      %v2052 = vadd.f32 %v1692, %v1941
      %v2053 = vadd.f32 %v1693, %v1946
      %v2054 = vadd.f32 %v1694, %v1951
      %v2055 = vadd.f32 %v1695, %v1956
      %v2056 = vadd.f32 %v1696, %v1961
      %v2057 = vadd.f32 %v1697, %v1966
      %v2058 = vadd.f32 %v1698, %v1971
      %v2059 = vadd.f32 %v1699, %v1976
      %v2060 = vadd.f32 %v1700, %v1981
      %v2061 = vadd.f32 %v1701, %v1986
      %v2062 = vadd.f32 %v1702, %v1991
      %v2063 = vadd.f32 %v1703, %v1996
      %v2064 = vadd.f32 %v1704, %v2001
      %v2065 = vadd.f32 %v1705, %v2006
      %v2066 = vadd.f32 %v1706, %v2011
      %v2067 = vadd.f32 %v1707, %v2016
      %v2068 = vadd.f32 %v1708, %v2021
      %v2069 = vadd.f32 %v1709, %v2026
      %v2070 = vadd.f32 %v1710, %v2031
      %v2071 = vadd.f32 %v1711, %v2036
      %v2072 = vadd.f32 %v1712, %v2041
      %v2073 = vld [vmem:[%s254 + $0x12] sm:$0xff]
      %v2074 = vld [vmem:[%s254 + $0x1a] sm:$0xff]
      %v2075 = vld [vmem:[%s254 + $0x22] sm:$0xff]
      %v2076 = vld [vmem:[%s254 + $0x2a] sm:$0xff]
      %v2077 = vld [vmem:[%s254 + $0x32] sm:$0xff]
      %v2078 = vld [vmem:[%s254 + $0x3a] sm:$0xff]
      %v2079 = vld [vmem:[%s254 + $0x42] sm:$0xff]
      %v2080 = vld [vmem:[%s254 + $0x4a] sm:$0xff]
      %v2081 = vld [vmem:[%s254 + $0x52] sm:$0xff]
      %v2082 = vld [vmem:[%s254 + $0x5a] sm:$0xff]
      %v2083 = vld [vmem:[%s254 + $0x62] sm:$0xff]
      %v2084 = vld [vmem:[%s254 + $0x6a] sm:$0xff]
      %v2085 = vld [vmem:[%s254 + $0x72] sm:$0xff]
      %v2086 = vld [vmem:[%s254 + $0x7a] sm:$0xff]
      %v2087 = vld [vmem:[%s254 + $0x82] sm:$0xff]
      %v2088 = vld [vmem:[%s254 + $0x8a] sm:$0xff]
      %v2089 = vld [vmem:[%s254 + $0x92] sm:$0xff]
      %v2090 = vld [vmem:[%s254 + $0x9a] sm:$0xff]
      %v2091 = vld [vmem:[%s254 + $0xa2] sm:$0xff]
      %v2092 = vld [vmem:[%s254 + $0xaa] sm:$0xff]
      %v2093 = vld [vmem:[%s254 + $0xb2] sm:$0xff]
      %v2094 = vld [vmem:[%s254 + $0xba] sm:$0xff]
      %v2095 = vld [vmem:[%s254 + $0xc2] sm:$0xff]
      %v2096 = vld [vmem:[%s254 + $0xca] sm:$0xff]
      %v2097 = vld [vmem:[%s254 + $0xd2] sm:$0xff]
      %v2098 = vld [vmem:[%s254 + $0xda] sm:$0xff]
      %v2099 = vld [vmem:[%s254 + $0xe2] sm:$0xff]
      %v2100 = vld [vmem:[%s254 + $0xea] sm:$0xff]
      %v2101 = vld [vmem:[%s254 + $0xf2] sm:$0x3]
      %s2102 = scalar_lea.vmem %s1, 20
      %v2103 = vld [vmem:[%s2102] sm:$0xf]
      %v2105 = vsel %vm302, %v2073, 0
      %v2108 = vsel %vm302, %v2074, 0
      %v2111 = vsel %vm302, %v2075, 0
      %v2114 = vsel %vm302, %v2076, 0
      %v2117 = vsel %vm302, %v2077, 0
      %v2120 = vsel %vm302, %v2078, 0
      %v2123 = vsel %vm302, %v2079, 0
      %v2126 = vsel %vm302, %v2080, 0
      %v2129 = vsel %vm302, %v2081, 0
      %v2132 = vsel %vm302, %v2082, 0
      %v2135 = vsel %vm302, %v2083, 0
      %v2138 = vsel %vm302, %v2084, 0
      %v2141 = vsel %vm302, %v2085, 0
      %v2144 = vsel %vm302, %v2086, 0
      %v2147 = vsel %vm302, %v2087, 0
      %v2150 = vsel %vm302, %v2088, 0
      %v2153 = vsel %vm302, %v2089, 0
      %v2156 = vsel %vm302, %v2090, 0
      %v2159 = vsel %vm302, %v2091, 0
      %v2162 = vsel %vm302, %v2092, 0
      %v2165 = vsel %vm302, %v2093, 0
      %v2168 = vsel %vm302, %v2094, 0
      %v2171 = vsel %vm302, %v2095, 0
      %v2174 = vsel %vm302, %v2096, 0
      %v2177 = vsel %vm302, %v2097, 0
      %v2180 = vsel %vm302, %v2098, 0
      %v2183 = vsel %vm302, %v2099, 0
      %v2186 = vsel %vm302, %v2100, 0
      %v2189 = vsel %vm302, %v2101, 0
      %v2192 = vsel %vm390, %v2103, 0
      %2194 = vmatprep.subr.mxu0 0.0
      %2195 = vmatpush1.msra.mxu0 %v2192
      %2196 = vmatprep.subr.mxu0 0.0
      %2197 = vmatpush1.msra.mxu0 0.0
      %2198 = vmatprep.subr.mxu0 0.0
      %2199 = vmatpush1.msra.mxu0 0.0
      %2200 = vmatprep.subr.mxu0 0.0
      %2201 = vmatpush1.msra.mxu0 0.0
      %2202 = vmatprep.subr.mxu0 0.0
      %2203 = vmatpush1.msra.mxu0 0.0
      %2204 = vmatprep.subr.mxu0 0.0
      %2205 = vmatpush1.msra.mxu0 0.0
      %2206 = vmatprep.subr.mxu0 0.0
      %2207 = vmatpush1.msra.mxu0 0.0
      %2208 = vmatprep.subr.mxu0 0.0
      %2209 = vmatpush1.msra.mxu0 0.0
      %2210 = vmatprep.subr.mxu0 0.0
      %2211 = vmatpush1.msra.mxu0 0.0
      %2212 = vmatprep.subr.mxu0 0.0
      %2213 = vmatpush1.msra.mxu0 0.0
      %2214 = vmatprep.subr.mxu0 0.0
      %2215 = vmatpush1.msra.mxu0 0.0
      %2216 = vmatprep.subr.mxu0 0.0
      %2217 = vmatpush1.msra.mxu0 0.0
      %2218 = vmatprep.subr.mxu0 0.0
      %2219 = vmatpush1.msra.mxu0 0.0
      %2220 = vmatprep.subr.mxu0 0.0
      %2221 = vmatpush1.msra.mxu0 0.0
      %2222 = vmatprep.subr.mxu0 0.0
      %2223 = vmatpush1.msra.mxu0 0.0
      %2224 = vmatprep.subr.mxu0 0.0
      %2225 = vmatpush1.msra.mxu0 0.0
      %2226 = vmatprep.subr.mxu0 0.0
      %2227 = vmatpush1.msra.mxu0 0.0
      %2228 = vmatprep.subr.mxu0 0.0
      %2229 = vmatpush1.msra.mxu0 0.0
      %2230 = vmatprep.subr.mxu0 0.0
      %2231 = vmatpush1.msra.mxu0 0.0
      %2232 = vmatprep.subr.mxu0 0.0
      %2233 = vmatpush1.msra.mxu0 0.0
      %2234 = vmatprep.subr.mxu0 0.0
      %2235 = vmatpush1.msra.mxu0 0.0
      %2236 = vmatprep.subr.mxu0 0.0
      %2237 = vmatpush1.msra.mxu0 0.0
      %2238 = vmatprep.subr.mxu0 0.0
      %2239 = vmatpush1.msra.mxu0 0.0
      %2240 = vmatprep.subr.mxu0 0.0
      %2241 = vmatpush1.msra.mxu0 0.0
      %2242 = vmatprep.subr.mxu0 0.0
      %2243 = vmatpush1.msra.mxu0 0.0
      %2244 = vmatprep.subr.mxu0 0.0
      %2245 = vmatpush1.msra.mxu0 0.0
      %2246 = vmatprep.subr.mxu0 0.0
      %2247 = vmatpush1.msra.mxu0 0.0
      %2248 = vmatprep.subr.mxu0 0.0
      %2249 = vmatpush1.msra.mxu0 0.0
      %2250 = vmatprep.subr.mxu0 0.0
      %2251 = vmatpush1.msra.mxu0 0.0
      %2252 = vmatprep.subr.mxu0 0.0
      %2253 = vmatpush1.msra.mxu0 0.0
      %2254 = vmatprep.subr.mxu0 0.0
      %2255 = vmatpush1.msra.mxu0 0.0
      %2256 = vmatprep.subr.mxu0 0.0
      %2257 = vmatpush1.msra.mxu0 0.0
      %2258 = vmatprep.mubr.f32.mxu0 0.0
      %2259 = vmatmul.mubr.f32.gmra.mrb[0].mxu0 %v2105
      %v2260 = vpop.f32.mrb[0].mxu0
      %v2261 = vadd.f32 0.0, %v2260
      %v2262 = vpop.f32.mrb[0].mxu0
      %2263 = vmatprep.mubr.f32.mxu0 0.0
      %2264 = vmatmul.mubr.f32.gmra.mrb[0].mxu0 %v2108
      %v2265 = vpop.f32.mrb[0].mxu0
      %v2266 = vadd.f32 0.0, %v2265
      %v2267 = vpop.f32.mrb[0].mxu0
      %2268 = vmatprep.mubr.f32.mxu0 0.0
      %2269 = vmatmul.mubr.f32.gmra.mrb[0].mxu0 %v2111
      %v2270 = vpop.f32.mrb[0].mxu0
      %v2271 = vadd.f32 0.0, %v2270
      %v2272 = vpop.f32.mrb[0].mxu0
      %2273 = vmatprep.mubr.f32.mxu0 0.0
      %2274 = vmatmul.mubr.f32.gmra.mrb[0].mxu0 %v2114
      %v2275 = vpop.f32.mrb[0].mxu0
      %v2276 = vadd.f32 0.0, %v2275
      %v2277 = vpop.f32.mrb[0].mxu0
      %2278 = vmatprep.mubr.f32.mxu0 0.0
      %2279 = vmatmul.mubr.f32.gmra.mrb[0].mxu0 %v2117
      %v2280 = vpop.f32.mrb[0].mxu0
      %v2281 = vadd.f32 0.0, %v2280
      %v2282 = vpop.f32.mrb[0].mxu0
      %2283 = vmatprep.mubr.f32.mxu0 0.0
      %2284 = vmatmul.mubr.f32.gmra.mrb[0].mxu0 %v2120
      %v2285 = vpop.f32.mrb[0].mxu0
      %v2286 = vadd.f32 0.0, %v2285
      %v2287 = vpop.f32.mrb[0].mxu0
      %2288 = vmatprep.mubr.f32.mxu0 0.0
      %2289 = vmatmul.mubr.f32.gmra.mrb[0].mxu0 %v2123
      %v2290 = vpop.f32.mrb[0].mxu0
      %v2291 = vadd.f32 0.0, %v2290
      %v2292 = vpop.f32.mrb[0].mxu0
      %2293 = vmatprep.mubr.f32.mxu0 0.0
      %2294 = vmatmul.mubr.f32.gmra.mrb[0].mxu0 %v2126
      %v2295 = vpop.f32.mrb[0].mxu0
      %v2296 = vadd.f32 0.0, %v2295
      %v2297 = vpop.f32.mrb[0].mxu0
      %2298 = vmatprep.mubr.f32.mxu0 0.0
      %2299 = vmatmul.mubr.f32.gmra.mrb[0].mxu0 %v2129
      %v2300 = vpop.f32.mrb[0].mxu0
      %v2301 = vadd.f32 0.0, %v2300
      %v2302 = vpop.f32.mrb[0].mxu0
      %2303 = vmatprep.mubr.f32.mxu0 0.0
      %2304 = vmatmul.mubr.f32.gmra.mrb[0].mxu0 %v2132
      %v2305 = vpop.f32.mrb[0].mxu0
      %v2306 = vadd.f32 0.0, %v2305
      %v2307 = vpop.f32.mrb[0].mxu0
      %2308 = vmatprep.mubr.f32.mxu0 0.0
      %2309 = vmatmul.mubr.f32.gmra.mrb[0].mxu0 %v2135
      %v2310 = vpop.f32.mrb[0].mxu0
      %v2311 = vadd.f32 0.0, %v2310
      %v2312 = vpop.f32.mrb[0].mxu0
      %2313 = vmatprep.mubr.f32.mxu0 0.0
      %2314 = vmatmul.mubr.f32.gmra.mrb[0].mxu0 %v2138
      %v2315 = vpop.f32.mrb[0].mxu0
      %v2316 = vadd.f32 0.0, %v2315
      %v2317 = vpop.f32.mrb[0].mxu0
      %2318 = vmatprep.mubr.f32.mxu0 0.0
      %2319 = vmatmul.mubr.f32.gmra.mrb[0].mxu0 %v2141
      %v2320 = vpop.f32.mrb[0].mxu0
      %v2321 = vadd.f32 0.0, %v2320
      %v2322 = vpop.f32.mrb[0].mxu0
      %2323 = vmatprep.mubr.f32.mxu0 0.0
      %2324 = vmatmul.mubr.f32.gmra.mrb[0].mxu0 %v2144
      %v2325 = vpop.f32.mrb[0].mxu0
      %v2326 = vadd.f32 0.0, %v2325
      %v2327 = vpop.f32.mrb[0].mxu0
      %2328 = vmatprep.mubr.f32.mxu0 0.0
      %2329 = vmatmul.mubr.f32.gmra.mrb[0].mxu0 %v2147
      %v2330 = vpop.f32.mrb[0].mxu0
      %v2331 = vadd.f32 0.0, %v2330
      %v2332 = vpop.f32.mrb[0].mxu0
      %2333 = vmatprep.mubr.f32.mxu0 0.0
      %2334 = vmatmul.mubr.f32.gmra.mrb[0].mxu0 %v2150
      %v2335 = vpop.f32.mrb[0].mxu0
      %v2336 = vadd.f32 0.0, %v2335
      %v2337 = vpop.f32.mrb[0].mxu0
      %2338 = vmatprep.mubr.f32.mxu0 0.0
      %2339 = vmatmul.mubr.f32.gmra.mrb[0].mxu0 %v2153
      %v2340 = vpop.f32.mrb[0].mxu0
      %v2341 = vadd.f32 0.0, %v2340
      %v2342 = vpop.f32.mrb[0].mxu0
      %2343 = vmatprep.mubr.f32.mxu0 0.0
      %2344 = vmatmul.mubr.f32.gmra.mrb[0].mxu0 %v2156
      %v2345 = vpop.f32.mrb[0].mxu0
      %v2346 = vadd.f32 0.0, %v2345
      %v2347 = vpop.f32.mrb[0].mxu0
      %2348 = vmatprep.mubr.f32.mxu0 0.0
      %2349 = vmatmul.mubr.f32.gmra.mrb[0].mxu0 %v2159
      %v2350 = vpop.f32.mrb[0].mxu0
      %v2351 = vadd.f32 0.0, %v2350
      %v2352 = vpop.f32.mrb[0].mxu0
      %2353 = vmatprep.mubr.f32.mxu0 0.0
      %2354 = vmatmul.mubr.f32.gmra.mrb[0].mxu0 %v2162
      %v2355 = vpop.f32.mrb[0].mxu0
      %v2356 = vadd.f32 0.0, %v2355
      %v2357 = vpop.f32.mrb[0].mxu0
      %2358 = vmatprep.mubr.f32.mxu0 0.0
      %2359 = vmatmul.mubr.f32.gmra.mrb[0].mxu0 %v2165
      %v2360 = vpop.f32.mrb[0].mxu0
      %v2361 = vadd.f32 0.0, %v2360
      %v2362 = vpop.f32.mrb[0].mxu0
      %2363 = vmatprep.mubr.f32.mxu0 0.0
      %2364 = vmatmul.mubr.f32.gmra.mrb[0].mxu0 %v2168
      %v2365 = vpop.f32.mrb[0].mxu0
      %v2366 = vadd.f32 0.0, %v2365
      %v2367 = vpop.f32.mrb[0].mxu0
      %2368 = vmatprep.mubr.f32.mxu0 0.0
      %2369 = vmatmul.mubr.f32.gmra.mrb[0].mxu0 %v2171
      %v2370 = vpop.f32.mrb[0].mxu0
      %v2371 = vadd.f32 0.0, %v2370
      %v2372 = vpop.f32.mrb[0].mxu0
      %2373 = vmatprep.mubr.f32.mxu0 0.0
      %2374 = vmatmul.mubr.f32.gmra.mrb[0].mxu0 %v2174
      %v2375 = vpop.f32.mrb[0].mxu0
      %v2376 = vadd.f32 0.0, %v2375
      %v2377 = vpop.f32.mrb[0].mxu0
      %2378 = vmatprep.mubr.f32.mxu0 0.0
      %2379 = vmatmul.mubr.f32.gmra.mrb[0].mxu0 %v2177
      %v2380 = vpop.f32.mrb[0].mxu0
      %v2381 = vadd.f32 0.0, %v2380
      %v2382 = vpop.f32.mrb[0].mxu0
      %2383 = vmatprep.mubr.f32.mxu0 0.0
      %2384 = vmatmul.mubr.f32.gmra.mrb[0].mxu0 %v2180
      %v2385 = vpop.f32.mrb[0].mxu0
      %v2386 = vadd.f32 0.0, %v2385
      %v2387 = vpop.f32.mrb[0].mxu0
      %2388 = vmatprep.mubr.f32.mxu0 0.0
      %2389 = vmatmul.mubr.f32.gmra.mrb[0].mxu0 %v2183
      %v2390 = vpop.f32.mrb[0].mxu0
      %v2391 = vadd.f32 0.0, %v2390
      %v2392 = vpop.f32.mrb[0].mxu0
      %2393 = vmatprep.mubr.f32.mxu0 0.0
      %2394 = vmatmul.mubr.f32.gmra.mrb[0].mxu0 %v2186
      %v2395 = vpop.f32.mrb[0].mxu0
      %v2396 = vadd.f32 0.0, %v2395
      %v2397 = vpop.f32.mrb[0].mxu0
      %2398 = vmatprep.mubr.f32.mxu0 0.0
      %2399 = vmatmul.mubr.f32.gmra.mrb[0].mxu0 %v2189
      %v2400 = vpop.f32.mrb[0].mxu0
      %v2401 = vadd.f32 0.0, %v2400
      %v2402 = vpop.f32.mrb[0].mxu0
      %2403 = vdwg.mxu0
      %v2404 = vadd.f32 %v2044, %v2261
      %v2405 = vadd.f32 %v2045, %v2266
      %v2406 = vadd.f32 %v2046, %v2271
      %v2407 = vadd.f32 %v2047, %v2276
      %v2408 = vadd.f32 %v2048, %v2281
      %v2409 = vadd.f32 %v2049, %v2286
      %v2410 = vadd.f32 %v2050, %v2291
      %v2411 = vadd.f32 %v2051, %v2296
      %v2412 = vadd.f32 %v2052, %v2301
      %v2413 = vadd.f32 %v2053, %v2306
      %v2414 = vadd.f32 %v2054, %v2311
      %v2415 = vadd.f32 %v2055, %v2316
      %v2416 = vadd.f32 %v2056, %v2321
      %v2417 = vadd.f32 %v2057, %v2326
      %v2418 = vadd.f32 %v2058, %v2331
      %v2419 = vadd.f32 %v2059, %v2336
      %v2420 = vadd.f32 %v2060, %v2341
      %v2421 = vadd.f32 %v2061, %v2346
      %v2422 = vadd.f32 %v2062, %v2351
      %v2423 = vadd.f32 %v2063, %v2356
      %v2424 = vadd.f32 %v2064, %v2361
      %v2425 = vadd.f32 %v2065, %v2366
      %v2426 = vadd.f32 %v2066, %v2371
      %v2427 = vadd.f32 %v2067, %v2376
      %v2428 = vadd.f32 %v2068, %v2381
      %v2429 = vadd.f32 %v2069, %v2386
      %v2430 = vadd.f32 %v2070, %v2391
      %v2431 = vadd.f32 %v2071, %v2396
      %v2432 = vadd.f32 %v2072, %v2401
      %v2433 = vld [vmem:[%s254 + $0x20] sm:$0xff]
      %v2434 = vld [vmem:[%s254 + $0x28] sm:$0xff]
      %v2435 = vld [vmem:[%s254 + $0x30] sm:$0xff]
      %v2436 = vld [vmem:[%s254 + $0x38] sm:$0xff]
      %v2437 = vld [vmem:[%s254 + $0x40] sm:$0xff]
      %v2438 = vld [vmem:[%s254 + $0x48] sm:$0xff]
      %v2439 = vld [vmem:[%s254 + $0x50] sm:$0xff]
      %v2440 = vld [vmem:[%s254 + $0x58] sm:$0xff]
      %v2441 = vld [vmem:[%s254 + $0x60] sm:$0xff]
      %v2442 = vld [vmem:[%s254 + $0x68] sm:$0xff]
      %v2443 = vld [vmem:[%s254 + $0x70] sm:$0xff]
      %v2444 = vld [vmem:[%s254 + $0x78] sm:$0xff]
      %v2445 = vld [vmem:[%s254 + $0x80] sm:$0xff]
      %v2446 = vld [vmem:[%s254 + $0x88] sm:$0xff]
      %v2447 = vld [vmem:[%s254 + $0x90] sm:$0xff]
      %v2448 = vld [vmem:[%s254 + $0x98] sm:$0xff]
      %v2449 = vld [vmem:[%s254 + $0xa0] sm:$0xff]
      %v2450 = vld [vmem:[%s254 + $0xa8] sm:$0xff]
      %v2451 = vld [vmem:[%s254 + $0xb0] sm:$0xff]
      %v2452 = vld [vmem:[%s254 + $0xb8] sm:$0xff]
      %v2453 = vld [vmem:[%s254 + $0xc0] sm:$0xff]
      %v2454 = vld [vmem:[%s254 + $0xc8] sm:$0xff]
      %v2455 = vld [vmem:[%s254 + $0xd0] sm:$0xff]
      %v2456 = vld [vmem:[%s254 + $0xd8] sm:$0xff]
      %v2457 = vld [vmem:[%s254 + $0xe0] sm:$0xff]
      %v2458 = vld [vmem:[%s254 + $0xe8] sm:$0xff]
      %v2459 = vld [vmem:[%s254 + $0xf0] sm:$0xff]
      %v2460 = vld [vmem:[%s254 + $0xf8] sm:$0xff]
      %v2461 = vld [vmem:[%s254 + $0x100] sm:$0x3]
      %s2462 = scalar_lea.vmem %s1, 24
      %v2463 = vld [vmem:[%s2462] sm:$0xf]
      %v2465 = vsel %vm302, %v2433, 0
      %v2468 = vsel %vm302, %v2434, 0
      %v2471 = vsel %vm302, %v2435, 0
      %v2474 = vsel %vm302, %v2436, 0
      %v2477 = vsel %vm302, %v2437, 0
      %v2480 = vsel %vm302, %v2438, 0
      %v2483 = vsel %vm302, %v2439, 0
      %v2486 = vsel %vm302, %v2440, 0
      %v2489 = vsel %vm302, %v2441, 0
      %v2492 = vsel %vm302, %v2442, 0
      %v2495 = vsel %vm302, %v2443, 0
      %v2498 = vsel %vm302, %v2444, 0
      %v2501 = vsel %vm302, %v2445, 0
      %v2504 = vsel %vm302, %v2446, 0
      %v2507 = vsel %vm302, %v2447, 0
      %v2510 = vsel %vm302, %v2448, 0
      %v2513 = vsel %vm302, %v2449, 0
      %v2516 = vsel %vm302, %v2450, 0
      %v2519 = vsel %vm302, %v2451, 0
      %v2522 = vsel %vm302, %v2452, 0
      %v2525 = vsel %vm302, %v2453, 0
      %v2528 = vsel %vm302, %v2454, 0
      %v2531 = vsel %vm302, %v2455, 0
      %v2534 = vsel %vm302, %v2456, 0
      %v2537 = vsel %vm302, %v2457, 0
      %v2540 = vsel %vm302, %v2458, 0
      %v2543 = vsel %vm302, %v2459, 0
      %v2546 = vsel %vm302, %v2460, 0
      %v2549 = vsel %vm302, %v2461, 0
      %v2552 = vsel %vm390, %v2463, 0
      %2554 = vmatprep.subr.mxu0 0.0
      %2555 = vmatpush1.msra.mxu0 %v2552
      %2556 = vmatprep.subr.mxu0 0.0
      %2557 = vmatpush1.msra.mxu0 0.0
      %2558 = vmatprep.subr.mxu0 0.0
      %2559 = vmatpush1.msra.mxu0 0.0
      %2560 = vmatprep.subr.mxu0 0.0
      %2561 = vmatpush1.msra.mxu0 0.0
      %2562 = vmatprep.subr.mxu0 0.0
      %2563 = vmatpush1.msra.mxu0 0.0
      %2564 = vmatprep.subr.mxu0 0.0
      %2565 = vmatpush1.msra.mxu0 0.0
      %2566 = vmatprep.subr.mxu0 0.0
      %2567 = vmatpush1.msra.mxu0 0.0
      %2568 = vmatprep.subr.mxu0 0.0
      %2569 = vmatpush1.msra.mxu0 0.0
      %2570 = vmatprep.subr.mxu0 0.0
      %2571 = vmatpush1.msra.mxu0 0.0
      %2572 = vmatprep.subr.mxu0 0.0
      %2573 = vmatpush1.msra.mxu0 0.0
      %2574 = vmatprep.subr.mxu0 0.0
      %2575 = vmatpush1.msra.mxu0 0.0
      %2576 = vmatprep.subr.mxu0 0.0
      %2577 = vmatpush1.msra.mxu0 0.0
      %2578 = vmatprep.subr.mxu0 0.0
      %2579 = vmatpush1.msra.mxu0 0.0
      %2580 = vmatprep.subr.mxu0 0.0
      %2581 = vmatpush1.msra.mxu0 0.0
      %2582 = vmatprep.subr.mxu0 0.0
      %2583 = vmatpush1.msra.mxu0 0.0
      %2584 = vmatprep.subr.mxu0 0.0
      %2585 = vmatpush1.msra.mxu0 0.0
      %2586 = vmatprep.subr.mxu0 0.0
      %2587 = vmatpush1.msra.mxu0 0.0
      %2588 = vmatprep.subr.mxu0 0.0
      %2589 = vmatpush1.msra.mxu0 0.0
      %2590 = vmatprep.subr.mxu0 0.0
      %2591 = vmatpush1.msra.mxu0 0.0
      %2592 = vmatprep.subr.mxu0 0.0
      %2593 = vmatpush1.msra.mxu0 0.0
      %2594 = vmatprep.subr.mxu0 0.0
      %2595 = vmatpush1.msra.mxu0 0.0
      %2596 = vmatprep.subr.mxu0 0.0
      %2597 = vmatpush1.msra.mxu0 0.0
      %2598 = vmatprep.subr.mxu0 0.0
      %2599 = vmatpush1.msra.mxu0 0.0
      %2600 = vmatprep.subr.mxu0 0.0
      %2601 = vmatpush1.msra.mxu0 0.0
      %2602 = vmatprep.subr.mxu0 0.0
      %2603 = vmatpush1.msra.mxu0 0.0
      %2604 = vmatprep.subr.mxu0 0.0
      %2605 = vmatpush1.msra.mxu0 0.0
      %2606 = vmatprep.subr.mxu0 0.0
      %2607 = vmatpush1.msra.mxu0 0.0
      %2608 = vmatprep.subr.mxu0 0.0
      %2609 = vmatpush1.msra.mxu0 0.0
      %2610 = vmatprep.subr.mxu0 0.0
      %2611 = vmatpush1.msra.mxu0 0.0
      %2612 = vmatprep.subr.mxu0 0.0
      %2613 = vmatpush1.msra.mxu0 0.0
      %2614 = vmatprep.subr.mxu0 0.0
      %2615 = vmatpush1.msra.mxu0 0.0
      %2616 = vmatprep.subr.mxu0 0.0
      %2617 = vmatpush1.msra.mxu0 0.0
      %2618 = vmatprep.mubr.f32.mxu0 0.0
      %2619 = vmatmul.mubr.f32.gmra.mrb[0].mxu0 %v2465
      %v2620 = vpop.f32.mrb[0].mxu0
      %v2621 = vadd.f32 0.0, %v2620
      %v2622 = vpop.f32.mrb[0].mxu0
      %2623 = vmatprep.mubr.f32.mxu0 0.0
      %2624 = vmatmul.mubr.f32.gmra.mrb[0].mxu0 %v2468
      %v2625 = vpop.f32.mrb[0].mxu0
      %v2626 = vadd.f32 0.0, %v2625
      %v2627 = vpop.f32.mrb[0].mxu0
      %2628 = vmatprep.mubr.f32.mxu0 0.0
      %2629 = vmatmul.mubr.f32.gmra.mrb[0].mxu0 %v2471
      %v2630 = vpop.f32.mrb[0].mxu0
      %v2631 = vadd.f32 0.0, %v2630
      %v2632 = vpop.f32.mrb[0].mxu0
      %2633 = vmatprep.mubr.f32.mxu0 0.0
      %2634 = vmatmul.mubr.f32.gmra.mrb[0].mxu0 %v2474
      %v2635 = vpop.f32.mrb[0].mxu0
      %v2636 = vadd.f32 0.0, %v2635
      %v2637 = vpop.f32.mrb[0].mxu0
      %2638 = vmatprep.mubr.f32.mxu0 0.0
      %2639 = vmatmul.mubr.f32.gmra.mrb[0].mxu0 %v2477
      %v2640 = vpop.f32.mrb[0].mxu0
      %v2641 = vadd.f32 0.0, %v2640
      %v2642 = vpop.f32.mrb[0].mxu0
      %2643 = vmatprep.mubr.f32.mxu0 0.0
      %2644 = vmatmul.mubr.f32.gmra.mrb[0].mxu0 %v2480
      %v2645 = vpop.f32.mrb[0].mxu0
      %v2646 = vadd.f32 0.0, %v2645
      %v2647 = vpop.f32.mrb[0].mxu0
      %2648 = vmatprep.mubr.f32.mxu0 0.0
      %2649 = vmatmul.mubr.f32.gmra.mrb[0].mxu0 %v2483
      %v2650 = vpop.f32.mrb[0].mxu0
      %v2651 = vadd.f32 0.0, %v2650
      %v2652 = vpop.f32.mrb[0].mxu0
      %2653 = vmatprep.mubr.f32.mxu0 0.0
      %2654 = vmatmul.mubr.f32.gmra.mrb[0].mxu0 %v2486
      %v2655 = vpop.f32.mrb[0].mxu0
      %v2656 = vadd.f32 0.0, %v2655
      %v2657 = vpop.f32.mrb[0].mxu0
      %2658 = vmatprep.mubr.f32.mxu0 0.0
      %2659 = vmatmul.mubr.f32.gmra.mrb[0].mxu0 %v2489
      %v2660 = vpop.f32.mrb[0].mxu0
      %v2661 = vadd.f32 0.0, %v2660
      %v2662 = vpop.f32.mrb[0].mxu0
      %2663 = vmatprep.mubr.f32.mxu0 0.0
      %2664 = vmatmul.mubr.f32.gmra.mrb[0].mxu0 %v2492
      %v2665 = vpop.f32.mrb[0].mxu0
      %v2666 = vadd.f32 0.0, %v2665
      %v2667 = vpop.f32.mrb[0].mxu0
      %2668 = vmatprep.mubr.f32.mxu0 0.0
      %2669 = vmatmul.mubr.f32.gmra.mrb[0].mxu0 %v2495
      %v2670 = vpop.f32.mrb[0].mxu0
      %v2671 = vadd.f32 0.0, %v2670
      %v2672 = vpop.f32.mrb[0].mxu0
      %2673 = vmatprep.mubr.f32.mxu0 0.0
      %2674 = vmatmul.mubr.f32.gmra.mrb[0].mxu0 %v2498
      %v2675 = vpop.f32.mrb[0].mxu0
      %v2676 = vadd.f32 0.0, %v2675
      %v2677 = vpop.f32.mrb[0].mxu0
      %2678 = vmatprep.mubr.f32.mxu0 0.0
      %2679 = vmatmul.mubr.f32.gmra.mrb[0].mxu0 %v2501
      %v2680 = vpop.f32.mrb[0].mxu0
      %v2681 = vadd.f32 0.0, %v2680
      %v2682 = vpop.f32.mrb[0].mxu0
      %2683 = vmatprep.mubr.f32.mxu0 0.0
      %2684 = vmatmul.mubr.f32.gmra.mrb[0].mxu0 %v2504
      %v2685 = vpop.f32.mrb[0].mxu0
      %v2686 = vadd.f32 0.0, %v2685
      %v2687 = vpop.f32.mrb[0].mxu0
      %2688 = vmatprep.mubr.f32.mxu0 0.0
      %2689 = vmatmul.mubr.f32.gmra.mrb[0].mxu0 %v2507
      %v2690 = vpop.f32.mrb[0].mxu0
      %v2691 = vadd.f32 0.0, %v2690
      %v2692 = vpop.f32.mrb[0].mxu0
      %2693 = vmatprep.mubr.f32.mxu0 0.0
      %2694 = vmatmul.mubr.f32.gmra.mrb[0].mxu0 %v2510
      %v2695 = vpop.f32.mrb[0].mxu0
      %v2696 = vadd.f32 0.0, %v2695
      %v2697 = vpop.f32.mrb[0].mxu0
      %2698 = vmatprep.mubr.f32.mxu0 0.0
      %2699 = vmatmul.mubr.f32.gmra.mrb[0].mxu0 %v2513
      %v2700 = vpop.f32.mrb[0].mxu0
      %v2701 = vadd.f32 0.0, %v2700
      %v2702 = vpop.f32.mrb[0].mxu0
      %2703 = vmatprep.mubr.f32.mxu0 0.0
      %2704 = vmatmul.mubr.f32.gmra.mrb[0].mxu0 %v2516
      %v2705 = vpop.f32.mrb[0].mxu0
      %v2706 = vadd.f32 0.0, %v2705
      %v2707 = vpop.f32.mrb[0].mxu0
      %2708 = vmatprep.mubr.f32.mxu0 0.0
      %2709 = vmatmul.mubr.f32.gmra.mrb[0].mxu0 %v2519
      %v2710 = vpop.f32.mrb[0].mxu0
      %v2711 = vadd.f32 0.0, %v2710
      %v2712 = vpop.f32.mrb[0].mxu0
      %2713 = vmatprep.mubr.f32.mxu0 0.0
      %2714 = vmatmul.mubr.f32.gmra.mrb[0].mxu0 %v2522
      %v2715 = vpop.f32.mrb[0].mxu0
      %v2716 = vadd.f32 0.0, %v2715
      %v2717 = vpop.f32.mrb[0].mxu0
      %2718 = vmatprep.mubr.f32.mxu0 0.0
      %2719 = vmatmul.mubr.f32.gmra.mrb[0].mxu0 %v2525
      %v2720 = vpop.f32.mrb[0].mxu0
      %v2721 = vadd.f32 0.0, %v2720
      %v2722 = vpop.f32.mrb[0].mxu0
      %2723 = vmatprep.mubr.f32.mxu0 0.0
      %2724 = vmatmul.mubr.f32.gmra.mrb[0].mxu0 %v2528
      %v2725 = vpop.f32.mrb[0].mxu0
      %v2726 = vadd.f32 0.0, %v2725
      %v2727 = vpop.f32.mrb[0].mxu0
      %2728 = vmatprep.mubr.f32.mxu0 0.0
      %2729 = vmatmul.mubr.f32.gmra.mrb[0].mxu0 %v2531
      %v2730 = vpop.f32.mrb[0].mxu0
      %v2731 = vadd.f32 0.0, %v2730
      %v2732 = vpop.f32.mrb[0].mxu0
      %2733 = vmatprep.mubr.f32.mxu0 0.0
      %2734 = vmatmul.mubr.f32.gmra.mrb[0].mxu0 %v2534
      %v2735 = vpop.f32.mrb[0].mxu0
      %v2736 = vadd.f32 0.0, %v2735
      %v2737 = vpop.f32.mrb[0].mxu0
      %2738 = vmatprep.mubr.f32.mxu0 0.0
      %2739 = vmatmul.mubr.f32.gmra.mrb[0].mxu0 %v2537
      %v2740 = vpop.f32.mrb[0].mxu0
      %v2741 = vadd.f32 0.0, %v2740
      %v2742 = vpop.f32.mrb[0].mxu0
      %2743 = vmatprep.mubr.f32.mxu0 0.0
      %2744 = vmatmul.mubr.f32.gmra.mrb[0].mxu0 %v2540
      %v2745 = vpop.f32.mrb[0].mxu0
      %v2746 = vadd.f32 0.0, %v2745
      %v2747 = vpop.f32.mrb[0].mxu0
      %2748 = vmatprep.mubr.f32.mxu0 0.0
      %2749 = vmatmul.mubr.f32.gmra.mrb[0].mxu0 %v2543
      %v2750 = vpop.f32.mrb[0].mxu0
      %v2751 = vadd.f32 0.0, %v2750
      %v2752 = vpop.f32.mrb[0].mxu0
      %2753 = vmatprep.mubr.f32.mxu0 0.0
      %2754 = vmatmul.mubr.f32.gmra.mrb[0].mxu0 %v2546
      %v2755 = vpop.f32.mrb[0].mxu0
      %v2756 = vadd.f32 0.0, %v2755
      %v2757 = vpop.f32.mrb[0].mxu0
      %2758 = vmatprep.mubr.f32.mxu0 0.0
      %2759 = vmatmul.mubr.f32.gmra.mrb[0].mxu0 %v2549
      %v2760 = vpop.f32.mrb[0].mxu0
      %v2761 = vadd.f32 0.0, %v2760
      %v2762 = vpop.f32.mrb[0].mxu0
      %2763 = vdwg.mxu0
      %v2764 = vadd.f32 %v2404, %v2621
      %v2765 = vadd.f32 %v2405, %v2626
      %v2766 = vadd.f32 %v2406, %v2631
      %v2767 = vadd.f32 %v2407, %v2636
      %v2768 = vadd.f32 %v2408, %v2641
      %v2769 = vadd.f32 %v2409, %v2646
      %v2770 = vadd.f32 %v2410, %v2651
      %v2771 = vadd.f32 %v2411, %v2656
      %v2772 = vadd.f32 %v2412, %v2661
      %v2773 = vadd.f32 %v2413, %v2666
      %v2774 = vadd.f32 %v2414, %v2671
      %v2775 = vadd.f32 %v2415, %v2676
      %v2776 = vadd.f32 %v2416, %v2681
      %v2777 = vadd.f32 %v2417, %v2686
      %v2778 = vadd.f32 %v2418, %v2691
      %v2779 = vadd.f32 %v2419, %v2696
      %v2780 = vadd.f32 %v2420, %v2701
      %v2781 = vadd.f32 %v2421, %v2706
      %v2782 = vadd.f32 %v2422, %v2711
      %v2783 = vadd.f32 %v2423, %v2716
      %v2784 = vadd.f32 %v2424, %v2721
      %v2785 = vadd.f32 %v2425, %v2726
      %v2786 = vadd.f32 %v2426, %v2731
      %v2787 = vadd.f32 %v2427, %v2736
      %v2788 = vadd.f32 %v2428, %v2741
      %v2789 = vadd.f32 %v2429, %v2746
      %v2790 = vadd.f32 %v2430, %v2751
      %v2791 = vadd.f32 %v2431, %v2756
      %v2792 = vadd.f32 %v2432, %v2761
      %v2793 = vld [vmem:[%s254 + $0x21] sm:$0xff]
      %v2794 = vld [vmem:[%s254 + $0x29] sm:$0xff]
      %v2795 = vld [vmem:[%s254 + $0x31] sm:$0xff]
      %v2796 = vld [vmem:[%s254 + $0x39] sm:$0xff]
      %v2797 = vld [vmem:[%s254 + $0x41] sm:$0xff]
      %v2798 = vld [vmem:[%s254 + $0x49] sm:$0xff]
      %v2799 = vld [vmem:[%s254 + $0x51] sm:$0xff]
      %v2800 = vld [vmem:[%s254 + $0x59] sm:$0xff]
      %v2801 = vld [vmem:[%s254 + $0x61] sm:$0xff]
      %v2802 = vld [vmem:[%s254 + $0x69] sm:$0xff]
      %v2803 = vld [vmem:[%s254 + $0x71] sm:$0xff]
      %v2804 = vld [vmem:[%s254 + $0x79] sm:$0xff]
      %v2805 = vld [vmem:[%s254 + $0x81] sm:$0xff]
      %v2806 = vld [vmem:[%s254 + $0x89] sm:$0xff]
      %v2807 = vld [vmem:[%s254 + $0x91] sm:$0xff]
      %v2808 = vld [vmem:[%s254 + $0x99] sm:$0xff]
      %v2809 = vld [vmem:[%s254 + $0xa1] sm:$0xff]
      %v2810 = vld [vmem:[%s254 + $0xa9] sm:$0xff]
      %v2811 = vld [vmem:[%s254 + $0xb1] sm:$0xff]
      %v2812 = vld [vmem:[%s254 + $0xb9] sm:$0xff]
      %v2813 = vld [vmem:[%s254 + $0xc1] sm:$0xff]
      %v2814 = vld [vmem:[%s254 + $0xc9] sm:$0xff]
      %v2815 = vld [vmem:[%s254 + $0xd1] sm:$0xff]
      %v2816 = vld [vmem:[%s254 + $0xd9] sm:$0xff]
      %v2817 = vld [vmem:[%s254 + $0xe1] sm:$0xff]
      %v2818 = vld [vmem:[%s254 + $0xe9] sm:$0xff]
      %v2819 = vld [vmem:[%s254 + $0xf1] sm:$0xff]
      %v2820 = vld [vmem:[%s254 + $0xf9] sm:$0xff]
      %v2821 = vld [vmem:[%s254 + $0x101] sm:$0x3]
      %s2822 = scalar_lea.vmem %s1, 28
      %v2823 = vld [vmem:[%s2822] sm:$0xf]
      %v2825 = vsel %vm302, %v2793, 0
      %v2828 = vsel %vm302, %v2794, 0
      %v2831 = vsel %vm302, %v2795, 0
      %v2834 = vsel %vm302, %v2796, 0
      %v2837 = vsel %vm302, %v2797, 0
      %v2840 = vsel %vm302, %v2798, 0
      %v2843 = vsel %vm302, %v2799, 0
      %v2846 = vsel %vm302, %v2800, 0
      %v2849 = vsel %vm302, %v2801, 0
      %v2852 = vsel %vm302, %v2802, 0
      %v2855 = vsel %vm302, %v2803, 0
      %v2858 = vsel %vm302, %v2804, 0
      %v2861 = vsel %vm302, %v2805, 0
      %v2864 = vsel %vm302, %v2806, 0
      %v2867 = vsel %vm302, %v2807, 0
      %v2870 = vsel %vm302, %v2808, 0
      %v2873 = vsel %vm302, %v2809, 0
      %v2876 = vsel %vm302, %v2810, 0
      %v2879 = vsel %vm302, %v2811, 0
      %v2882 = vsel %vm302, %v2812, 0
      %v2885 = vsel %vm302, %v2813, 0
      %v2888 = vsel %vm302, %v2814, 0
      %v2891 = vsel %vm302, %v2815, 0
      %v2894 = vsel %vm302, %v2816, 0
      %v2897 = vsel %vm302, %v2817, 0
      %v2900 = vsel %vm302, %v2818, 0
      %v2903 = vsel %vm302, %v2819, 0
      %v2906 = vsel %vm302, %v2820, 0
      %v2909 = vsel %vm302, %v2821, 0
      %v2912 = vsel %vm390, %v2823, 0
      %2914 = vmatprep.subr.mxu0 0.0
      %2915 = vmatpush1.msra.mxu0 %v2912
      %2916 = vmatprep.subr.mxu0 0.0
      %2917 = vmatpush1.msra.mxu0 0.0
      %2918 = vmatprep.subr.mxu0 0.0
      %2919 = vmatpush1.msra.mxu0 0.0
      %2920 = vmatprep.subr.mxu0 0.0
      %2921 = vmatpush1.msra.mxu0 0.0
      %2922 = vmatprep.subr.mxu0 0.0
      %2923 = vmatpush1.msra.mxu0 0.0
      %2924 = vmatprep.subr.mxu0 0.0
      %2925 = vmatpush1.msra.mxu0 0.0
      %2926 = vmatprep.subr.mxu0 0.0
      %2927 = vmatpush1.msra.mxu0 0.0
      %2928 = vmatprep.subr.mxu0 0.0
      %2929 = vmatpush1.msra.mxu0 0.0
      %2930 = vmatprep.subr.mxu0 0.0
      %2931 = vmatpush1.msra.mxu0 0.0
      %2932 = vmatprep.subr.mxu0 0.0
      %2933 = vmatpush1.msra.mxu0 0.0
      %2934 = vmatprep.subr.mxu0 0.0
      %2935 = vmatpush1.msra.mxu0 0.0
      %2936 = vmatprep.subr.mxu0 0.0
      %2937 = vmatpush1.msra.mxu0 0.0
      %2938 = vmatprep.subr.mxu0 0.0
      %2939 = vmatpush1.msra.mxu0 0.0
      %2940 = vmatprep.subr.mxu0 0.0
      %2941 = vmatpush1.msra.mxu0 0.0
      %2942 = vmatprep.subr.mxu0 0.0
      %2943 = vmatpush1.msra.mxu0 0.0
      %2944 = vmatprep.subr.mxu0 0.0
      %2945 = vmatpush1.msra.mxu0 0.0
      %2946 = vmatprep.subr.mxu0 0.0
      %2947 = vmatpush1.msra.mxu0 0.0
      %2948 = vmatprep.subr.mxu0 0.0
      %2949 = vmatpush1.msra.mxu0 0.0
      %2950 = vmatprep.subr.mxu0 0.0
      %2951 = vmatpush1.msra.mxu0 0.0
      %2952 = vmatprep.subr.mxu0 0.0
      %2953 = vmatpush1.msra.mxu0 0.0
      %2954 = vmatprep.subr.mxu0 0.0
      %2955 = vmatpush1.msra.mxu0 0.0
      %2956 = vmatprep.subr.mxu0 0.0
      %2957 = vmatpush1.msra.mxu0 0.0
      %2958 = vmatprep.subr.mxu0 0.0
      %2959 = vmatpush1.msra.mxu0 0.0
      %2960 = vmatprep.subr.mxu0 0.0
      %2961 = vmatpush1.msra.mxu0 0.0
      %2962 = vmatprep.subr.mxu0 0.0
      %2963 = vmatpush1.msra.mxu0 0.0
      %2964 = vmatprep.subr.mxu0 0.0
      %2965 = vmatpush1.msra.mxu0 0.0
      %2966 = vmatprep.subr.mxu0 0.0
      %2967 = vmatpush1.msra.mxu0 0.0
      %2968 = vmatprep.subr.mxu0 0.0
      %2969 = vmatpush1.msra.mxu0 0.0
      %2970 = vmatprep.subr.mxu0 0.0
      %2971 = vmatpush1.msra.mxu0 0.0
      %2972 = vmatprep.subr.mxu0 0.0
      %2973 = vmatpush1.msra.mxu0 0.0
      %2974 = vmatprep.subr.mxu0 0.0
      %2975 = vmatpush1.msra.mxu0 0.0
      %2976 = vmatprep.subr.mxu0 0.0
      %2977 = vmatpush1.msra.mxu0 0.0
      %2978 = vmatprep.mubr.f32.mxu0 0.0
      %2979 = vmatmul.mubr.f32.gmra.mrb[0].mxu0 %v2825
      %v2980 = vpop.f32.mrb[0].mxu0
      %v2981 = vadd.f32 0.0, %v2980
      %v2982 = vpop.f32.mrb[0].mxu0
      %2983 = vmatprep.mubr.f32.mxu0 0.0
      %2984 = vmatmul.mubr.f32.gmra.mrb[0].mxu0 %v2828
      %v2985 = vpop.f32.mrb[0].mxu0
      %v2986 = vadd.f32 0.0, %v2985
      %v2987 = vpop.f32.mrb[0].mxu0
      %2988 = vmatprep.mubr.f32.mxu0 0.0
      %2989 = vmatmul.mubr.f32.gmra.mrb[0].mxu0 %v2831
      %v2990 = vpop.f32.mrb[0].mxu0
      %v2991 = vadd.f32 0.0, %v2990
      %v2992 = vpop.f32.mrb[0].mxu0
      %2993 = vmatprep.mubr.f32.mxu0 0.0
      %2994 = vmatmul.mubr.f32.gmra.mrb[0].mxu0 %v2834
      %v2995 = vpop.f32.mrb[0].mxu0
      %v2996 = vadd.f32 0.0, %v2995
      %v2997 = vpop.f32.mrb[0].mxu0
      %2998 = vmatprep.mubr.f32.mxu0 0.0
      %2999 = vmatmul.mubr.f32.gmra.mrb[0].mxu0 %v2837
      %v3000 = vpop.f32.mrb[0].mxu0
      %v3001 = vadd.f32 0.0, %v3000
      %v3002 = vpop.f32.mrb[0].mxu0
      %3003 = vmatprep.mubr.f32.mxu0 0.0
      %3004 = vmatmul.mubr.f32.gmra.mrb[0].mxu0 %v2840
      %v3005 = vpop.f32.mrb[0].mxu0
      %v3006 = vadd.f32 0.0, %v3005
      %v3007 = vpop.f32.mrb[0].mxu0
      %3008 = vmatprep.mubr.f32.mxu0 0.0
      %3009 = vmatmul.mubr.f32.gmra.mrb[0].mxu0 %v2843
      %v3010 = vpop.f32.mrb[0].mxu0
      %v3011 = vadd.f32 0.0, %v3010
      %v3012 = vpop.f32.mrb[0].mxu0
      %3013 = vmatprep.mubr.f32.mxu0 0.0
      %3014 = vmatmul.mubr.f32.gmra.mrb[0].mxu0 %v2846
      %v3015 = vpop.f32.mrb[0].mxu0
      %v3016 = vadd.f32 0.0, %v3015
      %v3017 = vpop.f32.mrb[0].mxu0
      %3018 = vmatprep.mubr.f32.mxu0 0.0
      %3019 = vmatmul.mubr.f32.gmra.mrb[0].mxu0 %v2849
      %v3020 = vpop.f32.mrb[0].mxu0
      %v3021 = vadd.f32 0.0, %v3020
      %v3022 = vpop.f32.mrb[0].mxu0
      %3023 = vmatprep.mubr.f32.mxu0 0.0
      %3024 = vmatmul.mubr.f32.gmra.mrb[0].mxu0 %v2852
      %v3025 = vpop.f32.mrb[0].mxu0
      %v3026 = vadd.f32 0.0, %v3025
      %v3027 = vpop.f32.mrb[0].mxu0
      %3028 = vmatprep.mubr.f32.mxu0 0.0
      %3029 = vmatmul.mubr.f32.gmra.mrb[0].mxu0 %v2855
      %v3030 = vpop.f32.mrb[0].mxu0
      %v3031 = vadd.f32 0.0, %v3030
      %v3032 = vpop.f32.mrb[0].mxu0
      %3033 = vmatprep.mubr.f32.mxu0 0.0
      %3034 = vmatmul.mubr.f32.gmra.mrb[0].mxu0 %v2858
      %v3035 = vpop.f32.mrb[0].mxu0
      %v3036 = vadd.f32 0.0, %v3035
      %v3037 = vpop.f32.mrb[0].mxu0
      %3038 = vmatprep.mubr.f32.mxu0 0.0
      %3039 = vmatmul.mubr.f32.gmra.mrb[0].mxu0 %v2861
      %v3040 = vpop.f32.mrb[0].mxu0
      %v3041 = vadd.f32 0.0, %v3040
      %v3042 = vpop.f32.mrb[0].mxu0
      %3043 = vmatprep.mubr.f32.mxu0 0.0
      %3044 = vmatmul.mubr.f32.gmra.mrb[0].mxu0 %v2864
      %v3045 = vpop.f32.mrb[0].mxu0
      %v3046 = vadd.f32 0.0, %v3045
      %v3047 = vpop.f32.mrb[0].mxu0
      %3048 = vmatprep.mubr.f32.mxu0 0.0
      %3049 = vmatmul.mubr.f32.gmra.mrb[0].mxu0 %v2867
      %v3050 = vpop.f32.mrb[0].mxu0
      %v3051 = vadd.f32 0.0, %v3050
      %v3052 = vpop.f32.mrb[0].mxu0
      %3053 = vmatprep.mubr.f32.mxu0 0.0
      %3054 = vmatmul.mubr.f32.gmra.mrb[0].mxu0 %v2870
      %v3055 = vpop.f32.mrb[0].mxu0
      %v3056 = vadd.f32 0.0, %v3055
      %v3057 = vpop.f32.mrb[0].mxu0
      %3058 = vmatprep.mubr.f32.mxu0 0.0
      %3059 = vmatmul.mubr.f32.gmra.mrb[0].mxu0 %v2873
      %v3060 = vpop.f32.mrb[0].mxu0
      %v3061 = vadd.f32 0.0, %v3060
      %v3062 = vpop.f32.mrb[0].mxu0
      %3063 = vmatprep.mubr.f32.mxu0 0.0
      %3064 = vmatmul.mubr.f32.gmra.mrb[0].mxu0 %v2876
      %v3065 = vpop.f32.mrb[0].mxu0
      %v3066 = vadd.f32 0.0, %v3065
      %v3067 = vpop.f32.mrb[0].mxu0
      %3068 = vmatprep.mubr.f32.mxu0 0.0
      %3069 = vmatmul.mubr.f32.gmra.mrb[0].mxu0 %v2879
      %v3070 = vpop.f32.mrb[0].mxu0
      %v3071 = vadd.f32 0.0, %v3070
      %v3072 = vpop.f32.mrb[0].mxu0
      %3073 = vmatprep.mubr.f32.mxu0 0.0
      %3074 = vmatmul.mubr.f32.gmra.mrb[0].mxu0 %v2882
      %v3075 = vpop.f32.mrb[0].mxu0
      %v3076 = vadd.f32 0.0, %v3075
      %v3077 = vpop.f32.mrb[0].mxu0
      %3078 = vmatprep.mubr.f32.mxu0 0.0
      %3079 = vmatmul.mubr.f32.gmra.mrb[0].mxu0 %v2885
      %v3080 = vpop.f32.mrb[0].mxu0
      %v3081 = vadd.f32 0.0, %v3080
      %v3082 = vpop.f32.mrb[0].mxu0
      %3083 = vmatprep.mubr.f32.mxu0 0.0
      %3084 = vmatmul.mubr.f32.gmra.mrb[0].mxu0 %v2888
      %v3085 = vpop.f32.mrb[0].mxu0
      %v3086 = vadd.f32 0.0, %v3085
      %v3087 = vpop.f32.mrb[0].mxu0
      %3088 = vmatprep.mubr.f32.mxu0 0.0
      %3089 = vmatmul.mubr.f32.gmra.mrb[0].mxu0 %v2891
      %v3090 = vpop.f32.mrb[0].mxu0
      %v3091 = vadd.f32 0.0, %v3090
      %v3092 = vpop.f32.mrb[0].mxu0
      %3093 = vmatprep.mubr.f32.mxu0 0.0
      %3094 = vmatmul.mubr.f32.gmra.mrb[0].mxu0 %v2894
      %v3095 = vpop.f32.mrb[0].mxu0
      %v3096 = vadd.f32 0.0, %v3095
      %v3097 = vpop.f32.mrb[0].mxu0
      %3098 = vmatprep.mubr.f32.mxu0 0.0
      %3099 = vmatmul.mubr.f32.gmra.mrb[0].mxu0 %v2897
      %v3100 = vpop.f32.mrb[0].mxu0
      %v3101 = vadd.f32 0.0, %v3100
      %v3102 = vpop.f32.mrb[0].mxu0
      %3103 = vmatprep.mubr.f32.mxu0 0.0
      %3104 = vmatmul.mubr.f32.gmra.mrb[0].mxu0 %v2900
      %v3105 = vpop.f32.mrb[0].mxu0
      %v3106 = vadd.f32 0.0, %v3105
      %v3107 = vpop.f32.mrb[0].mxu0
      %3108 = vmatprep.mubr.f32.mxu0 0.0
      %3109 = vmatmul.mubr.f32.gmra.mrb[0].mxu0 %v2903
      %v3110 = vpop.f32.mrb[0].mxu0
      %v3111 = vadd.f32 0.0, %v3110
      %v3112 = vpop.f32.mrb[0].mxu0
      %3113 = vmatprep.mubr.f32.mxu0 0.0
      %3114 = vmatmul.mubr.f32.gmra.mrb[0].mxu0 %v2906
      %v3115 = vpop.f32.mrb[0].mxu0
      %v3116 = vadd.f32 0.0, %v3115
      %v3117 = vpop.f32.mrb[0].mxu0
      %3118 = vmatprep.mubr.f32.mxu0 0.0
      %3119 = vmatmul.mubr.f32.gmra.mrb[0].mxu0 %v2909
      %v3120 = vpop.f32.mrb[0].mxu0
      %v3121 = vadd.f32 0.0, %v3120
      %v3122 = vpop.f32.mrb[0].mxu0
      %3123 = vdwg.mxu0
      %v3124 = vadd.f32 %v2764, %v2981
      %v3125 = vadd.f32 %v2765, %v2986
      %v3126 = vadd.f32 %v2766, %v2991
      %v3127 = vadd.f32 %v2767, %v2996
      %v3128 = vadd.f32 %v2768, %v3001
      %v3129 = vadd.f32 %v2769, %v3006
      %v3130 = vadd.f32 %v2770, %v3011
      %v3131 = vadd.f32 %v2771, %v3016
      %v3132 = vadd.f32 %v2772, %v3021
      %v3133 = vadd.f32 %v2773, %v3026
      %v3134 = vadd.f32 %v2774, %v3031
      %v3135 = vadd.f32 %v2775, %v3036
      %v3136 = vadd.f32 %v2776, %v3041
      %v3137 = vadd.f32 %v2777, %v3046
      %v3138 = vadd.f32 %v2778, %v3051
      %v3139 = vadd.f32 %v2779, %v3056
      %v3140 = vadd.f32 %v2780, %v3061
      %v3141 = vadd.f32 %v2781, %v3066
      %v3142 = vadd.f32 %v2782, %v3071
      %v3143 = vadd.f32 %v2783, %v3076
      %v3144 = vadd.f32 %v2784, %v3081
      %v3145 = vadd.f32 %v2785, %v3086
      %v3146 = vadd.f32 %v2786, %v3091
      %v3147 = vadd.f32 %v2787, %v3096
      %v3148 = vadd.f32 %v2788, %v3101
      %v3149 = vadd.f32 %v2789, %v3106
      %v3150 = vadd.f32 %v2790, %v3111
      %v3151 = vadd.f32 %v2791, %v3116
      %v3152 = vadd.f32 %v2792, %v3121
      %v3153 = vld [vmem:[%s254 + $0x22] sm:$0xff]
      %v3154 = vld [vmem:[%s254 + $0x2a] sm:$0xff]
      %v3155 = vld [vmem:[%s254 + $0x32] sm:$0xff]
      %v3156 = vld [vmem:[%s254 + $0x3a] sm:$0xff]
      %v3157 = vld [vmem:[%s254 + $0x42] sm:$0xff]
      %v3158 = vld [vmem:[%s254 + $0x4a] sm:$0xff]
      %v3159 = vld [vmem:[%s254 + $0x52] sm:$0xff]
      %v3160 = vld [vmem:[%s254 + $0x5a] sm:$0xff]
      %v3161 = vld [vmem:[%s254 + $0x62] sm:$0xff]
      %v3162 = vld [vmem:[%s254 + $0x6a] sm:$0xff]
      %v3163 = vld [vmem:[%s254 + $0x72] sm:$0xff]
      %v3164 = vld [vmem:[%s254 + $0x7a] sm:$0xff]
      %v3165 = vld [vmem:[%s254 + $0x82] sm:$0xff]
      %v3166 = vld [vmem:[%s254 + $0x8a] sm:$0xff]
      %v3167 = vld [vmem:[%s254 + $0x92] sm:$0xff]
      %v3168 = vld [vmem:[%s254 + $0x9a] sm:$0xff]
      %v3169 = vld [vmem:[%s254 + $0xa2] sm:$0xff]
      %v3170 = vld [vmem:[%s254 + $0xaa] sm:$0xff]
      %v3171 = vld [vmem:[%s254 + $0xb2] sm:$0xff]
      %v3172 = vld [vmem:[%s254 + $0xba] sm:$0xff]
      %v3173 = vld [vmem:[%s254 + $0xc2] sm:$0xff]
      %v3174 = vld [vmem:[%s254 + $0xca] sm:$0xff]
      %v3175 = vld [vmem:[%s254 + $0xd2] sm:$0xff]
      %v3176 = vld [vmem:[%s254 + $0xda] sm:$0xff]
      %v3177 = vld [vmem:[%s254 + $0xe2] sm:$0xff]
      %v3178 = vld [vmem:[%s254 + $0xea] sm:$0xff]
      %v3179 = vld [vmem:[%s254 + $0xf2] sm:$0xff]
      %v3180 = vld [vmem:[%s254 + $0xfa] sm:$0xff]
      %v3181 = vld [vmem:[%s254 + $0x102] sm:$0x3]
      %s3182 = scalar_lea.vmem %s1, 32
      %v3183 = vld [vmem:[%s3182] sm:$0xf]
      %v3185 = vsel %vm302, %v3153, 0
      %v3188 = vsel %vm302, %v3154, 0
      %v3191 = vsel %vm302, %v3155, 0
      %v3194 = vsel %vm302, %v3156, 0
      %v3197 = vsel %vm302, %v3157, 0
      %v3200 = vsel %vm302, %v3158, 0
      %v3203 = vsel %vm302, %v3159, 0
      %v3206 = vsel %vm302, %v3160, 0
      %v3209 = vsel %vm302, %v3161, 0
      %v3212 = vsel %vm302, %v3162, 0
      %v3215 = vsel %vm302, %v3163, 0
      %v3218 = vsel %vm302, %v3164, 0
      %v3221 = vsel %vm302, %v3165, 0
      %v3224 = vsel %vm302, %v3166, 0
      %v3227 = vsel %vm302, %v3167, 0
      %v3230 = vsel %vm302, %v3168, 0
      %v3233 = vsel %vm302, %v3169, 0
      %v3236 = vsel %vm302, %v3170, 0
      %v3239 = vsel %vm302, %v3171, 0
      %v3242 = vsel %vm302, %v3172, 0
      %v3245 = vsel %vm302, %v3173, 0
      %v3248 = vsel %vm302, %v3174, 0
      %v3251 = vsel %vm302, %v3175, 0
      %v3254 = vsel %vm302, %v3176, 0
      %v3257 = vsel %vm302, %v3177, 0
      %v3260 = vsel %vm302, %v3178, 0
      %v3263 = vsel %vm302, %v3179, 0
      %v3266 = vsel %vm302, %v3180, 0
      %v3269 = vsel %vm302, %v3181, 0
      %v3272 = vsel %vm390, %v3183, 0
      %3274 = vmatprep.subr.mxu0 0.0
      %3275 = vmatpush1.msra.mxu0 %v3272
      %3276 = vmatprep.subr.mxu0 0.0
      %3277 = vmatpush1.msra.mxu0 0.0
      %3278 = vmatprep.subr.mxu0 0.0
      %3279 = vmatpush1.msra.mxu0 0.0
      %3280 = vmatprep.subr.mxu0 0.0
      %3281 = vmatpush1.msra.mxu0 0.0
      %3282 = vmatprep.subr.mxu0 0.0
      %3283 = vmatpush1.msra.mxu0 0.0
      %3284 = vmatprep.subr.mxu0 0.0
      %3285 = vmatpush1.msra.mxu0 0.0
      %3286 = vmatprep.subr.mxu0 0.0
      %3287 = vmatpush1.msra.mxu0 0.0
      %3288 = vmatprep.subr.mxu0 0.0
      %3289 = vmatpush1.msra.mxu0 0.0
      %3290 = vmatprep.subr.mxu0 0.0
      %3291 = vmatpush1.msra.mxu0 0.0
      %3292 = vmatprep.subr.mxu0 0.0
      %3293 = vmatpush1.msra.mxu0 0.0
      %3294 = vmatprep.subr.mxu0 0.0
      %3295 = vmatpush1.msra.mxu0 0.0
      %3296 = vmatprep.subr.mxu0 0.0
      %3297 = vmatpush1.msra.mxu0 0.0
      %3298 = vmatprep.subr.mxu0 0.0
      %3299 = vmatpush1.msra.mxu0 0.0
      %3300 = vmatprep.subr.mxu0 0.0
      %3301 = vmatpush1.msra.mxu0 0.0
      %3302 = vmatprep.subr.mxu0 0.0
      %3303 = vmatpush1.msra.mxu0 0.0
      %3304 = vmatprep.subr.mxu0 0.0
      %3305 = vmatpush1.msra.mxu0 0.0
      %3306 = vmatprep.subr.mxu0 0.0
      %3307 = vmatpush1.msra.mxu0 0.0
      %3308 = vmatprep.subr.mxu0 0.0
      %3309 = vmatpush1.msra.mxu0 0.0
      %3310 = vmatprep.subr.mxu0 0.0
      %3311 = vmatpush1.msra.mxu0 0.0
      %3312 = vmatprep.subr.mxu0 0.0
      %3313 = vmatpush1.msra.mxu0 0.0
      %3314 = vmatprep.subr.mxu0 0.0
      %3315 = vmatpush1.msra.mxu0 0.0
      %3316 = vmatprep.subr.mxu0 0.0
      %3317 = vmatpush1.msra.mxu0 0.0
      %3318 = vmatprep.subr.mxu0 0.0
      %3319 = vmatpush1.msra.mxu0 0.0
      %3320 = vmatprep.subr.mxu0 0.0
      %3321 = vmatpush1.msra.mxu0 0.0
      %3322 = vmatprep.subr.mxu0 0.0
      %3323 = vmatpush1.msra.mxu0 0.0
      %3324 = vmatprep.subr.mxu0 0.0
      %3325 = vmatpush1.msra.mxu0 0.0
      %3326 = vmatprep.subr.mxu0 0.0
      %3327 = vmatpush1.msra.mxu0 0.0
      %3328 = vmatprep.subr.mxu0 0.0
      %3329 = vmatpush1.msra.mxu0 0.0
      %3330 = vmatprep.subr.mxu0 0.0
      %3331 = vmatpush1.msra.mxu0 0.0
      %3332 = vmatprep.subr.mxu0 0.0
      %3333 = vmatpush1.msra.mxu0 0.0
      %3334 = vmatprep.subr.mxu0 0.0
      %3335 = vmatpush1.msra.mxu0 0.0
      %3336 = vmatprep.subr.mxu0 0.0
      %3337 = vmatpush1.msra.mxu0 0.0
      %3338 = vmatprep.mubr.f32.mxu0 0.0
      %3339 = vmatmul.mubr.f32.gmra.mrb[0].mxu0 %v3185
      %v3340 = vpop.f32.mrb[0].mxu0
      %v3341 = vadd.f32 0.0, %v3340
      %v3342 = vpop.f32.mrb[0].mxu0
      %3343 = vmatprep.mubr.f32.mxu0 0.0
      %3344 = vmatmul.mubr.f32.gmra.mrb[0].mxu0 %v3188
      %v3345 = vpop.f32.mrb[0].mxu0
      %v3346 = vadd.f32 0.0, %v3345
      %v3347 = vpop.f32.mrb[0].mxu0
      %3348 = vmatprep.mubr.f32.mxu0 0.0
      %3349 = vmatmul.mubr.f32.gmra.mrb[0].mxu0 %v3191
      %v3350 = vpop.f32.mrb[0].mxu0
      %v3351 = vadd.f32 0.0, %v3350
      %v3352 = vpop.f32.mrb[0].mxu0
      %3353 = vmatprep.mubr.f32.mxu0 0.0
      %3354 = vmatmul.mubr.f32.gmra.mrb[0].mxu0 %v3194
      %v3355 = vpop.f32.mrb[0].mxu0
      %v3356 = vadd.f32 0.0, %v3355
      %v3357 = vpop.f32.mrb[0].mxu0
      %3358 = vmatprep.mubr.f32.mxu0 0.0
      %3359 = vmatmul.mubr.f32.gmra.mrb[0].mxu0 %v3197
      %v3360 = vpop.f32.mrb[0].mxu0
      %v3361 = vadd.f32 0.0, %v3360
      %v3362 = vpop.f32.mrb[0].mxu0
      %3363 = vmatprep.mubr.f32.mxu0 0.0
      %3364 = vmatmul.mubr.f32.gmra.mrb[0].mxu0 %v3200
      %v3365 = vpop.f32.mrb[0].mxu0
      %v3366 = vadd.f32 0.0, %v3365
      %v3367 = vpop.f32.mrb[0].mxu0
      %3368 = vmatprep.mubr.f32.mxu0 0.0
      %3369 = vmatmul.mubr.f32.gmra.mrb[0].mxu0 %v3203
      %v3370 = vpop.f32.mrb[0].mxu0
      %v3371 = vadd.f32 0.0, %v3370
      %v3372 = vpop.f32.mrb[0].mxu0
      %3373 = vmatprep.mubr.f32.mxu0 0.0
      %3374 = vmatmul.mubr.f32.gmra.mrb[0].mxu0 %v3206
      %v3375 = vpop.f32.mrb[0].mxu0
      %v3376 = vadd.f32 0.0, %v3375
      %v3377 = vpop.f32.mrb[0].mxu0
      %3378 = vmatprep.mubr.f32.mxu0 0.0
      %3379 = vmatmul.mubr.f32.gmra.mrb[0].mxu0 %v3209
      %v3380 = vpop.f32.mrb[0].mxu0
      %v3381 = vadd.f32 0.0, %v3380
      %v3382 = vpop.f32.mrb[0].mxu0
      %3383 = vmatprep.mubr.f32.mxu0 0.0
      %3384 = vmatmul.mubr.f32.gmra.mrb[0].mxu0 %v3212
      %v3385 = vpop.f32.mrb[0].mxu0
      %v3386 = vadd.f32 0.0, %v3385
      %v3387 = vpop.f32.mrb[0].mxu0
      %3388 = vmatprep.mubr.f32.mxu0 0.0
      %3389 = vmatmul.mubr.f32.gmra.mrb[0].mxu0 %v3215
      %v3390 = vpop.f32.mrb[0].mxu0
      %v3391 = vadd.f32 0.0, %v3390
      %v3392 = vpop.f32.mrb[0].mxu0
      %3393 = vmatprep.mubr.f32.mxu0 0.0
      %3394 = vmatmul.mubr.f32.gmra.mrb[0].mxu0 %v3218
      %v3395 = vpop.f32.mrb[0].mxu0
      %v3396 = vadd.f32 0.0, %v3395
      %v3397 = vpop.f32.mrb[0].mxu0
      %3398 = vmatprep.mubr.f32.mxu0 0.0
      %3399 = vmatmul.mubr.f32.gmra.mrb[0].mxu0 %v3221
      %v3400 = vpop.f32.mrb[0].mxu0
      %v3401 = vadd.f32 0.0, %v3400
      %v3402 = vpop.f32.mrb[0].mxu0
      %3403 = vmatprep.mubr.f32.mxu0 0.0
      %3404 = vmatmul.mubr.f32.gmra.mrb[0].mxu0 %v3224
      %v3405 = vpop.f32.mrb[0].mxu0
      %v3406 = vadd.f32 0.0, %v3405
      %v3407 = vpop.f32.mrb[0].mxu0
      %3408 = vmatprep.mubr.f32.mxu0 0.0
      %3409 = vmatmul.mubr.f32.gmra.mrb[0].mxu0 %v3227
      %v3410 = vpop.f32.mrb[0].mxu0
      %v3411 = vadd.f32 0.0, %v3410
      %v3412 = vpop.f32.mrb[0].mxu0
      %3413 = vmatprep.mubr.f32.mxu0 0.0
      %3414 = vmatmul.mubr.f32.gmra.mrb[0].mxu0 %v3230
      %v3415 = vpop.f32.mrb[0].mxu0
      %v3416 = vadd.f32 0.0, %v3415
      %v3417 = vpop.f32.mrb[0].mxu0
      %3418 = vmatprep.mubr.f32.mxu0 0.0
      %3419 = vmatmul.mubr.f32.gmra.mrb[0].mxu0 %v3233
      %v3420 = vpop.f32.mrb[0].mxu0
      %v3421 = vadd.f32 0.0, %v3420
      %v3422 = vpop.f32.mrb[0].mxu0
      %3423 = vmatprep.mubr.f32.mxu0 0.0
      %3424 = vmatmul.mubr.f32.gmra.mrb[0].mxu0 %v3236
      %v3425 = vpop.f32.mrb[0].mxu0
      %v3426 = vadd.f32 0.0, %v3425
      %v3427 = vpop.f32.mrb[0].mxu0
      %3428 = vmatprep.mubr.f32.mxu0 0.0
      %3429 = vmatmul.mubr.f32.gmra.mrb[0].mxu0 %v3239
      %v3430 = vpop.f32.mrb[0].mxu0
      %v3431 = vadd.f32 0.0, %v3430
      %v3432 = vpop.f32.mrb[0].mxu0
      %3433 = vmatprep.mubr.f32.mxu0 0.0
      %3434 = vmatmul.mubr.f32.gmra.mrb[0].mxu0 %v3242
      %v3435 = vpop.f32.mrb[0].mxu0
      %v3436 = vadd.f32 0.0, %v3435
      %v3437 = vpop.f32.mrb[0].mxu0
      %3438 = vmatprep.mubr.f32.mxu0 0.0
      %3439 = vmatmul.mubr.f32.gmra.mrb[0].mxu0 %v3245
      %v3440 = vpop.f32.mrb[0].mxu0
      %v3441 = vadd.f32 0.0, %v3440
      %v3442 = vpop.f32.mrb[0].mxu0
      %3443 = vmatprep.mubr.f32.mxu0 0.0
      %3444 = vmatmul.mubr.f32.gmra.mrb[0].mxu0 %v3248
      %v3445 = vpop.f32.mrb[0].mxu0
      %v3446 = vadd.f32 0.0, %v3445
      %v3447 = vpop.f32.mrb[0].mxu0
      %3448 = vmatprep.mubr.f32.mxu0 0.0
      %3449 = vmatmul.mubr.f32.gmra.mrb[0].mxu0 %v3251
      %v3450 = vpop.f32.mrb[0].mxu0
      %v3451 = vadd.f32 0.0, %v3450
      %v3452 = vpop.f32.mrb[0].mxu0
      %3453 = vmatprep.mubr.f32.mxu0 0.0
      %3454 = vmatmul.mubr.f32.gmra.mrb[0].mxu0 %v3254
      %v3455 = vpop.f32.mrb[0].mxu0
      %v3456 = vadd.f32 0.0, %v3455
      %v3457 = vpop.f32.mrb[0].mxu0
      %3458 = vmatprep.mubr.f32.mxu0 0.0
      %3459 = vmatmul.mubr.f32.gmra.mrb[0].mxu0 %v3257
      %v3460 = vpop.f32.mrb[0].mxu0
      %v3461 = vadd.f32 0.0, %v3460
      %v3462 = vpop.f32.mrb[0].mxu0
      %3463 = vmatprep.mubr.f32.mxu0 0.0
      %3464 = vmatmul.mubr.f32.gmra.mrb[0].mxu0 %v3260
      %v3465 = vpop.f32.mrb[0].mxu0
      %v3466 = vadd.f32 0.0, %v3465
      %v3467 = vpop.f32.mrb[0].mxu0
      %3468 = vmatprep.mubr.f32.mxu0 0.0
      %3469 = vmatmul.mubr.f32.gmra.mrb[0].mxu0 %v3263
      %v3470 = vpop.f32.mrb[0].mxu0
      %v3471 = vadd.f32 0.0, %v3470
      %v3472 = vpop.f32.mrb[0].mxu0
      %3473 = vmatprep.mubr.f32.mxu0 0.0
      %3474 = vmatmul.mubr.f32.gmra.mrb[0].mxu0 %v3266
      %v3475 = vpop.f32.mrb[0].mxu0
      %v3476 = vadd.f32 0.0, %v3475
      %v3477 = vpop.f32.mrb[0].mxu0
      %3478 = vmatprep.mubr.f32.mxu0 0.0
      %3479 = vmatmul.mubr.f32.gmra.mrb[0].mxu0 %v3269
      %v3480 = vpop.f32.mrb[0].mxu0
      %v3481 = vadd.f32 0.0, %v3480
      %v3482 = vpop.f32.mrb[0].mxu0
      %3483 = vdwg.mxu0
      %v3484 = vadd.f32 %v3124, %v3341
      %v3485 = vadd.f32 %v3125, %v3346
      %v3486 = vadd.f32 %v3126, %v3351
      %v3487 = vadd.f32 %v3127, %v3356
      %v3488 = vadd.f32 %v3128, %v3361
      %v3489 = vadd.f32 %v3129, %v3366
      %v3490 = vadd.f32 %v3130, %v3371
      %v3491 = vadd.f32 %v3131, %v3376
      %v3492 = vadd.f32 %v3132, %v3381
      %v3493 = vadd.f32 %v3133, %v3386
      %v3494 = vadd.f32 %v3134, %v3391
      %v3495 = vadd.f32 %v3135, %v3396
      %v3496 = vadd.f32 %v3136, %v3401
      %v3497 = vadd.f32 %v3137, %v3406
      %v3498 = vadd.f32 %v3138, %v3411
      %v3499 = vadd.f32 %v3139, %v3416
      %v3500 = vadd.f32 %v3140, %v3421
      %v3501 = vadd.f32 %v3141, %v3426
      %v3502 = vadd.f32 %v3142, %v3431
      %v3503 = vadd.f32 %v3143, %v3436
      %v3504 = vadd.f32 %v3144, %v3441
      %v3505 = vadd.f32 %v3145, %v3446
      %v3506 = vadd.f32 %v3146, %v3451
      %v3507 = vadd.f32 %v3147, %v3456
      %v3508 = vadd.f32 %v3148, %v3461
      %v3509 = vadd.f32 %v3149, %v3466
      %v3510 = vadd.f32 %v3150, %v3471
      %v3511 = vadd.f32 %v3151, %v3476
      %v3512 = vadd.f32 %v3152, %v3481
      %v3513 = vmax.f32 %v3484, 0.0
      %v3514 = vmax.f32 %v3485, 0.0
      %v3515 = vmax.f32 %v3486, 0.0
      %v3516 = vmax.f32 %v3487, 0.0
      %v3517 = vmax.f32 %v3488, 0.0
      %v3518 = vmax.f32 %v3489, 0.0
      %v3519 = vmax.f32 %v3490, 0.0
      %v3520 = vmax.f32 %v3491, 0.0
      %v3521 = vmax.f32 %v3492, 0.0
      %v3522 = vmax.f32 %v3493, 0.0
      %v3523 = vmax.f32 %v3494, 0.0
      %v3524 = vmax.f32 %v3495, 0.0
      %v3525 = vmax.f32 %v3496, 0.0
      %v3526 = vmax.f32 %v3497, 0.0
      %v3527 = vmax.f32 %v3498, 0.0
      %v3528 = vmax.f32 %v3499, 0.0
      %v3529 = vmax.f32 %v3500, 0.0
      %v3530 = vmax.f32 %v3501, 0.0
      %v3531 = vmax.f32 %v3502, 0.0
      %v3532 = vmax.f32 %v3503, 0.0
      %v3533 = vmax.f32 %v3504, 0.0
      %v3534 = vmax.f32 %v3505, 0.0
      %v3535 = vmax.f32 %v3506, 0.0
      %v3536 = vmax.f32 %v3507, 0.0
      %v3537 = vmax.f32 %v3508, 0.0
      %v3538 = vmax.f32 %v3509, 0.0
      %v3539 = vmax.f32 %v3510, 0.0
      %v3540 = vmax.f32 %v3511, 0.0
      %v3541 = vmax.f32 %v3512, 0.0
      %vm3542 = vcmask 64512
      %3543 = vst.msk [vmem:[#allocation2] sm:$0xff] %vm3542, %v3513
      %3544 = vst.msk [vmem:[#allocation2 + $0x8] sm:$0xff] %vm3542, %v3514
      %3545 = vst.msk [vmem:[#allocation2 + $0x10] sm:$0xff] %vm3542, %v3515
      %3546 = vst.msk [vmem:[#allocation2 + $0x18] sm:$0xff] %vm3542, %v3516
      %3547 = vst.msk [vmem:[#allocation2 + $0x20] sm:$0xff] %vm3542, %v3517
      %3548 = vst.msk [vmem:[#allocation2 + $0x28] sm:$0xff] %vm3542, %v3518
      %3549 = vst.msk [vmem:[#allocation2 + $0x30] sm:$0xff] %vm3542, %v3519
      %3550 = vst.msk [vmem:[#allocation2 + $0x38] sm:$0xff] %vm3542, %v3520
      %3551 = vst.msk [vmem:[#allocation2 + $0x40] sm:$0xff] %vm3542, %v3521
      %3552 = vst.msk [vmem:[#allocation2 + $0x48] sm:$0xff] %vm3542, %v3522
      %3553 = vst.msk [vmem:[#allocation2 + $0x50] sm:$0xff] %vm3542, %v3523
      %3554 = vst.msk [vmem:[#allocation2 + $0x58] sm:$0xff] %vm3542, %v3524
      %3555 = vst.msk [vmem:[#allocation2 + $0x60] sm:$0xff] %vm3542, %v3525
      %3556 = vst.msk [vmem:[#allocation2 + $0x68] sm:$0xff] %vm3542, %v3526
      %3557 = vst.msk [vmem:[#allocation2 + $0x70] sm:$0xff] %vm3542, %v3527
      %3558 = vst.msk [vmem:[#allocation2 + $0x78] sm:$0xff] %vm3542, %v3528
      %3559 = vst.msk [vmem:[#allocation2 + $0x80] sm:$0xff] %vm3542, %v3529
      %3560 = vst.msk [vmem:[#allocation2 + $0x88] sm:$0xff] %vm3542, %v3530
      %3561 = vst.msk [vmem:[#allocation2 + $0x90] sm:$0xff] %vm3542, %v3531
      %3562 = vst.msk [vmem:[#allocation2 + $0x98] sm:$0xff] %vm3542, %v3532
      %3563 = vst.msk [vmem:[#allocation2 + $0xa0] sm:$0xff] %vm3542, %v3533
      %3564 = vst.msk [vmem:[#allocation2 + $0xa8] sm:$0xff] %vm3542, %v3534
      %3565 = vst.msk [vmem:[#allocation2 + $0xb0] sm:$0xff] %vm3542, %v3535
      %3566 = vst.msk [vmem:[#allocation2 + $0xb8] sm:$0xff] %vm3542, %v3536
      %3567 = vst.msk [vmem:[#allocation2 + $0xc0] sm:$0xff] %vm3542, %v3537
      %3568 = vst.msk [vmem:[#allocation2 + $0xc8] sm:$0xff] %vm3542, %v3538
      %3569 = vst.msk [vmem:[#allocation2 + $0xd0] sm:$0xff] %vm3542, %v3539
      %3570 = vst.msk [vmem:[#allocation2 + $0xd8] sm:$0xff] %vm3542, %v3540
      %vm3571 = vcmask 58368
      %3572 = vst.msk [vmem:[#allocation2 + $0xe0] sm:$0x3] %vm3571, %v3541
      %v3573 = vld [vmem:[%s4] sm:$0x1]
      %v3575 = vlaneseq
      %v3576 = vshrl.u32 %v3575, 7
      %v3577 = vsub.s32 0, %v3576
      %v3578 = vrot.slane %v3573, %v3577
      %v3580 = vld [vmem:[#allocation2] sm:$0xff]
      %v3581 = vld [vmem:[#allocation2 + $0x8] sm:$0xff]
      %v3582 = vld [vmem:[#allocation2 + $0x10] sm:$0xff]
      %v3583 = vld [vmem:[#allocation2 + $0x18] sm:$0xff]
      %v3584 = vld [vmem:[#allocation2 + $0x20] sm:$0xff]
      %v3585 = vld [vmem:[#allocation2 + $0x28] sm:$0xff]
      %v3586 = vld [vmem:[#allocation2 + $0x30] sm:$0xff]
      %v3587 = vld [vmem:[#allocation2 + $0x38] sm:$0xff]
      %v3588 = vld [vmem:[#allocation2 + $0x40] sm:$0xff]
      %v3589 = vld [vmem:[#allocation2 + $0x48] sm:$0xff]
      %v3590 = vld [vmem:[#allocation2 + $0x50] sm:$0xff]
      %v3591 = vld [vmem:[#allocation2 + $0x58] sm:$0xff]
      %v3592 = vld [vmem:[#allocation2 + $0x60] sm:$0xff]
      %v3593 = vld [vmem:[#allocation2 + $0x68] sm:$0xff]
      %v3594 = vld [vmem:[#allocation2 + $0x70] sm:$0xff]
      %v3595 = vld [vmem:[#allocation2 + $0x78] sm:$0xff]
      %v3596 = vld [vmem:[#allocation2 + $0x80] sm:$0xff]
      %v3597 = vld [vmem:[#allocation2 + $0x88] sm:$0xff]
      %v3598 = vld [vmem:[#allocation2 + $0x90] sm:$0xff]
      %v3599 = vld [vmem:[#allocation2 + $0x98] sm:$0xff]
      %v3600 = vld [vmem:[#allocation2 + $0xa0] sm:$0xff]
      %v3601 = vld [vmem:[#allocation2 + $0xa8] sm:$0xff]
      %v3602 = vld [vmem:[#allocation2 + $0xb0] sm:$0xff]
      %v3603 = vld [vmem:[#allocation2 + $0xb8] sm:$0xff]
      %v3604 = vld [vmem:[%s3] sm:$0xff]
      %v3606 = vsel %vm3542, %v3580, 0
      %v3609 = vsel %vm3542, %v3581, 0
      %v3612 = vsel %vm3542, %v3582, 0
      %v3615 = vsel %vm3542, %v3583, 0
      %v3618 = vsel %vm3542, %v3584, 0
      %v3621 = vsel %vm3542, %v3585, 0
      %v3624 = vsel %vm3542, %v3586, 0
      %v3627 = vsel %vm3542, %v3587, 0
      %v3630 = vsel %vm3542, %v3588, 0
      %v3633 = vsel %vm3542, %v3589, 0
      %v3636 = vsel %vm3542, %v3590, 0
      %v3639 = vsel %vm3542, %v3591, 0
      %v3642 = vsel %vm3542, %v3592, 0
      %v3645 = vsel %vm3542, %v3593, 0
      %v3648 = vsel %vm3542, %v3594, 0
      %v3651 = vsel %vm3542, %v3595, 0
      %v3654 = vsel %vm3542, %v3596, 0
      %v3657 = vsel %vm3542, %v3597, 0
      %v3660 = vsel %vm3542, %v3598, 0
      %v3663 = vsel %vm3542, %v3599, 0
      %v3666 = vsel %vm3542, %v3600, 0
      %v3669 = vsel %vm3542, %v3601, 0
      %v3672 = vsel %vm3542, %v3602, 0
      %v3675 = vsel %vm3542, %v3603, 0
      %3677 = vmatprep.subr.mxu0 0.0
      %3678 = vmatpush1.msra.mxu0 %v3604
      %3679 = vmatprep.subr.mxu0 0.0
      %3680 = vmatpush1.msra.mxu0 0.0
      %3681 = vmatprep.subr.mxu0 0.0
      %3682 = vmatpush1.msra.mxu0 0.0
      %3683 = vmatprep.subr.mxu0 0.0
      %3684 = vmatpush1.msra.mxu0 0.0
      %3685 = vmatprep.subr.mxu0 0.0
      %3686 = vmatpush1.msra.mxu0 0.0
      %3687 = vmatprep.subr.mxu0 0.0
      %3688 = vmatpush1.msra.mxu0 0.0
      %3689 = vmatprep.subr.mxu0 0.0
      %3690 = vmatpush1.msra.mxu0 0.0
      %3691 = vmatprep.subr.mxu0 0.0
      %3692 = vmatpush1.msra.mxu0 0.0
      %3693 = vmatprep.subr.mxu0 0.0
      %3694 = vmatpush1.msra.mxu0 0.0
      %3695 = vmatprep.subr.mxu0 0.0
      %3696 = vmatpush1.msra.mxu0 0.0
      %3697 = vmatprep.subr.mxu0 0.0
      %3698 = vmatpush1.msra.mxu0 0.0
      %3699 = vmatprep.subr.mxu0 0.0
      %3700 = vmatpush1.msra.mxu0 0.0
      %3701 = vmatprep.subr.mxu0 0.0
      %3702 = vmatpush1.msra.mxu0 0.0
      %3703 = vmatprep.subr.mxu0 0.0
      %3704 = vmatpush1.msra.mxu0 0.0
      %3705 = vmatprep.subr.mxu0 0.0
      %3706 = vmatpush1.msra.mxu0 0.0
      %3707 = vmatprep.subr.mxu0 0.0
      %3708 = vmatpush1.msra.mxu0 0.0
      %3709 = vmatprep.subr.mxu0 0.0
      %3710 = vmatpush1.msra.mxu0 0.0
      %3711 = vmatprep.subr.mxu0 0.0
      %3712 = vmatpush1.msra.mxu0 0.0
      %3713 = vmatprep.subr.mxu0 0.0
      %3714 = vmatpush1.msra.mxu0 0.0
      %3715 = vmatprep.subr.mxu0 0.0
      %3716 = vmatpush1.msra.mxu0 0.0
      %3717 = vmatprep.subr.mxu0 0.0
      %3718 = vmatpush1.msra.mxu0 0.0
      %3719 = vmatprep.subr.mxu0 0.0
      %3720 = vmatpush1.msra.mxu0 0.0
      %3721 = vmatprep.subr.mxu0 0.0
      %3722 = vmatpush1.msra.mxu0 0.0
      %3723 = vmatprep.subr.mxu0 0.0
      %3724 = vmatpush1.msra.mxu0 0.0
      %3725 = vmatprep.subr.mxu0 0.0
      %3726 = vmatpush1.msra.mxu0 0.0
      %3727 = vmatprep.subr.mxu0 0.0
      %3728 = vmatpush1.msra.mxu0 0.0
      %3729 = vmatprep.subr.mxu0 0.0
      %3730 = vmatpush1.msra.mxu0 0.0
      %3731 = vmatprep.subr.mxu0 0.0
      %3732 = vmatpush1.msra.mxu0 0.0
      %3733 = vmatprep.subr.mxu0 0.0
      %3734 = vmatpush1.msra.mxu0 0.0
      %3735 = vmatprep.subr.mxu0 0.0
      %3736 = vmatpush1.msra.mxu0 0.0
      %3737 = vmatprep.subr.mxu0 0.0
      %3738 = vmatpush1.msra.mxu0 0.0
      %3739 = vmatprep.subr.mxu0 0.0
      %3740 = vmatpush1.msra.mxu0 0.0
      %3741 = vmatprep.mubr.f32.mxu0 0.0
      %3742 = vmatmul.mubr.f32.gmra.mrb[0].mxu0 %v3606
      %v3743 = vpop.f32.mrb[0].mxu0
      %v3744 = vadd.f32 0.0, %v3743
      %v3745 = vpop.f32.mrb[0].mxu0
      %3746 = vmatprep.mubr.f32.mxu0 0.0
      %3747 = vmatmul.mubr.f32.gmra.mrb[0].mxu0 %v3609
      %v3748 = vpop.f32.mrb[0].mxu0
      %v3749 = vadd.f32 0.0, %v3748
      %v3750 = vpop.f32.mrb[0].mxu0
      %3751 = vmatprep.mubr.f32.mxu0 0.0
      %3752 = vmatmul.mubr.f32.gmra.mrb[0].mxu0 %v3612
      %v3753 = vpop.f32.mrb[0].mxu0
      %v3754 = vadd.f32 0.0, %v3753
      %v3755 = vpop.f32.mrb[0].mxu0
      %3756 = vmatprep.mubr.f32.mxu0 0.0
      %3757 = vmatmul.mubr.f32.gmra.mrb[0].mxu0 %v3615
      %v3758 = vpop.f32.mrb[0].mxu0
      %v3759 = vadd.f32 0.0, %v3758
      %v3760 = vpop.f32.mrb[0].mxu0
      %3761 = vmatprep.mubr.f32.mxu0 0.0
      %3762 = vmatmul.mubr.f32.gmra.mrb[0].mxu0 %v3618
      %v3763 = vpop.f32.mrb[0].mxu0
      %v3764 = vadd.f32 0.0, %v3763
      %v3765 = vpop.f32.mrb[0].mxu0
      %3766 = vmatprep.mubr.f32.mxu0 0.0
      %3767 = vmatmul.mubr.f32.gmra.mrb[0].mxu0 %v3621
      %v3768 = vpop.f32.mrb[0].mxu0
      %v3769 = vadd.f32 0.0, %v3768
      %v3770 = vpop.f32.mrb[0].mxu0
      %3771 = vmatprep.mubr.f32.mxu0 0.0
      %3772 = vmatmul.mubr.f32.gmra.mrb[0].mxu0 %v3624
      %v3773 = vpop.f32.mrb[0].mxu0
      %v3774 = vadd.f32 0.0, %v3773
      %v3775 = vpop.f32.mrb[0].mxu0
      %3776 = vmatprep.mubr.f32.mxu0 0.0
      %3777 = vmatmul.mubr.f32.gmra.mrb[0].mxu0 %v3627
      %v3778 = vpop.f32.mrb[0].mxu0
      %v3779 = vadd.f32 0.0, %v3778
      %v3780 = vpop.f32.mrb[0].mxu0
      %3781 = vmatprep.mubr.f32.mxu0 0.0
      %3782 = vmatmul.mubr.f32.gmra.mrb[0].mxu0 %v3630
      %v3783 = vpop.f32.mrb[0].mxu0
      %v3784 = vadd.f32 0.0, %v3783
      %v3785 = vpop.f32.mrb[0].mxu0
      %3786 = vmatprep.mubr.f32.mxu0 0.0
      %3787 = vmatmul.mubr.f32.gmra.mrb[0].mxu0 %v3633
      %v3788 = vpop.f32.mrb[0].mxu0
      %v3789 = vadd.f32 0.0, %v3788
      %v3790 = vpop.f32.mrb[0].mxu0
      %3791 = vmatprep.mubr.f32.mxu0 0.0
      %3792 = vmatmul.mubr.f32.gmra.mrb[0].mxu0 %v3636
      %v3793 = vpop.f32.mrb[0].mxu0
      %v3794 = vadd.f32 0.0, %v3793
      %v3795 = vpop.f32.mrb[0].mxu0
      %3796 = vmatprep.mubr.f32.mxu0 0.0
      %3797 = vmatmul.mubr.f32.gmra.mrb[0].mxu0 %v3639
      %v3798 = vpop.f32.mrb[0].mxu0
      %v3799 = vadd.f32 0.0, %v3798
      %v3800 = vpop.f32.mrb[0].mxu0
      %3801 = vmatprep.mubr.f32.mxu0 0.0
      %3802 = vmatmul.mubr.f32.gmra.mrb[0].mxu0 %v3642
      %v3803 = vpop.f32.mrb[0].mxu0
      %v3804 = vadd.f32 0.0, %v3803
      %v3805 = vpop.f32.mrb[0].mxu0
      %3806 = vmatprep.mubr.f32.mxu0 0.0
      %3807 = vmatmul.mubr.f32.gmra.mrb[0].mxu0 %v3645
      %v3808 = vpop.f32.mrb[0].mxu0
      %v3809 = vadd.f32 0.0, %v3808
      %v3810 = vpop.f32.mrb[0].mxu0
      %3811 = vmatprep.mubr.f32.mxu0 0.0
      %3812 = vmatmul.mubr.f32.gmra.mrb[0].mxu0 %v3648
      %v3813 = vpop.f32.mrb[0].mxu0
      %v3814 = vadd.f32 0.0, %v3813
      %v3815 = vpop.f32.mrb[0].mxu0
      %3816 = vmatprep.mubr.f32.mxu0 0.0
      %3817 = vmatmul.mubr.f32.gmra.mrb[0].mxu0 %v3651
      %v3818 = vpop.f32.mrb[0].mxu0
      %v3819 = vadd.f32 0.0, %v3818
      %v3820 = vpop.f32.mrb[0].mxu0
      %3821 = vmatprep.mubr.f32.mxu0 0.0
      %3822 = vmatmul.mubr.f32.gmra.mrb[0].mxu0 %v3654
      %v3823 = vpop.f32.mrb[0].mxu0
      %v3824 = vadd.f32 0.0, %v3823
      %v3825 = vpop.f32.mrb[0].mxu0
      %3826 = vmatprep.mubr.f32.mxu0 0.0
      %3827 = vmatmul.mubr.f32.gmra.mrb[0].mxu0 %v3657
      %v3828 = vpop.f32.mrb[0].mxu0
      %v3829 = vadd.f32 0.0, %v3828
      %v3830 = vpop.f32.mrb[0].mxu0
      %3831 = vmatprep.mubr.f32.mxu0 0.0
      %3832 = vmatmul.mubr.f32.gmra.mrb[0].mxu0 %v3660
      %v3833 = vpop.f32.mrb[0].mxu0
      %v3834 = vadd.f32 0.0, %v3833
      %v3835 = vpop.f32.mrb[0].mxu0
      %3836 = vmatprep.mubr.f32.mxu0 0.0
      %3837 = vmatmul.mubr.f32.gmra.mrb[0].mxu0 %v3663
      %v3838 = vpop.f32.mrb[0].mxu0
      %v3839 = vadd.f32 0.0, %v3838
      %v3840 = vpop.f32.mrb[0].mxu0
      %3841 = vmatprep.mubr.f32.mxu0 0.0
      %3842 = vmatmul.mubr.f32.gmra.mrb[0].mxu0 %v3666
      %v3843 = vpop.f32.mrb[0].mxu0
      %v3844 = vadd.f32 0.0, %v3843
      %v3845 = vpop.f32.mrb[0].mxu0
      %3846 = vmatprep.mubr.f32.mxu0 0.0
      %3847 = vmatmul.mubr.f32.gmra.mrb[0].mxu0 %v3669
      %v3848 = vpop.f32.mrb[0].mxu0
      %v3849 = vadd.f32 0.0, %v3848
      %v3850 = vpop.f32.mrb[0].mxu0
      %3851 = vmatprep.mubr.f32.mxu0 0.0
      %3852 = vmatmul.mubr.f32.gmra.mrb[0].mxu0 %v3672
      %v3853 = vpop.f32.mrb[0].mxu0
      %v3854 = vadd.f32 0.0, %v3853
      %v3855 = vpop.f32.mrb[0].mxu0
      %3856 = vmatprep.mubr.f32.mxu0 0.0
      %3857 = vmatmul.mubr.f32.gmra.mrb[0].mxu0 %v3675
      %v3858 = vpop.f32.mrb[0].mxu0
      %v3859 = vadd.f32 0.0, %v3858
      %v3860 = vpop.f32.mrb[0].mxu0
      %3861 = vdwg.mxu0
      %v3862 = vadd.f32 %v3578, %v3744
      %v3863 = vadd.f32 %v3578, %v3749
      %v3864 = vadd.f32 %v3578, %v3754
      %v3865 = vadd.f32 %v3578, %v3759
      %v3866 = vadd.f32 %v3578, %v3764
      %v3867 = vadd.f32 %v3578, %v3769
      %v3868 = vadd.f32 %v3578, %v3774
      %v3869 = vadd.f32 %v3578, %v3779
      %v3870 = vadd.f32 %v3578, %v3784
      %v3871 = vadd.f32 %v3578, %v3789
      %v3872 = vadd.f32 %v3578, %v3794
      %v3873 = vadd.f32 %v3578, %v3799
      %v3874 = vadd.f32 %v3578, %v3804
      %v3875 = vadd.f32 %v3578, %v3809
      %v3876 = vadd.f32 %v3578, %v3814
      %v3877 = vadd.f32 %v3578, %v3819
      %v3878 = vadd.f32 %v3578, %v3824
      %v3879 = vadd.f32 %v3578, %v3829
      %v3880 = vadd.f32 %v3578, %v3834
      %v3881 = vadd.f32 %v3578, %v3839
      %v3882 = vadd.f32 %v3578, %v3844
      %v3883 = vadd.f32 %v3578, %v3849
      %v3884 = vadd.f32 %v3578, %v3854
      %v3885 = vadd.f32 %v3578, %v3859
      %v3886 = vld [vmem:[#allocation2 + $0x1] sm:$0xff]
      %v3887 = vld [vmem:[#allocation2 + $0x9] sm:$0xff]
      %v3888 = vld [vmem:[#allocation2 + $0x11] sm:$0xff]
      %v3889 = vld [vmem:[#allocation2 + $0x19] sm:$0xff]
      %v3890 = vld [vmem:[#allocation2 + $0x21] sm:$0xff]
      %v3891 = vld [vmem:[#allocation2 + $0x29] sm:$0xff]
      %v3892 = vld [vmem:[#allocation2 + $0x31] sm:$0xff]
      %v3893 = vld [vmem:[#allocation2 + $0x39] sm:$0xff]
      %v3894 = vld [vmem:[#allocation2 + $0x41] sm:$0xff]
      %v3895 = vld [vmem:[#allocation2 + $0x49] sm:$0xff]
      %v3896 = vld [vmem:[#allocation2 + $0x51] sm:$0xff]
      %v3897 = vld [vmem:[#allocation2 + $0x59] sm:$0xff]
      %v3898 = vld [vmem:[#allocation2 + $0x61] sm:$0xff]
      %v3899 = vld [vmem:[#allocation2 + $0x69] sm:$0xff]
      %v3900 = vld [vmem:[#allocation2 + $0x71] sm:$0xff]
      %v3901 = vld [vmem:[#allocation2 + $0x79] sm:$0xff]
      %v3902 = vld [vmem:[#allocation2 + $0x81] sm:$0xff]
      %v3903 = vld [vmem:[#allocation2 + $0x89] sm:$0xff]
      %v3904 = vld [vmem:[#allocation2 + $0x91] sm:$0xff]
      %v3905 = vld [vmem:[#allocation2 + $0x99] sm:$0xff]
      %v3906 = vld [vmem:[#allocation2 + $0xa1] sm:$0xff]
      %v3907 = vld [vmem:[#allocation2 + $0xa9] sm:$0xff]
      %v3908 = vld [vmem:[#allocation2 + $0xb1] sm:$0xff]
      %v3909 = vld [vmem:[#allocation2 + $0xb9] sm:$0xff]
      %s3910 = scalar_lea.vmem %s3, 8
      %v3911 = vld [vmem:[%s3910] sm:$0xff]
      %v3913 = vsel %vm3542, %v3886, 0
      %v3916 = vsel %vm3542, %v3887, 0
      %v3919 = vsel %vm3542, %v3888, 0
      %v3922 = vsel %vm3542, %v3889, 0
      %v3925 = vsel %vm3542, %v3890, 0
      %v3928 = vsel %vm3542, %v3891, 0
      %v3931 = vsel %vm3542, %v3892, 0
      %v3934 = vsel %vm3542, %v3893, 0
      %v3937 = vsel %vm3542, %v3894, 0
      %v3940 = vsel %vm3542, %v3895, 0
      %v3943 = vsel %vm3542, %v3896, 0
      %v3946 = vsel %vm3542, %v3897, 0
      %v3949 = vsel %vm3542, %v3898, 0
      %v3952 = vsel %vm3542, %v3899, 0
      %v3955 = vsel %vm3542, %v3900, 0
      %v3958 = vsel %vm3542, %v3901, 0
      %v3961 = vsel %vm3542, %v3902, 0
      %v3964 = vsel %vm3542, %v3903, 0
      %v3967 = vsel %vm3542, %v3904, 0
      %v3970 = vsel %vm3542, %v3905, 0
      %v3973 = vsel %vm3542, %v3906, 0
      %v3976 = vsel %vm3542, %v3907, 0
      %v3979 = vsel %vm3542, %v3908, 0
      %v3982 = vsel %vm3542, %v3909, 0
      %3984 = vmatprep.subr.mxu0 0.0
      %3985 = vmatpush1.msra.mxu0 %v3911
      %3986 = vmatprep.subr.mxu0 0.0
      %3987 = vmatpush1.msra.mxu0 0.0
      %3988 = vmatprep.subr.mxu0 0.0
      %3989 = vmatpush1.msra.mxu0 0.0
      %3990 = vmatprep.subr.mxu0 0.0
      %3991 = vmatpush1.msra.mxu0 0.0
      %3992 = vmatprep.subr.mxu0 0.0
      %3993 = vmatpush1.msra.mxu0 0.0
      %3994 = vmatprep.subr.mxu0 0.0
      %3995 = vmatpush1.msra.mxu0 0.0
      %3996 = vmatprep.subr.mxu0 0.0
      %3997 = vmatpush1.msra.mxu0 0.0
      %3998 = vmatprep.subr.mxu0 0.0
      %3999 = vmatpush1.msra.mxu0 0.0
      %4000 = vmatprep.subr.mxu0 0.0
      %4001 = vmatpush1.msra.mxu0 0.0
      %4002 = vmatprep.subr.mxu0 0.0
      %4003 = vmatpush1.msra.mxu0 0.0
      %4004 = vmatprep.subr.mxu0 0.0
      %4005 = vmatpush1.msra.mxu0 0.0
      %4006 = vmatprep.subr.mxu0 0.0
      %4007 = vmatpush1.msra.mxu0 0.0
      %4008 = vmatprep.subr.mxu0 0.0
      %4009 = vmatpush1.msra.mxu0 0.0
      %4010 = vmatprep.subr.mxu0 0.0
      %4011 = vmatpush1.msra.mxu0 0.0
      %4012 = vmatprep.subr.mxu0 0.0
      %4013 = vmatpush1.msra.mxu0 0.0
      %4014 = vmatprep.subr.mxu0 0.0
      %4015 = vmatpush1.msra.mxu0 0.0
      %4016 = vmatprep.subr.mxu0 0.0
      %4017 = vmatpush1.msra.mxu0 0.0
      %4018 = vmatprep.subr.mxu0 0.0
      %4019 = vmatpush1.msra.mxu0 0.0
      %4020 = vmatprep.subr.mxu0 0.0
      %4021 = vmatpush1.msra.mxu0 0.0
      %4022 = vmatprep.subr.mxu0 0.0
      %4023 = vmatpush1.msra.mxu0 0.0
      %4024 = vmatprep.subr.mxu0 0.0
      %4025 = vmatpush1.msra.mxu0 0.0
      %4026 = vmatprep.subr.mxu0 0.0
      %4027 = vmatpush1.msra.mxu0 0.0
      %4028 = vmatprep.subr.mxu0 0.0
      %4029 = vmatpush1.msra.mxu0 0.0
      %4030 = vmatprep.subr.mxu0 0.0
      %4031 = vmatpush1.msra.mxu0 0.0
      %4032 = vmatprep.subr.mxu0 0.0
      %4033 = vmatpush1.msra.mxu0 0.0
      %4034 = vmatprep.subr.mxu0 0.0
      %4035 = vmatpush1.msra.mxu0 0.0
      %4036 = vmatprep.subr.mxu0 0.0
      %4037 = vmatpush1.msra.mxu0 0.0
      %4038 = vmatprep.subr.mxu0 0.0
      %4039 = vmatpush1.msra.mxu0 0.0
      %4040 = vmatprep.subr.mxu0 0.0
      %4041 = vmatpush1.msra.mxu0 0.0
      %4042 = vmatprep.subr.mxu0 0.0
      %4043 = vmatpush1.msra.mxu0 0.0
      %4044 = vmatprep.subr.mxu0 0.0
      %4045 = vmatpush1.msra.mxu0 0.0
      %4046 = vmatprep.subr.mxu0 0.0
      %4047 = vmatpush1.msra.mxu0 0.0
      %4048 = vmatprep.mubr.f32.mxu0 0.0
      %4049 = vmatmul.mubr.f32.gmra.mrb[0].mxu0 %v3913
      %v4050 = vpop.f32.mrb[0].mxu0
      %v4051 = vadd.f32 0.0, %v4050
      %v4052 = vpop.f32.mrb[0].mxu0
      %4053 = vmatprep.mubr.f32.mxu0 0.0
      %4054 = vmatmul.mubr.f32.gmra.mrb[0].mxu0 %v3916
      %v4055 = vpop.f32.mrb[0].mxu0
      %v4056 = vadd.f32 0.0, %v4055
      %v4057 = vpop.f32.mrb[0].mxu0
      %4058 = vmatprep.mubr.f32.mxu0 0.0
      %4059 = vmatmul.mubr.f32.gmra.mrb[0].mxu0 %v3919
      %v4060 = vpop.f32.mrb[0].mxu0
      %v4061 = vadd.f32 0.0, %v4060
      %v4062 = vpop.f32.mrb[0].mxu0
      %4063 = vmatprep.mubr.f32.mxu0 0.0
      %4064 = vmatmul.mubr.f32.gmra.mrb[0].mxu0 %v3922
      %v4065 = vpop.f32.mrb[0].mxu0
      %v4066 = vadd.f32 0.0, %v4065
      %v4067 = vpop.f32.mrb[0].mxu0
      %4068 = vmatprep.mubr.f32.mxu0 0.0
      %4069 = vmatmul.mubr.f32.gmra.mrb[0].mxu0 %v3925
      %v4070 = vpop.f32.mrb[0].mxu0
      %v4071 = vadd.f32 0.0, %v4070
      %v4072 = vpop.f32.mrb[0].mxu0
      %4073 = vmatprep.mubr.f32.mxu0 0.0
      %4074 = vmatmul.mubr.f32.gmra.mrb[0].mxu0 %v3928
      %v4075 = vpop.f32.mrb[0].mxu0
      %v4076 = vadd.f32 0.0, %v4075
      %v4077 = vpop.f32.mrb[0].mxu0
      %4078 = vmatprep.mubr.f32.mxu0 0.0
      %4079 = vmatmul.mubr.f32.gmra.mrb[0].mxu0 %v3931
      %v4080 = vpop.f32.mrb[0].mxu0
      %v4081 = vadd.f32 0.0, %v4080
      %v4082 = vpop.f32.mrb[0].mxu0
      %4083 = vmatprep.mubr.f32.mxu0 0.0
      %4084 = vmatmul.mubr.f32.gmra.mrb[0].mxu0 %v3934
      %v4085 = vpop.f32.mrb[0].mxu0
      %v4086 = vadd.f32 0.0, %v4085
      %v4087 = vpop.f32.mrb[0].mxu0
      %4088 = vmatprep.mubr.f32.mxu0 0.0
      %4089 = vmatmul.mubr.f32.gmra.mrb[0].mxu0 %v3937
      %v4090 = vpop.f32.mrb[0].mxu0
      %v4091 = vadd.f32 0.0, %v4090
      %v4092 = vpop.f32.mrb[0].mxu0
      %4093 = vmatprep.mubr.f32.mxu0 0.0
      %4094 = vmatmul.mubr.f32.gmra.mrb[0].mxu0 %v3940
      %v4095 = vpop.f32.mrb[0].mxu0
      %v4096 = vadd.f32 0.0, %v4095
      %v4097 = vpop.f32.mrb[0].mxu0
      %4098 = vmatprep.mubr.f32.mxu0 0.0
      %4099 = vmatmul.mubr.f32.gmra.mrb[0].mxu0 %v3943
      %v4100 = vpop.f32.mrb[0].mxu0
      %v4101 = vadd.f32 0.0, %v4100
      %v4102 = vpop.f32.mrb[0].mxu0
      %4103 = vmatprep.mubr.f32.mxu0 0.0
      %4104 = vmatmul.mubr.f32.gmra.mrb[0].mxu0 %v3946
      %v4105 = vpop.f32.mrb[0].mxu0
      %v4106 = vadd.f32 0.0, %v4105
      %v4107 = vpop.f32.mrb[0].mxu0
      %4108 = vmatprep.mubr.f32.mxu0 0.0
      %4109 = vmatmul.mubr.f32.gmra.mrb[0].mxu0 %v3949
      %v4110 = vpop.f32.mrb[0].mxu0
      %v4111 = vadd.f32 0.0, %v4110
      %v4112 = vpop.f32.mrb[0].mxu0
      %4113 = vmatprep.mubr.f32.mxu0 0.0
      %4114 = vmatmul.mubr.f32.gmra.mrb[0].mxu0 %v3952
      %v4115 = vpop.f32.mrb[0].mxu0
      %v4116 = vadd.f32 0.0, %v4115
      %v4117 = vpop.f32.mrb[0].mxu0
      %4118 = vmatprep.mubr.f32.mxu0 0.0
      %4119 = vmatmul.mubr.f32.gmra.mrb[0].mxu0 %v3955
      %v4120 = vpop.f32.mrb[0].mxu0
      %v4121 = vadd.f32 0.0, %v4120
      %v4122 = vpop.f32.mrb[0].mxu0
      %4123 = vmatprep.mubr.f32.mxu0 0.0
      %4124 = vmatmul.mubr.f32.gmra.mrb[0].mxu0 %v3958
      %v4125 = vpop.f32.mrb[0].mxu0
      %v4126 = vadd.f32 0.0, %v4125
      %v4127 = vpop.f32.mrb[0].mxu0
      %4128 = vmatprep.mubr.f32.mxu0 0.0
      %4129 = vmatmul.mubr.f32.gmra.mrb[0].mxu0 %v3961
      %v4130 = vpop.f32.mrb[0].mxu0
      %v4131 = vadd.f32 0.0, %v4130
      %v4132 = vpop.f32.mrb[0].mxu0
      %4133 = vmatprep.mubr.f32.mxu0 0.0
      %4134 = vmatmul.mubr.f32.gmra.mrb[0].mxu0 %v3964
      %v4135 = vpop.f32.mrb[0].mxu0
      %v4136 = vadd.f32 0.0, %v4135
      %v4137 = vpop.f32.mrb[0].mxu0
      %4138 = vmatprep.mubr.f32.mxu0 0.0
      %4139 = vmatmul.mubr.f32.gmra.mrb[0].mxu0 %v3967
      %v4140 = vpop.f32.mrb[0].mxu0
      %v4141 = vadd.f32 0.0, %v4140
      %v4142 = vpop.f32.mrb[0].mxu0
      %4143 = vmatprep.mubr.f32.mxu0 0.0
      %4144 = vmatmul.mubr.f32.gmra.mrb[0].mxu0 %v3970
      %v4145 = vpop.f32.mrb[0].mxu0
      %v4146 = vadd.f32 0.0, %v4145
      %v4147 = vpop.f32.mrb[0].mxu0
      %4148 = vmatprep.mubr.f32.mxu0 0.0
      %4149 = vmatmul.mubr.f32.gmra.mrb[0].mxu0 %v3973
      %v4150 = vpop.f32.mrb[0].mxu0
      %v4151 = vadd.f32 0.0, %v4150
      %v4152 = vpop.f32.mrb[0].mxu0
      %4153 = vmatprep.mubr.f32.mxu0 0.0
      %4154 = vmatmul.mubr.f32.gmra.mrb[0].mxu0 %v3976
      %v4155 = vpop.f32.mrb[0].mxu0
      %v4156 = vadd.f32 0.0, %v4155
      %v4157 = vpop.f32.mrb[0].mxu0
      %4158 = vmatprep.mubr.f32.mxu0 0.0
      %4159 = vmatmul.mubr.f32.gmra.mrb[0].mxu0 %v3979
      %v4160 = vpop.f32.mrb[0].mxu0
      %v4161 = vadd.f32 0.0, %v4160
      %v4162 = vpop.f32.mrb[0].mxu0
      %4163 = vmatprep.mubr.f32.mxu0 0.0
      %4164 = vmatmul.mubr.f32.gmra.mrb[0].mxu0 %v3982
      %v4165 = vpop.f32.mrb[0].mxu0
      %v4166 = vadd.f32 0.0, %v4165
      %v4167 = vpop.f32.mrb[0].mxu0
      %4168 = vdwg.mxu0
      %v4169 = vadd.f32 %v3862, %v4051
      %v4170 = vadd.f32 %v3863, %v4056
      %v4171 = vadd.f32 %v3864, %v4061
      %v4172 = vadd.f32 %v3865, %v4066
      %v4173 = vadd.f32 %v3866, %v4071
      %v4174 = vadd.f32 %v3867, %v4076
      %v4175 = vadd.f32 %v3868, %v4081
      %v4176 = vadd.f32 %v3869, %v4086
      %v4177 = vadd.f32 %v3870, %v4091
      %v4178 = vadd.f32 %v3871, %v4096
      %v4179 = vadd.f32 %v3872, %v4101
      %v4180 = vadd.f32 %v3873, %v4106
      %v4181 = vadd.f32 %v3874, %v4111
      %v4182 = vadd.f32 %v3875, %v4116
      %v4183 = vadd.f32 %v3876, %v4121
      %v4184 = vadd.f32 %v3877, %v4126
      %v4185 = vadd.f32 %v3878, %v4131
      %v4186 = vadd.f32 %v3879, %v4136
      %v4187 = vadd.f32 %v3880, %v4141
      %v4188 = vadd.f32 %v3881, %v4146
      %v4189 = vadd.f32 %v3882, %v4151
      %v4190 = vadd.f32 %v3883, %v4156
      %v4191 = vadd.f32 %v3884, %v4161
      %v4192 = vadd.f32 %v3885, %v4166
      %v4193 = vld [vmem:[#allocation2 + $0x2] sm:$0xff]
      %v4194 = vld [vmem:[#allocation2 + $0xa] sm:$0xff]
      %v4195 = vld [vmem:[#allocation2 + $0x12] sm:$0xff]
      %v4196 = vld [vmem:[#allocation2 + $0x1a] sm:$0xff]
      %v4197 = vld [vmem:[#allocation2 + $0x22] sm:$0xff]
      %v4198 = vld [vmem:[#allocation2 + $0x2a] sm:$0xff]
      %v4199 = vld [vmem:[#allocation2 + $0x32] sm:$0xff]
      %v4200 = vld [vmem:[#allocation2 + $0x3a] sm:$0xff]
      %v4201 = vld [vmem:[#allocation2 + $0x42] sm:$0xff]
      %v4202 = vld [vmem:[#allocation2 + $0x4a] sm:$0xff]
      %v4203 = vld [vmem:[#allocation2 + $0x52] sm:$0xff]
      %v4204 = vld [vmem:[#allocation2 + $0x5a] sm:$0xff]
      %v4205 = vld [vmem:[#allocation2 + $0x62] sm:$0xff]
      %v4206 = vld [vmem:[#allocation2 + $0x6a] sm:$0xff]
      %v4207 = vld [vmem:[#allocation2 + $0x72] sm:$0xff]
      %v4208 = vld [vmem:[#allocation2 + $0x7a] sm:$0xff]
      %v4209 = vld [vmem:[#allocation2 + $0x82] sm:$0xff]
      %v4210 = vld [vmem:[#allocation2 + $0x8a] sm:$0xff]
      %v4211 = vld [vmem:[#allocation2 + $0x92] sm:$0xff]
      %v4212 = vld [vmem:[#allocation2 + $0x9a] sm:$0xff]
      %v4213 = vld [vmem:[#allocation2 + $0xa2] sm:$0xff]
      %v4214 = vld [vmem:[#allocation2 + $0xaa] sm:$0xff]
      %v4215 = vld [vmem:[#allocation2 + $0xb2] sm:$0xff]
      %v4216 = vld [vmem:[#allocation2 + $0xba] sm:$0xff]
      %s4217 = scalar_lea.vmem %s3, 16
      %v4218 = vld [vmem:[%s4217] sm:$0xff]
      %v4220 = vsel %vm3542, %v4193, 0
      %v4223 = vsel %vm3542, %v4194, 0
      %v4226 = vsel %vm3542, %v4195, 0
      %v4229 = vsel %vm3542, %v4196, 0
      %v4232 = vsel %vm3542, %v4197, 0
      %v4235 = vsel %vm3542, %v4198, 0
      %v4238 = vsel %vm3542, %v4199, 0
      %v4241 = vsel %vm3542, %v4200, 0
      %v4244 = vsel %vm3542, %v4201, 0
      %v4247 = vsel %vm3542, %v4202, 0
      %v4250 = vsel %vm3542, %v4203, 0
      %v4253 = vsel %vm3542, %v4204, 0
      %v4256 = vsel %vm3542, %v4205, 0
      %v4259 = vsel %vm3542, %v4206, 0
      %v4262 = vsel %vm3542, %v4207, 0
      %v4265 = vsel %vm3542, %v4208, 0
      %v4268 = vsel %vm3542, %v4209, 0
      %v4271 = vsel %vm3542, %v4210, 0
      %v4274 = vsel %vm3542, %v4211, 0
      %v4277 = vsel %vm3542, %v4212, 0
      %v4280 = vsel %vm3542, %v4213, 0
      %v4283 = vsel %vm3542, %v4214, 0
      %v4286 = vsel %vm3542, %v4215, 0
      %v4289 = vsel %vm3542, %v4216, 0
      %4291 = vmatprep.subr.mxu0 0.0
      %4292 = vmatpush1.msra.mxu0 %v4218
      %4293 = vmatprep.subr.mxu0 0.0
      %4294 = vmatpush1.msra.mxu0 0.0
      %4295 = vmatprep.subr.mxu0 0.0
      %4296 = vmatpush1.msra.mxu0 0.0
      %4297 = vmatprep.subr.mxu0 0.0
      %4298 = vmatpush1.msra.mxu0 0.0
      %4299 = vmatprep.subr.mxu0 0.0
      %4300 = vmatpush1.msra.mxu0 0.0
      %4301 = vmatprep.subr.mxu0 0.0
      %4302 = vmatpush1.msra.mxu0 0.0
      %4303 = vmatprep.subr.mxu0 0.0
      %4304 = vmatpush1.msra.mxu0 0.0
      %4305 = vmatprep.subr.mxu0 0.0
      %4306 = vmatpush1.msra.mxu0 0.0
      %4307 = vmatprep.subr.mxu0 0.0
      %4308 = vmatpush1.msra.mxu0 0.0
      %4309 = vmatprep.subr.mxu0 0.0
      %4310 = vmatpush1.msra.mxu0 0.0
      %4311 = vmatprep.subr.mxu0 0.0
      %4312 = vmatpush1.msra.mxu0 0.0
      %4313 = vmatprep.subr.mxu0 0.0
      %4314 = vmatpush1.msra.mxu0 0.0
      %4315 = vmatprep.subr.mxu0 0.0
      %4316 = vmatpush1.msra.mxu0 0.0
      %4317 = vmatprep.subr.mxu0 0.0
      %4318 = vmatpush1.msra.mxu0 0.0
      %4319 = vmatprep.subr.mxu0 0.0
      %4320 = vmatpush1.msra.mxu0 0.0
      %4321 = vmatprep.subr.mxu0 0.0
      %4322 = vmatpush1.msra.mxu0 0.0
      %4323 = vmatprep.subr.mxu0 0.0
      %4324 = vmatpush1.msra.mxu0 0.0
      %4325 = vmatprep.subr.mxu0 0.0
      %4326 = vmatpush1.msra.mxu0 0.0
      %4327 = vmatprep.subr.mxu0 0.0
      %4328 = vmatpush1.msra.mxu0 0.0
      %4329 = vmatprep.subr.mxu0 0.0
      %4330 = vmatpush1.msra.mxu0 0.0
      %4331 = vmatprep.subr.mxu0 0.0
      %4332 = vmatpush1.msra.mxu0 0.0
      %4333 = vmatprep.subr.mxu0 0.0
      %4334 = vmatpush1.msra.mxu0 0.0
      %4335 = vmatprep.subr.mxu0 0.0
      %4336 = vmatpush1.msra.mxu0 0.0
      %4337 = vmatprep.subr.mxu0 0.0
      %4338 = vmatpush1.msra.mxu0 0.0
      %4339 = vmatprep.subr.mxu0 0.0
      %4340 = vmatpush1.msra.mxu0 0.0
      %4341 = vmatprep.subr.mxu0 0.0
      %4342 = vmatpush1.msra.mxu0 0.0
      %4343 = vmatprep.subr.mxu0 0.0
      %4344 = vmatpush1.msra.mxu0 0.0
      %4345 = vmatprep.subr.mxu0 0.0
      %4346 = vmatpush1.msra.mxu0 0.0
      %4347 = vmatprep.subr.mxu0 0.0
      %4348 = vmatpush1.msra.mxu0 0.0
      %4349 = vmatprep.subr.mxu0 0.0
      %4350 = vmatpush1.msra.mxu0 0.0
      %4351 = vmatprep.subr.mxu0 0.0
      %4352 = vmatpush1.msra.mxu0 0.0
      %4353 = vmatprep.subr.mxu0 0.0
      %4354 = vmatpush1.msra.mxu0 0.0
      %4355 = vmatprep.mubr.f32.mxu0 0.0
      %4356 = vmatmul.mubr.f32.gmra.mrb[0].mxu0 %v4220
      %v4357 = vpop.f32.mrb[0].mxu0
      %v4358 = vadd.f32 0.0, %v4357
      %v4359 = vpop.f32.mrb[0].mxu0
      %4360 = vmatprep.mubr.f32.mxu0 0.0
      %4361 = vmatmul.mubr.f32.gmra.mrb[0].mxu0 %v4223
      %v4362 = vpop.f32.mrb[0].mxu0
      %v4363 = vadd.f32 0.0, %v4362
      %v4364 = vpop.f32.mrb[0].mxu0
      %4365 = vmatprep.mubr.f32.mxu0 0.0
      %4366 = vmatmul.mubr.f32.gmra.mrb[0].mxu0 %v4226
      %v4367 = vpop.f32.mrb[0].mxu0
      %v4368 = vadd.f32 0.0, %v4367
      %v4369 = vpop.f32.mrb[0].mxu0
      %4370 = vmatprep.mubr.f32.mxu0 0.0
      %4371 = vmatmul.mubr.f32.gmra.mrb[0].mxu0 %v4229
      %v4372 = vpop.f32.mrb[0].mxu0
      %v4373 = vadd.f32 0.0, %v4372
      %v4374 = vpop.f32.mrb[0].mxu0
      %4375 = vmatprep.mubr.f32.mxu0 0.0
      %4376 = vmatmul.mubr.f32.gmra.mrb[0].mxu0 %v4232
      %v4377 = vpop.f32.mrb[0].mxu0
      %v4378 = vadd.f32 0.0, %v4377
      %v4379 = vpop.f32.mrb[0].mxu0
      %4380 = vmatprep.mubr.f32.mxu0 0.0
      %4381 = vmatmul.mubr.f32.gmra.mrb[0].mxu0 %v4235
      %v4382 = vpop.f32.mrb[0].mxu0
      %v4383 = vadd.f32 0.0, %v4382
      %v4384 = vpop.f32.mrb[0].mxu0
      %4385 = vmatprep.mubr.f32.mxu0 0.0
      %4386 = vmatmul.mubr.f32.gmra.mrb[0].mxu0 %v4238
      %v4387 = vpop.f32.mrb[0].mxu0
      %v4388 = vadd.f32 0.0, %v4387
      %v4389 = vpop.f32.mrb[0].mxu0
      %4390 = vmatprep.mubr.f32.mxu0 0.0
      %4391 = vmatmul.mubr.f32.gmra.mrb[0].mxu0 %v4241
      %v4392 = vpop.f32.mrb[0].mxu0
      %v4393 = vadd.f32 0.0, %v4392
      %v4394 = vpop.f32.mrb[0].mxu0
      %4395 = vmatprep.mubr.f32.mxu0 0.0
      %4396 = vmatmul.mubr.f32.gmra.mrb[0].mxu0 %v4244
      %v4397 = vpop.f32.mrb[0].mxu0
      %v4398 = vadd.f32 0.0, %v4397
      %v4399 = vpop.f32.mrb[0].mxu0
      %4400 = vmatprep.mubr.f32.mxu0 0.0
      %4401 = vmatmul.mubr.f32.gmra.mrb[0].mxu0 %v4247
      %v4402 = vpop.f32.mrb[0].mxu0
      %v4403 = vadd.f32 0.0, %v4402
      %v4404 = vpop.f32.mrb[0].mxu0
      %4405 = vmatprep.mubr.f32.mxu0 0.0
      %4406 = vmatmul.mubr.f32.gmra.mrb[0].mxu0 %v4250
      %v4407 = vpop.f32.mrb[0].mxu0
      %v4408 = vadd.f32 0.0, %v4407
      %v4409 = vpop.f32.mrb[0].mxu0
      %4410 = vmatprep.mubr.f32.mxu0 0.0
      %4411 = vmatmul.mubr.f32.gmra.mrb[0].mxu0 %v4253
      %v4412 = vpop.f32.mrb[0].mxu0
      %v4413 = vadd.f32 0.0, %v4412
      %v4414 = vpop.f32.mrb[0].mxu0
      %4415 = vmatprep.mubr.f32.mxu0 0.0
      %4416 = vmatmul.mubr.f32.gmra.mrb[0].mxu0 %v4256
      %v4417 = vpop.f32.mrb[0].mxu0
      %v4418 = vadd.f32 0.0, %v4417
      %v4419 = vpop.f32.mrb[0].mxu0
      %4420 = vmatprep.mubr.f32.mxu0 0.0
      %4421 = vmatmul.mubr.f32.gmra.mrb[0].mxu0 %v4259
      %v4422 = vpop.f32.mrb[0].mxu0
      %v4423 = vadd.f32 0.0, %v4422
      %v4424 = vpop.f32.mrb[0].mxu0
      %4425 = vmatprep.mubr.f32.mxu0 0.0
      %4426 = vmatmul.mubr.f32.gmra.mrb[0].mxu0 %v4262
      %v4427 = vpop.f32.mrb[0].mxu0
      %v4428 = vadd.f32 0.0, %v4427
      %v4429 = vpop.f32.mrb[0].mxu0
      %4430 = vmatprep.mubr.f32.mxu0 0.0
      %4431 = vmatmul.mubr.f32.gmra.mrb[0].mxu0 %v4265
      %v4432 = vpop.f32.mrb[0].mxu0
      %v4433 = vadd.f32 0.0, %v4432
      %v4434 = vpop.f32.mrb[0].mxu0
      %4435 = vmatprep.mubr.f32.mxu0 0.0
      %4436 = vmatmul.mubr.f32.gmra.mrb[0].mxu0 %v4268
      %v4437 = vpop.f32.mrb[0].mxu0
      %v4438 = vadd.f32 0.0, %v4437
      %v4439 = vpop.f32.mrb[0].mxu0
      %4440 = vmatprep.mubr.f32.mxu0 0.0
      %4441 = vmatmul.mubr.f32.gmra.mrb[0].mxu0 %v4271
      %v4442 = vpop.f32.mrb[0].mxu0
      %v4443 = vadd.f32 0.0, %v4442
      %v4444 = vpop.f32.mrb[0].mxu0
      %4445 = vmatprep.mubr.f32.mxu0 0.0
      %4446 = vmatmul.mubr.f32.gmra.mrb[0].mxu0 %v4274
      %v4447 = vpop.f32.mrb[0].mxu0
      %v4448 = vadd.f32 0.0, %v4447
      %v4449 = vpop.f32.mrb[0].mxu0
      %4450 = vmatprep.mubr.f32.mxu0 0.0
      %4451 = vmatmul.mubr.f32.gmra.mrb[0].mxu0 %v4277
      %v4452 = vpop.f32.mrb[0].mxu0
      %v4453 = vadd.f32 0.0, %v4452
      %v4454 = vpop.f32.mrb[0].mxu0
      %4455 = vmatprep.mubr.f32.mxu0 0.0
      %4456 = vmatmul.mubr.f32.gmra.mrb[0].mxu0 %v4280
      %v4457 = vpop.f32.mrb[0].mxu0
      %v4458 = vadd.f32 0.0, %v4457
      %v4459 = vpop.f32.mrb[0].mxu0
      %4460 = vmatprep.mubr.f32.mxu0 0.0
      %4461 = vmatmul.mubr.f32.gmra.mrb[0].mxu0 %v4283
      %v4462 = vpop.f32.mrb[0].mxu0
      %v4463 = vadd.f32 0.0, %v4462
      %v4464 = vpop.f32.mrb[0].mxu0
      %4465 = vmatprep.mubr.f32.mxu0 0.0
      %4466 = vmatmul.mubr.f32.gmra.mrb[0].mxu0 %v4286
      %v4467 = vpop.f32.mrb[0].mxu0
      %v4468 = vadd.f32 0.0, %v4467
      %v4469 = vpop.f32.mrb[0].mxu0
      %4470 = vmatprep.mubr.f32.mxu0 0.0
      %4471 = vmatmul.mubr.f32.gmra.mrb[0].mxu0 %v4289
      %v4472 = vpop.f32.mrb[0].mxu0
      %v4473 = vadd.f32 0.0, %v4472
      %v4474 = vpop.f32.mrb[0].mxu0
      %4475 = vdwg.mxu0
      %v4476 = vadd.f32 %v4169, %v4358
      %v4477 = vadd.f32 %v4170, %v4363
      %v4478 = vadd.f32 %v4171, %v4368
      %v4479 = vadd.f32 %v4172, %v4373
      %v4480 = vadd.f32 %v4173, %v4378
      %v4481 = vadd.f32 %v4174, %v4383
      %v4482 = vadd.f32 %v4175, %v4388
      %v4483 = vadd.f32 %v4176, %v4393
      %v4484 = vadd.f32 %v4177, %v4398
      %v4485 = vadd.f32 %v4178, %v4403
      %v4486 = vadd.f32 %v4179, %v4408
      %v4487 = vadd.f32 %v4180, %v4413
      %v4488 = vadd.f32 %v4181, %v4418
      %v4489 = vadd.f32 %v4182, %v4423
      %v4490 = vadd.f32 %v4183, %v4428
      %v4491 = vadd.f32 %v4184, %v4433
      %v4492 = vadd.f32 %v4185, %v4438
      %v4493 = vadd.f32 %v4186, %v4443
      %v4494 = vadd.f32 %v4187, %v4448
      %v4495 = vadd.f32 %v4188, %v4453
      %v4496 = vadd.f32 %v4189, %v4458
      %v4497 = vadd.f32 %v4190, %v4463
      %v4498 = vadd.f32 %v4191, %v4468
      %v4499 = vadd.f32 %v4192, %v4473
      %v4500 = vld [vmem:[#allocation2 + $0x10] sm:$0xff]
      %v4501 = vld [vmem:[#allocation2 + $0x18] sm:$0xff]
      %v4502 = vld [vmem:[#allocation2 + $0x20] sm:$0xff]
      %v4503 = vld [vmem:[#allocation2 + $0x28] sm:$0xff]
      %v4504 = vld [vmem:[#allocation2 + $0x30] sm:$0xff]
      %v4505 = vld [vmem:[#allocation2 + $0x38] sm:$0xff]
      %v4506 = vld [vmem:[#allocation2 + $0x40] sm:$0xff]
      %v4507 = vld [vmem:[#allocation2 + $0x48] sm:$0xff]
      %v4508 = vld [vmem:[#allocation2 + $0x50] sm:$0xff]
      %v4509 = vld [vmem:[#allocation2 + $0x58] sm:$0xff]
      %v4510 = vld [vmem:[#allocation2 + $0x60] sm:$0xff]
      %v4511 = vld [vmem:[#allocation2 + $0x68] sm:$0xff]
      %v4512 = vld [vmem:[#allocation2 + $0x70] sm:$0xff]
      %v4513 = vld [vmem:[#allocation2 + $0x78] sm:$0xff]
      %v4514 = vld [vmem:[#allocation2 + $0x80] sm:$0xff]
      %v4515 = vld [vmem:[#allocation2 + $0x88] sm:$0xff]
      %v4516 = vld [vmem:[#allocation2 + $0x90] sm:$0xff]
      %v4517 = vld [vmem:[#allocation2 + $0x98] sm:$0xff]
      %v4518 = vld [vmem:[#allocation2 + $0xa0] sm:$0xff]
      %v4519 = vld [vmem:[#allocation2 + $0xa8] sm:$0xff]
      %v4520 = vld [vmem:[#allocation2 + $0xb0] sm:$0xff]
      %v4521 = vld [vmem:[#allocation2 + $0xb8] sm:$0xff]
      %v4522 = vld [vmem:[#allocation2 + $0xc0] sm:$0xff]
      %v4523 = vld [vmem:[#allocation2 + $0xc8] sm:$0xff]
      %s4524 = scalar_lea.vmem %s3, 24
      %v4525 = vld [vmem:[%s4524] sm:$0xff]
      %v4527 = vsel %vm3542, %v4500, 0
      %v4530 = vsel %vm3542, %v4501, 0
      %v4533 = vsel %vm3542, %v4502, 0
      %v4536 = vsel %vm3542, %v4503, 0
      %v4539 = vsel %vm3542, %v4504, 0
      %v4542 = vsel %vm3542, %v4505, 0
      %v4545 = vsel %vm3542, %v4506, 0
      %v4548 = vsel %vm3542, %v4507, 0
      %v4551 = vsel %vm3542, %v4508, 0
      %v4554 = vsel %vm3542, %v4509, 0
      %v4557 = vsel %vm3542, %v4510, 0
      %v4560 = vsel %vm3542, %v4511, 0
      %v4563 = vsel %vm3542, %v4512, 0
      %v4566 = vsel %vm3542, %v4513, 0
      %v4569 = vsel %vm3542, %v4514, 0
      %v4572 = vsel %vm3542, %v4515, 0
      %v4575 = vsel %vm3542, %v4516, 0
      %v4578 = vsel %vm3542, %v4517, 0
      %v4581 = vsel %vm3542, %v4518, 0
      %v4584 = vsel %vm3542, %v4519, 0
      %v4587 = vsel %vm3542, %v4520, 0
      %v4590 = vsel %vm3542, %v4521, 0
      %v4593 = vsel %vm3542, %v4522, 0
      %v4596 = vsel %vm3542, %v4523, 0
      %4598 = vmatprep.subr.mxu0 0.0
      %4599 = vmatpush1.msra.mxu0 %v4525
      %4600 = vmatprep.subr.mxu0 0.0
      %4601 = vmatpush1.msra.mxu0 0.0
      %4602 = vmatprep.subr.mxu0 0.0
      %4603 = vmatpush1.msra.mxu0 0.0
      %4604 = vmatprep.subr.mxu0 0.0
      %4605 = vmatpush1.msra.mxu0 0.0
      %4606 = vmatprep.subr.mxu0 0.0
      %4607 = vmatpush1.msra.mxu0 0.0
      %4608 = vmatprep.subr.mxu0 0.0
      %4609 = vmatpush1.msra.mxu0 0.0
      %4610 = vmatprep.subr.mxu0 0.0
      %4611 = vmatpush1.msra.mxu0 0.0
      %4612 = vmatprep.subr.mxu0 0.0
      %4613 = vmatpush1.msra.mxu0 0.0
      %4614 = vmatprep.subr.mxu0 0.0
      %4615 = vmatpush1.msra.mxu0 0.0
      %4616 = vmatprep.subr.mxu0 0.0
      %4617 = vmatpush1.msra.mxu0 0.0
      %4618 = vmatprep.subr.mxu0 0.0
      %4619 = vmatpush1.msra.mxu0 0.0
      %4620 = vmatprep.subr.mxu0 0.0
      %4621 = vmatpush1.msra.mxu0 0.0
      %4622 = vmatprep.subr.mxu0 0.0
      %4623 = vmatpush1.msra.mxu0 0.0
      %4624 = vmatprep.subr.mxu0 0.0
      %4625 = vmatpush1.msra.mxu0 0.0
      %4626 = vmatprep.subr.mxu0 0.0
      %4627 = vmatpush1.msra.mxu0 0.0
      %4628 = vmatprep.subr.mxu0 0.0
      %4629 = vmatpush1.msra.mxu0 0.0
      %4630 = vmatprep.subr.mxu0 0.0
      %4631 = vmatpush1.msra.mxu0 0.0
      %4632 = vmatprep.subr.mxu0 0.0
      %4633 = vmatpush1.msra.mxu0 0.0
      %4634 = vmatprep.subr.mxu0 0.0
      %4635 = vmatpush1.msra.mxu0 0.0
      %4636 = vmatprep.subr.mxu0 0.0
      %4637 = vmatpush1.msra.mxu0 0.0
      %4638 = vmatprep.subr.mxu0 0.0
      %4639 = vmatpush1.msra.mxu0 0.0
      %4640 = vmatprep.subr.mxu0 0.0
      %4641 = vmatpush1.msra.mxu0 0.0
      %4642 = vmatprep.subr.mxu0 0.0
      %4643 = vmatpush1.msra.mxu0 0.0
      %4644 = vmatprep.subr.mxu0 0.0
      %4645 = vmatpush1.msra.mxu0 0.0
      %4646 = vmatprep.subr.mxu0 0.0
      %4647 = vmatpush1.msra.mxu0 0.0
      %4648 = vmatprep.subr.mxu0 0.0
      %4649 = vmatpush1.msra.mxu0 0.0
      %4650 = vmatprep.subr.mxu0 0.0
      %4651 = vmatpush1.msra.mxu0 0.0
      %4652 = vmatprep.subr.mxu0 0.0
      %4653 = vmatpush1.msra.mxu0 0.0
      %4654 = vmatprep.subr.mxu0 0.0
      %4655 = vmatpush1.msra.mxu0 0.0
      %4656 = vmatprep.subr.mxu0 0.0
      %4657 = vmatpush1.msra.mxu0 0.0
      %4658 = vmatprep.subr.mxu0 0.0
      %4659 = vmatpush1.msra.mxu0 0.0
      %4660 = vmatprep.subr.mxu0 0.0
      %4661 = vmatpush1.msra.mxu0 0.0
      %4662 = vmatprep.mubr.f32.mxu0 0.0
      %4663 = vmatmul.mubr.f32.gmra.mrb[0].mxu0 %v4527
      %v4664 = vpop.f32.mrb[0].mxu0
      %v4665 = vadd.f32 0.0, %v4664
      %v4666 = vpop.f32.mrb[0].mxu0
      %4667 = vmatprep.mubr.f32.mxu0 0.0
      %4668 = vmatmul.mubr.f32.gmra.mrb[0].mxu0 %v4530
      %v4669 = vpop.f32.mrb[0].mxu0
      %v4670 = vadd.f32 0.0, %v4669
      %v4671 = vpop.f32.mrb[0].mxu0
      %4672 = vmatprep.mubr.f32.mxu0 0.0
      %4673 = vmatmul.mubr.f32.gmra.mrb[0].mxu0 %v4533
      %v4674 = vpop.f32.mrb[0].mxu0
      %v4675 = vadd.f32 0.0, %v4674
      %v4676 = vpop.f32.mrb[0].mxu0
      %4677 = vmatprep.mubr.f32.mxu0 0.0
      %4678 = vmatmul.mubr.f32.gmra.mrb[0].mxu0 %v4536
      %v4679 = vpop.f32.mrb[0].mxu0
      %v4680 = vadd.f32 0.0, %v4679
      %v4681 = vpop.f32.mrb[0].mxu0
      %4682 = vmatprep.mubr.f32.mxu0 0.0
      %4683 = vmatmul.mubr.f32.gmra.mrb[0].mxu0 %v4539
      %v4684 = vpop.f32.mrb[0].mxu0
      %v4685 = vadd.f32 0.0, %v4684
      %v4686 = vpop.f32.mrb[0].mxu0
      %4687 = vmatprep.mubr.f32.mxu0 0.0
      %4688 = vmatmul.mubr.f32.gmra.mrb[0].mxu0 %v4542
      %v4689 = vpop.f32.mrb[0].mxu0
      %v4690 = vadd.f32 0.0, %v4689
      %v4691 = vpop.f32.mrb[0].mxu0
      %4692 = vmatprep.mubr.f32.mxu0 0.0
      %4693 = vmatmul.mubr.f32.gmra.mrb[0].mxu0 %v4545
      %v4694 = vpop.f32.mrb[0].mxu0
      %v4695 = vadd.f32 0.0, %v4694
      %v4696 = vpop.f32.mrb[0].mxu0
      %4697 = vmatprep.mubr.f32.mxu0 0.0
      %4698 = vmatmul.mubr.f32.gmra.mrb[0].mxu0 %v4548
      %v4699 = vpop.f32.mrb[0].mxu0
      %v4700 = vadd.f32 0.0, %v4699
      %v4701 = vpop.f32.mrb[0].mxu0
      %4702 = vmatprep.mubr.f32.mxu0 0.0
      %4703 = vmatmul.mubr.f32.gmra.mrb[0].mxu0 %v4551
      %v4704 = vpop.f32.mrb[0].mxu0
      %v4705 = vadd.f32 0.0, %v4704
      %v4706 = vpop.f32.mrb[0].mxu0
      %4707 = vmatprep.mubr.f32.mxu0 0.0
      %4708 = vmatmul.mubr.f32.gmra.mrb[0].mxu0 %v4554
      %v4709 = vpop.f32.mrb[0].mxu0
      %v4710 = vadd.f32 0.0, %v4709
      %v4711 = vpop.f32.mrb[0].mxu0
      %4712 = vmatprep.mubr.f32.mxu0 0.0
      %4713 = vmatmul.mubr.f32.gmra.mrb[0].mxu0 %v4557
      %v4714 = vpop.f32.mrb[0].mxu0
      %v4715 = vadd.f32 0.0, %v4714
      %v4716 = vpop.f32.mrb[0].mxu0
      %4717 = vmatprep.mubr.f32.mxu0 0.0
      %4718 = vmatmul.mubr.f32.gmra.mrb[0].mxu0 %v4560
      %v4719 = vpop.f32.mrb[0].mxu0
      %v4720 = vadd.f32 0.0, %v4719
      %v4721 = vpop.f32.mrb[0].mxu0
      %4722 = vmatprep.mubr.f32.mxu0 0.0
      %4723 = vmatmul.mubr.f32.gmra.mrb[0].mxu0 %v4563
      %v4724 = vpop.f32.mrb[0].mxu0
      %v4725 = vadd.f32 0.0, %v4724
      %v4726 = vpop.f32.mrb[0].mxu0
      %4727 = vmatprep.mubr.f32.mxu0 0.0
      %4728 = vmatmul.mubr.f32.gmra.mrb[0].mxu0 %v4566
      %v4729 = vpop.f32.mrb[0].mxu0
      %v4730 = vadd.f32 0.0, %v4729
      %v4731 = vpop.f32.mrb[0].mxu0
      %4732 = vmatprep.mubr.f32.mxu0 0.0
      %4733 = vmatmul.mubr.f32.gmra.mrb[0].mxu0 %v4569
      %v4734 = vpop.f32.mrb[0].mxu0
      %v4735 = vadd.f32 0.0, %v4734
      %v4736 = vpop.f32.mrb[0].mxu0
      %4737 = vmatprep.mubr.f32.mxu0 0.0
      %4738 = vmatmul.mubr.f32.gmra.mrb[0].mxu0 %v4572
      %v4739 = vpop.f32.mrb[0].mxu0
      %v4740 = vadd.f32 0.0, %v4739
      %v4741 = vpop.f32.mrb[0].mxu0
      %4742 = vmatprep.mubr.f32.mxu0 0.0
      %4743 = vmatmul.mubr.f32.gmra.mrb[0].mxu0 %v4575
      %v4744 = vpop.f32.mrb[0].mxu0
      %v4745 = vadd.f32 0.0, %v4744
      %v4746 = vpop.f32.mrb[0].mxu0
      %4747 = vmatprep.mubr.f32.mxu0 0.0
      %4748 = vmatmul.mubr.f32.gmra.mrb[0].mxu0 %v4578
      %v4749 = vpop.f32.mrb[0].mxu0
      %v4750 = vadd.f32 0.0, %v4749
      %v4751 = vpop.f32.mrb[0].mxu0
      %4752 = vmatprep.mubr.f32.mxu0 0.0
      %4753 = vmatmul.mubr.f32.gmra.mrb[0].mxu0 %v4581
      %v4754 = vpop.f32.mrb[0].mxu0
      %v4755 = vadd.f32 0.0, %v4754
      %v4756 = vpop.f32.mrb[0].mxu0
      %4757 = vmatprep.mubr.f32.mxu0 0.0
      %4758 = vmatmul.mubr.f32.gmra.mrb[0].mxu0 %v4584
      %v4759 = vpop.f32.mrb[0].mxu0
      %v4760 = vadd.f32 0.0, %v4759
      %v4761 = vpop.f32.mrb[0].mxu0
      %4762 = vmatprep.mubr.f32.mxu0 0.0
      %4763 = vmatmul.mubr.f32.gmra.mrb[0].mxu0 %v4587
      %v4764 = vpop.f32.mrb[0].mxu0
      %v4765 = vadd.f32 0.0, %v4764
      %v4766 = vpop.f32.mrb[0].mxu0
      %4767 = vmatprep.mubr.f32.mxu0 0.0
      %4768 = vmatmul.mubr.f32.gmra.mrb[0].mxu0 %v4590
      %v4769 = vpop.f32.mrb[0].mxu0
      %v4770 = vadd.f32 0.0, %v4769
      %v4771 = vpop.f32.mrb[0].mxu0
      %4772 = vmatprep.mubr.f32.mxu0 0.0
      %4773 = vmatmul.mubr.f32.gmra.mrb[0].mxu0 %v4593
      %v4774 = vpop.f32.mrb[0].mxu0
      %v4775 = vadd.f32 0.0, %v4774
      %v4776 = vpop.f32.mrb[0].mxu0
      %4777 = vmatprep.mubr.f32.mxu0 0.0
      %4778 = vmatmul.mubr.f32.gmra.mrb[0].mxu0 %v4596
      %v4779 = vpop.f32.mrb[0].mxu0
      %v4780 = vadd.f32 0.0, %v4779
      %v4781 = vpop.f32.mrb[0].mxu0
      %4782 = vdwg.mxu0
      %v4783 = vadd.f32 %v4476, %v4665
      %v4784 = vadd.f32 %v4477, %v4670
      %v4785 = vadd.f32 %v4478, %v4675
      %v4786 = vadd.f32 %v4479, %v4680
      %v4787 = vadd.f32 %v4480, %v4685
      %v4788 = vadd.f32 %v4481, %v4690
      %v4789 = vadd.f32 %v4482, %v4695
      %v4790 = vadd.f32 %v4483, %v4700
      %v4791 = vadd.f32 %v4484, %v4705
      %v4792 = vadd.f32 %v4485, %v4710
      %v4793 = vadd.f32 %v4486, %v4715
      %v4794 = vadd.f32 %v4487, %v4720
      %v4795 = vadd.f32 %v4488, %v4725
      %v4796 = vadd.f32 %v4489, %v4730
      %v4797 = vadd.f32 %v4490, %v4735
      %v4798 = vadd.f32 %v4491, %v4740
      %v4799 = vadd.f32 %v4492, %v4745
      %v4800 = vadd.f32 %v4493, %v4750
      %v4801 = vadd.f32 %v4494, %v4755
      %v4802 = vadd.f32 %v4495, %v4760
      %v4803 = vadd.f32 %v4496, %v4765
      %v4804 = vadd.f32 %v4497, %v4770
      %v4805 = vadd.f32 %v4498, %v4775
      %v4806 = vadd.f32 %v4499, %v4780
      %v4807 = vld [vmem:[#allocation2 + $0x11] sm:$0xff]
      %v4808 = vld [vmem:[#allocation2 + $0x19] sm:$0xff]
      %v4809 = vld [vmem:[#allocation2 + $0x21] sm:$0xff]
      %v4810 = vld [vmem:[#allocation2 + $0x29] sm:$0xff]
      %v4811 = vld [vmem:[#allocation2 + $0x31] sm:$0xff]
      %v4812 = vld [vmem:[#allocation2 + $0x39] sm:$0xff]
      %v4813 = vld [vmem:[#allocation2 + $0x41] sm:$0xff]
      %v4814 = vld [vmem:[#allocation2 + $0x49] sm:$0xff]
      %v4815 = vld [vmem:[#allocation2 + $0x51] sm:$0xff]
      %v4816 = vld [vmem:[#allocation2 + $0x59] sm:$0xff]
      %v4817 = vld [vmem:[#allocation2 + $0x61] sm:$0xff]
      %v4818 = vld [vmem:[#allocation2 + $0x69] sm:$0xff]
      %v4819 = vld [vmem:[#allocation2 + $0x71] sm:$0xff]
      %v4820 = vld [vmem:[#allocation2 + $0x79] sm:$0xff]
      %v4821 = vld [vmem:[#allocation2 + $0x81] sm:$0xff]
      %v4822 = vld [vmem:[#allocation2 + $0x89] sm:$0xff]
      %v4823 = vld [vmem:[#allocation2 + $0x91] sm:$0xff]
      %v4824 = vld [vmem:[#allocation2 + $0x99] sm:$0xff]
      %v4825 = vld [vmem:[#allocation2 + $0xa1] sm:$0xff]
      %v4826 = vld [vmem:[#allocation2 + $0xa9] sm:$0xff]
      %v4827 = vld [vmem:[#allocation2 + $0xb1] sm:$0xff]
      %v4828 = vld [vmem:[#allocation2 + $0xb9] sm:$0xff]
      %v4829 = vld [vmem:[#allocation2 + $0xc1] sm:$0xff]
      %v4830 = vld [vmem:[#allocation2 + $0xc9] sm:$0xff]
      %s4831 = scalar_lea.vmem %s3, 32
      %v4832 = vld [vmem:[%s4831] sm:$0xff]
      %v4834 = vsel %vm3542, %v4807, 0
      %v4837 = vsel %vm3542, %v4808, 0
      %v4840 = vsel %vm3542, %v4809, 0
      %v4843 = vsel %vm3542, %v4810, 0
      %v4846 = vsel %vm3542, %v4811, 0
      %v4849 = vsel %vm3542, %v4812, 0
      %v4852 = vsel %vm3542, %v4813, 0
      %v4855 = vsel %vm3542, %v4814, 0
      %v4858 = vsel %vm3542, %v4815, 0
      %v4861 = vsel %vm3542, %v4816, 0
      %v4864 = vsel %vm3542, %v4817, 0
      %v4867 = vsel %vm3542, %v4818, 0
      %v4870 = vsel %vm3542, %v4819, 0
      %v4873 = vsel %vm3542, %v4820, 0
      %v4876 = vsel %vm3542, %v4821, 0
      %v4879 = vsel %vm3542, %v4822, 0
      %v4882 = vsel %vm3542, %v4823, 0
      %v4885 = vsel %vm3542, %v4824, 0
      %v4888 = vsel %vm3542, %v4825, 0
      %v4891 = vsel %vm3542, %v4826, 0
      %v4894 = vsel %vm3542, %v4827, 0
      %v4897 = vsel %vm3542, %v4828, 0
      %v4900 = vsel %vm3542, %v4829, 0
      %v4903 = vsel %vm3542, %v4830, 0
      %4905 = vmatprep.subr.mxu0 0.0
      %4906 = vmatpush1.msra.mxu0 %v4832
      %4907 = vmatprep.subr.mxu0 0.0
      %4908 = vmatpush1.msra.mxu0 0.0
      %4909 = vmatprep.subr.mxu0 0.0
      %4910 = vmatpush1.msra.mxu0 0.0
      %4911 = vmatprep.subr.mxu0 0.0
      %4912 = vmatpush1.msra.mxu0 0.0
      %4913 = vmatprep.subr.mxu0 0.0
      %4914 = vmatpush1.msra.mxu0 0.0
      %4915 = vmatprep.subr.mxu0 0.0
      %4916 = vmatpush1.msra.mxu0 0.0
      %4917 = vmatprep.subr.mxu0 0.0
      %4918 = vmatpush1.msra.mxu0 0.0
      %4919 = vmatprep.subr.mxu0 0.0
      %4920 = vmatpush1.msra.mxu0 0.0
      %4921 = vmatprep.subr.mxu0 0.0
      %4922 = vmatpush1.msra.mxu0 0.0
      %4923 = vmatprep.subr.mxu0 0.0
      %4924 = vmatpush1.msra.mxu0 0.0
      %4925 = vmatprep.subr.mxu0 0.0
      %4926 = vmatpush1.msra.mxu0 0.0
      %4927 = vmatprep.subr.mxu0 0.0
      %4928 = vmatpush1.msra.mxu0 0.0
      %4929 = vmatprep.subr.mxu0 0.0
      %4930 = vmatpush1.msra.mxu0 0.0
      %4931 = vmatprep.subr.mxu0 0.0
      %4932 = vmatpush1.msra.mxu0 0.0
      %4933 = vmatprep.subr.mxu0 0.0
      %4934 = vmatpush1.msra.mxu0 0.0
      %4935 = vmatprep.subr.mxu0 0.0
      %4936 = vmatpush1.msra.mxu0 0.0
      %4937 = vmatprep.subr.mxu0 0.0
      %4938 = vmatpush1.msra.mxu0 0.0
      %4939 = vmatprep.subr.mxu0 0.0
      %4940 = vmatpush1.msra.mxu0 0.0
      %4941 = vmatprep.subr.mxu0 0.0
      %4942 = vmatpush1.msra.mxu0 0.0
      %4943 = vmatprep.subr.mxu0 0.0
      %4944 = vmatpush1.msra.mxu0 0.0
      %4945 = vmatprep.subr.mxu0 0.0
      %4946 = vmatpush1.msra.mxu0 0.0
      %4947 = vmatprep.subr.mxu0 0.0
      %4948 = vmatpush1.msra.mxu0 0.0
      %4949 = vmatprep.subr.mxu0 0.0
      %4950 = vmatpush1.msra.mxu0 0.0
      %4951 = vmatprep.subr.mxu0 0.0
      %4952 = vmatpush1.msra.mxu0 0.0
      %4953 = vmatprep.subr.mxu0 0.0
      %4954 = vmatpush1.msra.mxu0 0.0
      %4955 = vmatprep.subr.mxu0 0.0
      %4956 = vmatpush1.msra.mxu0 0.0
      %4957 = vmatprep.subr.mxu0 0.0
      %4958 = vmatpush1.msra.mxu0 0.0
      %4959 = vmatprep.subr.mxu0 0.0
      %4960 = vmatpush1.msra.mxu0 0.0
      %4961 = vmatprep.subr.mxu0 0.0
      %4962 = vmatpush1.msra.mxu0 0.0
      %4963 = vmatprep.subr.mxu0 0.0
      %4964 = vmatpush1.msra.mxu0 0.0
      %4965 = vmatprep.subr.mxu0 0.0
      %4966 = vmatpush1.msra.mxu0 0.0
      %4967 = vmatprep.subr.mxu0 0.0
      %4968 = vmatpush1.msra.mxu0 0.0
      %4969 = vmatprep.mubr.f32.mxu0 0.0
      %4970 = vmatmul.mubr.f32.gmra.mrb[0].mxu0 %v4834
      %v4971 = vpop.f32.mrb[0].mxu0
      %v4972 = vadd.f32 0.0, %v4971
      %v4973 = vpop.f32.mrb[0].mxu0
      %4974 = vmatprep.mubr.f32.mxu0 0.0
      %4975 = vmatmul.mubr.f32.gmra.mrb[0].mxu0 %v4837
      %v4976 = vpop.f32.mrb[0].mxu0
      %v4977 = vadd.f32 0.0, %v4976
      %v4978 = vpop.f32.mrb[0].mxu0
      %4979 = vmatprep.mubr.f32.mxu0 0.0
      %4980 = vmatmul.mubr.f32.gmra.mrb[0].mxu0 %v4840
      %v4981 = vpop.f32.mrb[0].mxu0
      %v4982 = vadd.f32 0.0, %v4981
      %v4983 = vpop.f32.mrb[0].mxu0
      %4984 = vmatprep.mubr.f32.mxu0 0.0
      %4985 = vmatmul.mubr.f32.gmra.mrb[0].mxu0 %v4843
      %v4986 = vpop.f32.mrb[0].mxu0
      %v4987 = vadd.f32 0.0, %v4986
      %v4988 = vpop.f32.mrb[0].mxu0
      %4989 = vmatprep.mubr.f32.mxu0 0.0
      %4990 = vmatmul.mubr.f32.gmra.mrb[0].mxu0 %v4846
      %v4991 = vpop.f32.mrb[0].mxu0
      %v4992 = vadd.f32 0.0, %v4991
      %v4993 = vpop.f32.mrb[0].mxu0
      %4994 = vmatprep.mubr.f32.mxu0 0.0
      %4995 = vmatmul.mubr.f32.gmra.mrb[0].mxu0 %v4849
      %v4996 = vpop.f32.mrb[0].mxu0
      %v4997 = vadd.f32 0.0, %v4996
      %v4998 = vpop.f32.mrb[0].mxu0
      %4999 = vmatprep.mubr.f32.mxu0 0.0
      %5000 = vmatmul.mubr.f32.gmra.mrb[0].mxu0 %v4852
      %v5001 = vpop.f32.mrb[0].mxu0
      %v5002 = vadd.f32 0.0, %v5001
      %v5003 = vpop.f32.mrb[0].mxu0
      %5004 = vmatprep.mubr.f32.mxu0 0.0
      %5005 = vmatmul.mubr.f32.gmra.mrb[0].mxu0 %v4855
      %v5006 = vpop.f32.mrb[0].mxu0
      %v5007 = vadd.f32 0.0, %v5006
      %v5008 = vpop.f32.mrb[0].mxu0
      %5009 = vmatprep.mubr.f32.mxu0 0.0
      %5010 = vmatmul.mubr.f32.gmra.mrb[0].mxu0 %v4858
      %v5011 = vpop.f32.mrb[0].mxu0
      %v5012 = vadd.f32 0.0, %v5011
      %v5013 = vpop.f32.mrb[0].mxu0
      %5014 = vmatprep.mubr.f32.mxu0 0.0
      %5015 = vmatmul.mubr.f32.gmra.mrb[0].mxu0 %v4861
      %v5016 = vpop.f32.mrb[0].mxu0
      %v5017 = vadd.f32 0.0, %v5016
      %v5018 = vpop.f32.mrb[0].mxu0
      %5019 = vmatprep.mubr.f32.mxu0 0.0
      %5020 = vmatmul.mubr.f32.gmra.mrb[0].mxu0 %v4864
      %v5021 = vpop.f32.mrb[0].mxu0
      %v5022 = vadd.f32 0.0, %v5021
      %v5023 = vpop.f32.mrb[0].mxu0
      %5024 = vmatprep.mubr.f32.mxu0 0.0
      %5025 = vmatmul.mubr.f32.gmra.mrb[0].mxu0 %v4867
      %v5026 = vpop.f32.mrb[0].mxu0
      %v5027 = vadd.f32 0.0, %v5026
      %v5028 = vpop.f32.mrb[0].mxu0
      %5029 = vmatprep.mubr.f32.mxu0 0.0
      %5030 = vmatmul.mubr.f32.gmra.mrb[0].mxu0 %v4870
      %v5031 = vpop.f32.mrb[0].mxu0
      %v5032 = vadd.f32 0.0, %v5031
      %v5033 = vpop.f32.mrb[0].mxu0
      %5034 = vmatprep.mubr.f32.mxu0 0.0
      %5035 = vmatmul.mubr.f32.gmra.mrb[0].mxu0 %v4873
      %v5036 = vpop.f32.mrb[0].mxu0
      %v5037 = vadd.f32 0.0, %v5036
      %v5038 = vpop.f32.mrb[0].mxu0
      %5039 = vmatprep.mubr.f32.mxu0 0.0
      %5040 = vmatmul.mubr.f32.gmra.mrb[0].mxu0 %v4876
      %v5041 = vpop.f32.mrb[0].mxu0
      %v5042 = vadd.f32 0.0, %v5041
      %v5043 = vpop.f32.mrb[0].mxu0
      %5044 = vmatprep.mubr.f32.mxu0 0.0
      %5045 = vmatmul.mubr.f32.gmra.mrb[0].mxu0 %v4879
      %v5046 = vpop.f32.mrb[0].mxu0
      %v5047 = vadd.f32 0.0, %v5046
      %v5048 = vpop.f32.mrb[0].mxu0
      %5049 = vmatprep.mubr.f32.mxu0 0.0
      %5050 = vmatmul.mubr.f32.gmra.mrb[0].mxu0 %v4882
      %v5051 = vpop.f32.mrb[0].mxu0
      %v5052 = vadd.f32 0.0, %v5051
      %v5053 = vpop.f32.mrb[0].mxu0
      %5054 = vmatprep.mubr.f32.mxu0 0.0
      %5055 = vmatmul.mubr.f32.gmra.mrb[0].mxu0 %v4885
      %v5056 = vpop.f32.mrb[0].mxu0
      %v5057 = vadd.f32 0.0, %v5056
      %v5058 = vpop.f32.mrb[0].mxu0
      %5059 = vmatprep.mubr.f32.mxu0 0.0
      %5060 = vmatmul.mubr.f32.gmra.mrb[0].mxu0 %v4888
      %v5061 = vpop.f32.mrb[0].mxu0
      %v5062 = vadd.f32 0.0, %v5061
      %v5063 = vpop.f32.mrb[0].mxu0
      %5064 = vmatprep.mubr.f32.mxu0 0.0
      %5065 = vmatmul.mubr.f32.gmra.mrb[0].mxu0 %v4891
      %v5066 = vpop.f32.mrb[0].mxu0
      %v5067 = vadd.f32 0.0, %v5066
      %v5068 = vpop.f32.mrb[0].mxu0
      %5069 = vmatprep.mubr.f32.mxu0 0.0
      %5070 = vmatmul.mubr.f32.gmra.mrb[0].mxu0 %v4894
      %v5071 = vpop.f32.mrb[0].mxu0
      %v5072 = vadd.f32 0.0, %v5071
      %v5073 = vpop.f32.mrb[0].mxu0
      %5074 = vmatprep.mubr.f32.mxu0 0.0
      %5075 = vmatmul.mubr.f32.gmra.mrb[0].mxu0 %v4897
      %v5076 = vpop.f32.mrb[0].mxu0
      %v5077 = vadd.f32 0.0, %v5076
      %v5078 = vpop.f32.mrb[0].mxu0
      %5079 = vmatprep.mubr.f32.mxu0 0.0
      %5080 = vmatmul.mubr.f32.gmra.mrb[0].mxu0 %v4900
      %v5081 = vpop.f32.mrb[0].mxu0
      %v5082 = vadd.f32 0.0, %v5081
      %v5083 = vpop.f32.mrb[0].mxu0
      %5084 = vmatprep.mubr.f32.mxu0 0.0
      %5085 = vmatmul.mubr.f32.gmra.mrb[0].mxu0 %v4903
      %v5086 = vpop.f32.mrb[0].mxu0
      %v5087 = vadd.f32 0.0, %v5086
      %v5088 = vpop.f32.mrb[0].mxu0
      %5089 = vdwg.mxu0
      %v5090 = vadd.f32 %v4783, %v4972
      %v5091 = vadd.f32 %v4784, %v4977
      %v5092 = vadd.f32 %v4785, %v4982
      %v5093 = vadd.f32 %v4786, %v4987
      %v5094 = vadd.f32 %v4787, %v4992
      %v5095 = vadd.f32 %v4788, %v4997
      %v5096 = vadd.f32 %v4789, %v5002
      %v5097 = vadd.f32 %v4790, %v5007
      %v5098 = vadd.f32 %v4791, %v5012
      %v5099 = vadd.f32 %v4792, %v5017
      %v5100 = vadd.f32 %v4793, %v5022
      %v5101 = vadd.f32 %v4794, %v5027
      %v5102 = vadd.f32 %v4795, %v5032
      %v5103 = vadd.f32 %v4796, %v5037
      %v5104 = vadd.f32 %v4797, %v5042
      %v5105 = vadd.f32 %v4798, %v5047
      %v5106 = vadd.f32 %v4799, %v5052
      %v5107 = vadd.f32 %v4800, %v5057
      %v5108 = vadd.f32 %v4801, %v5062
      %v5109 = vadd.f32 %v4802, %v5067
      %v5110 = vadd.f32 %v4803, %v5072
      %v5111 = vadd.f32 %v4804, %v5077
      %v5112 = vadd.f32 %v4805, %v5082
      %v5113 = vadd.f32 %v4806, %v5087
      %v5114 = vld [vmem:[#allocation2 + $0x12] sm:$0xff]
      %v5115 = vld [vmem:[#allocation2 + $0x1a] sm:$0xff]
      %v5116 = vld [vmem:[#allocation2 + $0x22] sm:$0xff]
      %v5117 = vld [vmem:[#allocation2 + $0x2a] sm:$0xff]
      %v5118 = vld [vmem:[#allocation2 + $0x32] sm:$0xff]
      %v5119 = vld [vmem:[#allocation2 + $0x3a] sm:$0xff]
      %v5120 = vld [vmem:[#allocation2 + $0x42] sm:$0xff]
      %v5121 = vld [vmem:[#allocation2 + $0x4a] sm:$0xff]
      %v5122 = vld [vmem:[#allocation2 + $0x52] sm:$0xff]
      %v5123 = vld [vmem:[#allocation2 + $0x5a] sm:$0xff]
      %v5124 = vld [vmem:[#allocation2 + $0x62] sm:$0xff]
      %v5125 = vld [vmem:[#allocation2 + $0x6a] sm:$0xff]
      %v5126 = vld [vmem:[#allocation2 + $0x72] sm:$0xff]
      %v5127 = vld [vmem:[#allocation2 + $0x7a] sm:$0xff]
      %v5128 = vld [vmem:[#allocation2 + $0x82] sm:$0xff]
      %v5129 = vld [vmem:[#allocation2 + $0x8a] sm:$0xff]
      %v5130 = vld [vmem:[#allocation2 + $0x92] sm:$0xff]
      %v5131 = vld [vmem:[#allocation2 + $0x9a] sm:$0xff]
      %v5132 = vld [vmem:[#allocation2 + $0xa2] sm:$0xff]
      %v5133 = vld [vmem:[#allocation2 + $0xaa] sm:$0xff]
      %v5134 = vld [vmem:[#allocation2 + $0xb2] sm:$0xff]
      %v5135 = vld [vmem:[#allocation2 + $0xba] sm:$0xff]
      %v5136 = vld [vmem:[#allocation2 + $0xc2] sm:$0xff]
      %v5137 = vld [vmem:[#allocation2 + $0xca] sm:$0xff]
      %s5138 = scalar_lea.vmem %s3, 40
      %v5139 = vld [vmem:[%s5138] sm:$0xff]
      %v5141 = vsel %vm3542, %v5114, 0
      %v5144 = vsel %vm3542, %v5115, 0
      %v5147 = vsel %vm3542, %v5116, 0
      %v5150 = vsel %vm3542, %v5117, 0
      %v5153 = vsel %vm3542, %v5118, 0
      %v5156 = vsel %vm3542, %v5119, 0
      %v5159 = vsel %vm3542, %v5120, 0
      %v5162 = vsel %vm3542, %v5121, 0
      %v5165 = vsel %vm3542, %v5122, 0
      %v5168 = vsel %vm3542, %v5123, 0
      %v5171 = vsel %vm3542, %v5124, 0
      %v5174 = vsel %vm3542, %v5125, 0
      %v5177 = vsel %vm3542, %v5126, 0
      %v5180 = vsel %vm3542, %v5127, 0
      %v5183 = vsel %vm3542, %v5128, 0
      %v5186 = vsel %vm3542, %v5129, 0
      %v5189 = vsel %vm3542, %v5130, 0
      %v5192 = vsel %vm3542, %v5131, 0
      %v5195 = vsel %vm3542, %v5132, 0
      %v5198 = vsel %vm3542, %v5133, 0
      %v5201 = vsel %vm3542, %v5134, 0
      %v5204 = vsel %vm3542, %v5135, 0
      %v5207 = vsel %vm3542, %v5136, 0
      %v5210 = vsel %vm3542, %v5137, 0
      %5212 = vmatprep.subr.mxu0 0.0
      %5213 = vmatpush1.msra.mxu0 %v5139
      %5214 = vmatprep.subr.mxu0 0.0
      %5215 = vmatpush1.msra.mxu0 0.0
      %5216 = vmatprep.subr.mxu0 0.0
      %5217 = vmatpush1.msra.mxu0 0.0
      %5218 = vmatprep.subr.mxu0 0.0
      %5219 = vmatpush1.msra.mxu0 0.0
      %5220 = vmatprep.subr.mxu0 0.0
      %5221 = vmatpush1.msra.mxu0 0.0
      %5222 = vmatprep.subr.mxu0 0.0
      %5223 = vmatpush1.msra.mxu0 0.0
      %5224 = vmatprep.subr.mxu0 0.0
      %5225 = vmatpush1.msra.mxu0 0.0
      %5226 = vmatprep.subr.mxu0 0.0
      %5227 = vmatpush1.msra.mxu0 0.0
      %5228 = vmatprep.subr.mxu0 0.0
      %5229 = vmatpush1.msra.mxu0 0.0
      %5230 = vmatprep.subr.mxu0 0.0
      %5231 = vmatpush1.msra.mxu0 0.0
      %5232 = vmatprep.subr.mxu0 0.0
      %5233 = vmatpush1.msra.mxu0 0.0
      %5234 = vmatprep.subr.mxu0 0.0
      %5235 = vmatpush1.msra.mxu0 0.0
      %5236 = vmatprep.subr.mxu0 0.0
      %5237 = vmatpush1.msra.mxu0 0.0
      %5238 = vmatprep.subr.mxu0 0.0
      %5239 = vmatpush1.msra.mxu0 0.0
      %5240 = vmatprep.subr.mxu0 0.0
      %5241 = vmatpush1.msra.mxu0 0.0
      %5242 = vmatprep.subr.mxu0 0.0
      %5243 = vmatpush1.msra.mxu0 0.0
      %5244 = vmatprep.subr.mxu0 0.0
      %5245 = vmatpush1.msra.mxu0 0.0
      %5246 = vmatprep.subr.mxu0 0.0
      %5247 = vmatpush1.msra.mxu0 0.0
      %5248 = vmatprep.subr.mxu0 0.0
      %5249 = vmatpush1.msra.mxu0 0.0
      %5250 = vmatprep.subr.mxu0 0.0
      %5251 = vmatpush1.msra.mxu0 0.0
      %5252 = vmatprep.subr.mxu0 0.0
      %5253 = vmatpush1.msra.mxu0 0.0
      %5254 = vmatprep.subr.mxu0 0.0
      %5255 = vmatpush1.msra.mxu0 0.0
      %5256 = vmatprep.subr.mxu0 0.0
      %5257 = vmatpush1.msra.mxu0 0.0
      %5258 = vmatprep.subr.mxu0 0.0
      %5259 = vmatpush1.msra.mxu0 0.0
      %5260 = vmatprep.subr.mxu0 0.0
      %5261 = vmatpush1.msra.mxu0 0.0
      %5262 = vmatprep.subr.mxu0 0.0
      %5263 = vmatpush1.msra.mxu0 0.0
      %5264 = vmatprep.subr.mxu0 0.0
      %5265 = vmatpush1.msra.mxu0 0.0
      %5266 = vmatprep.subr.mxu0 0.0
      %5267 = vmatpush1.msra.mxu0 0.0
      %5268 = vmatprep.subr.mxu0 0.0
      %5269 = vmatpush1.msra.mxu0 0.0
      %5270 = vmatprep.subr.mxu0 0.0
      %5271 = vmatpush1.msra.mxu0 0.0
      %5272 = vmatprep.subr.mxu0 0.0
      %5273 = vmatpush1.msra.mxu0 0.0
      %5274 = vmatprep.subr.mxu0 0.0
      %5275 = vmatpush1.msra.mxu0 0.0
      %5276 = vmatprep.mubr.f32.mxu0 0.0
      %5277 = vmatmul.mubr.f32.gmra.mrb[0].mxu0 %v5141
      %v5278 = vpop.f32.mrb[0].mxu0
      %v5279 = vadd.f32 0.0, %v5278
      %v5280 = vpop.f32.mrb[0].mxu0
      %5281 = vmatprep.mubr.f32.mxu0 0.0
      %5282 = vmatmul.mubr.f32.gmra.mrb[0].mxu0 %v5144
      %v5283 = vpop.f32.mrb[0].mxu0
      %v5284 = vadd.f32 0.0, %v5283
      %v5285 = vpop.f32.mrb[0].mxu0
      %5286 = vmatprep.mubr.f32.mxu0 0.0
      %5287 = vmatmul.mubr.f32.gmra.mrb[0].mxu0 %v5147
      %v5288 = vpop.f32.mrb[0].mxu0
      %v5289 = vadd.f32 0.0, %v5288
      %v5290 = vpop.f32.mrb[0].mxu0
      %5291 = vmatprep.mubr.f32.mxu0 0.0
      %5292 = vmatmul.mubr.f32.gmra.mrb[0].mxu0 %v5150
      %v5293 = vpop.f32.mrb[0].mxu0
      %v5294 = vadd.f32 0.0, %v5293
      %v5295 = vpop.f32.mrb[0].mxu0
      %5296 = vmatprep.mubr.f32.mxu0 0.0
      %5297 = vmatmul.mubr.f32.gmra.mrb[0].mxu0 %v5153
      %v5298 = vpop.f32.mrb[0].mxu0
      %v5299 = vadd.f32 0.0, %v5298
      %v5300 = vpop.f32.mrb[0].mxu0
      %5301 = vmatprep.mubr.f32.mxu0 0.0
      %5302 = vmatmul.mubr.f32.gmra.mrb[0].mxu0 %v5156
      %v5303 = vpop.f32.mrb[0].mxu0
      %v5304 = vadd.f32 0.0, %v5303
      %v5305 = vpop.f32.mrb[0].mxu0
      %5306 = vmatprep.mubr.f32.mxu0 0.0
      %5307 = vmatmul.mubr.f32.gmra.mrb[0].mxu0 %v5159
      %v5308 = vpop.f32.mrb[0].mxu0
      %v5309 = vadd.f32 0.0, %v5308
      %v5310 = vpop.f32.mrb[0].mxu0
      %5311 = vmatprep.mubr.f32.mxu0 0.0
      %5312 = vmatmul.mubr.f32.gmra.mrb[0].mxu0 %v5162
      %v5313 = vpop.f32.mrb[0].mxu0
      %v5314 = vadd.f32 0.0, %v5313
      %v5315 = vpop.f32.mrb[0].mxu0
      %5316 = vmatprep.mubr.f32.mxu0 0.0
      %5317 = vmatmul.mubr.f32.gmra.mrb[0].mxu0 %v5165
      %v5318 = vpop.f32.mrb[0].mxu0
      %v5319 = vadd.f32 0.0, %v5318
      %v5320 = vpop.f32.mrb[0].mxu0
      %5321 = vmatprep.mubr.f32.mxu0 0.0
      %5322 = vmatmul.mubr.f32.gmra.mrb[0].mxu0 %v5168
      %v5323 = vpop.f32.mrb[0].mxu0
      %v5324 = vadd.f32 0.0, %v5323
      %v5325 = vpop.f32.mrb[0].mxu0
      %5326 = vmatprep.mubr.f32.mxu0 0.0
      %5327 = vmatmul.mubr.f32.gmra.mrb[0].mxu0 %v5171
      %v5328 = vpop.f32.mrb[0].mxu0
      %v5329 = vadd.f32 0.0, %v5328
      %v5330 = vpop.f32.mrb[0].mxu0
      %5331 = vmatprep.mubr.f32.mxu0 0.0
      %5332 = vmatmul.mubr.f32.gmra.mrb[0].mxu0 %v5174
      %v5333 = vpop.f32.mrb[0].mxu0
      %v5334 = vadd.f32 0.0, %v5333
      %v5335 = vpop.f32.mrb[0].mxu0
      %5336 = vmatprep.mubr.f32.mxu0 0.0
      %5337 = vmatmul.mubr.f32.gmra.mrb[0].mxu0 %v5177
      %v5338 = vpop.f32.mrb[0].mxu0
      %v5339 = vadd.f32 0.0, %v5338
      %v5340 = vpop.f32.mrb[0].mxu0
      %5341 = vmatprep.mubr.f32.mxu0 0.0
      %5342 = vmatmul.mubr.f32.gmra.mrb[0].mxu0 %v5180
      %v5343 = vpop.f32.mrb[0].mxu0
      %v5344 = vadd.f32 0.0, %v5343
      %v5345 = vpop.f32.mrb[0].mxu0
      %5346 = vmatprep.mubr.f32.mxu0 0.0
      %5347 = vmatmul.mubr.f32.gmra.mrb[0].mxu0 %v5183
      %v5348 = vpop.f32.mrb[0].mxu0
      %v5349 = vadd.f32 0.0, %v5348
      %v5350 = vpop.f32.mrb[0].mxu0
      %5351 = vmatprep.mubr.f32.mxu0 0.0
      %5352 = vmatmul.mubr.f32.gmra.mrb[0].mxu0 %v5186
      %v5353 = vpop.f32.mrb[0].mxu0
      %v5354 = vadd.f32 0.0, %v5353
      %v5355 = vpop.f32.mrb[0].mxu0
      %5356 = vmatprep.mubr.f32.mxu0 0.0
      %5357 = vmatmul.mubr.f32.gmra.mrb[0].mxu0 %v5189
      %v5358 = vpop.f32.mrb[0].mxu0
      %v5359 = vadd.f32 0.0, %v5358
      %v5360 = vpop.f32.mrb[0].mxu0
      %5361 = vmatprep.mubr.f32.mxu0 0.0
      %5362 = vmatmul.mubr.f32.gmra.mrb[0].mxu0 %v5192
      %v5363 = vpop.f32.mrb[0].mxu0
      %v5364 = vadd.f32 0.0, %v5363
      %v5365 = vpop.f32.mrb[0].mxu0
      %5366 = vmatprep.mubr.f32.mxu0 0.0
      %5367 = vmatmul.mubr.f32.gmra.mrb[0].mxu0 %v5195
      %v5368 = vpop.f32.mrb[0].mxu0
      %v5369 = vadd.f32 0.0, %v5368
      %v5370 = vpop.f32.mrb[0].mxu0
      %5371 = vmatprep.mubr.f32.mxu0 0.0
      %5372 = vmatmul.mubr.f32.gmra.mrb[0].mxu0 %v5198
      %v5373 = vpop.f32.mrb[0].mxu0
      %v5374 = vadd.f32 0.0, %v5373
      %v5375 = vpop.f32.mrb[0].mxu0
      %5376 = vmatprep.mubr.f32.mxu0 0.0
      %5377 = vmatmul.mubr.f32.gmra.mrb[0].mxu0 %v5201
      %v5378 = vpop.f32.mrb[0].mxu0
      %v5379 = vadd.f32 0.0, %v5378
      %v5380 = vpop.f32.mrb[0].mxu0
      %5381 = vmatprep.mubr.f32.mxu0 0.0
      %5382 = vmatmul.mubr.f32.gmra.mrb[0].mxu0 %v5204
      %v5383 = vpop.f32.mrb[0].mxu0
      %v5384 = vadd.f32 0.0, %v5383
      %v5385 = vpop.f32.mrb[0].mxu0
      %5386 = vmatprep.mubr.f32.mxu0 0.0
      %5387 = vmatmul.mubr.f32.gmra.mrb[0].mxu0 %v5207
      %v5388 = vpop.f32.mrb[0].mxu0
      %v5389 = vadd.f32 0.0, %v5388
      %v5390 = vpop.f32.mrb[0].mxu0
      %5391 = vmatprep.mubr.f32.mxu0 0.0
      %5392 = vmatmul.mubr.f32.gmra.mrb[0].mxu0 %v5210
      %v5393 = vpop.f32.mrb[0].mxu0
      %v5394 = vadd.f32 0.0, %v5393
      %v5395 = vpop.f32.mrb[0].mxu0
      %5396 = vdwg.mxu0
      %v5397 = vadd.f32 %v5090, %v5279
      %v5398 = vadd.f32 %v5091, %v5284
      %v5399 = vadd.f32 %v5092, %v5289
      %v5400 = vadd.f32 %v5093, %v5294
      %v5401 = vadd.f32 %v5094, %v5299
      %v5402 = vadd.f32 %v5095, %v5304
      %v5403 = vadd.f32 %v5096, %v5309
      %v5404 = vadd.f32 %v5097, %v5314
      %v5405 = vadd.f32 %v5098, %v5319
      %v5406 = vadd.f32 %v5099, %v5324
      %v5407 = vadd.f32 %v5100, %v5329
      %v5408 = vadd.f32 %v5101, %v5334
      %v5409 = vadd.f32 %v5102, %v5339
      %v5410 = vadd.f32 %v5103, %v5344
      %v5411 = vadd.f32 %v5104, %v5349
      %v5412 = vadd.f32 %v5105, %v5354
      %v5413 = vadd.f32 %v5106, %v5359
      %v5414 = vadd.f32 %v5107, %v5364
      %v5415 = vadd.f32 %v5108, %v5369
      %v5416 = vadd.f32 %v5109, %v5374
      %v5417 = vadd.f32 %v5110, %v5379
      %v5418 = vadd.f32 %v5111, %v5384
      %v5419 = vadd.f32 %v5112, %v5389
      %v5420 = vadd.f32 %v5113, %v5394
      %v5421 = vld [vmem:[#allocation2 + $0x20] sm:$0xff]
      %v5422 = vld [vmem:[#allocation2 + $0x28] sm:$0xff]
      %v5423 = vld [vmem:[#allocation2 + $0x30] sm:$0xff]
      %v5424 = vld [vmem:[#allocation2 + $0x38] sm:$0xff]
      %v5425 = vld [vmem:[#allocation2 + $0x40] sm:$0xff]
      %v5426 = vld [vmem:[#allocation2 + $0x48] sm:$0xff]
      %v5427 = vld [vmem:[#allocation2 + $0x50] sm:$0xff]
      %v5428 = vld [vmem:[#allocation2 + $0x58] sm:$0xff]
      %v5429 = vld [vmem:[#allocation2 + $0x60] sm:$0xff]
      %v5430 = vld [vmem:[#allocation2 + $0x68] sm:$0xff]
      %v5431 = vld [vmem:[#allocation2 + $0x70] sm:$0xff]
      %v5432 = vld [vmem:[#allocation2 + $0x78] sm:$0xff]
      %v5433 = vld [vmem:[#allocation2 + $0x80] sm:$0xff]
      %v5434 = vld [vmem:[#allocation2 + $0x88] sm:$0xff]
      %v5435 = vld [vmem:[#allocation2 + $0x90] sm:$0xff]
      %v5436 = vld [vmem:[#allocation2 + $0x98] sm:$0xff]
      %v5437 = vld [vmem:[#allocation2 + $0xa0] sm:$0xff]
      %v5438 = vld [vmem:[#allocation2 + $0xa8] sm:$0xff]
      %v5439 = vld [vmem:[#allocation2 + $0xb0] sm:$0xff]
      %v5440 = vld [vmem:[#allocation2 + $0xb8] sm:$0xff]
      %v5441 = vld [vmem:[#allocation2 + $0xc0] sm:$0xff]
      %v5442 = vld [vmem:[#allocation2 + $0xc8] sm:$0xff]
      %v5443 = vld [vmem:[#allocation2 + $0xd0] sm:$0xff]
      %v5444 = vld [vmem:[#allocation2 + $0xd8] sm:$0xff]
      %s5445 = scalar_lea.vmem %s3, 48
      %v5446 = vld [vmem:[%s5445] sm:$0xff]
      %v5448 = vsel %vm3542, %v5421, 0
      %v5451 = vsel %vm3542, %v5422, 0
      %v5454 = vsel %vm3542, %v5423, 0
      %v5457 = vsel %vm3542, %v5424, 0
      %v5460 = vsel %vm3542, %v5425, 0
      %v5463 = vsel %vm3542, %v5426, 0
      %v5466 = vsel %vm3542, %v5427, 0
      %v5469 = vsel %vm3542, %v5428, 0
      %v5472 = vsel %vm3542, %v5429, 0
      %v5475 = vsel %vm3542, %v5430, 0
      %v5478 = vsel %vm3542, %v5431, 0
      %v5481 = vsel %vm3542, %v5432, 0
      %v5484 = vsel %vm3542, %v5433, 0
      %v5487 = vsel %vm3542, %v5434, 0
      %v5490 = vsel %vm3542, %v5435, 0
      %v5493 = vsel %vm3542, %v5436, 0
      %v5496 = vsel %vm3542, %v5437, 0
      %v5499 = vsel %vm3542, %v5438, 0
      %v5502 = vsel %vm3542, %v5439, 0
      %v5505 = vsel %vm3542, %v5440, 0
      %v5508 = vsel %vm3542, %v5441, 0
      %v5511 = vsel %vm3542, %v5442, 0
      %v5514 = vsel %vm3542, %v5443, 0
      %v5517 = vsel %vm3542, %v5444, 0
      %5519 = vmatprep.subr.mxu0 0.0
      %5520 = vmatpush1.msra.mxu0 %v5446
      %5521 = vmatprep.subr.mxu0 0.0
      %5522 = vmatpush1.msra.mxu0 0.0
      %5523 = vmatprep.subr.mxu0 0.0
      %5524 = vmatpush1.msra.mxu0 0.0
      %5525 = vmatprep.subr.mxu0 0.0
      %5526 = vmatpush1.msra.mxu0 0.0
      %5527 = vmatprep.subr.mxu0 0.0
      %5528 = vmatpush1.msra.mxu0 0.0
      %5529 = vmatprep.subr.mxu0 0.0
      %5530 = vmatpush1.msra.mxu0 0.0
      %5531 = vmatprep.subr.mxu0 0.0
      %5532 = vmatpush1.msra.mxu0 0.0
      %5533 = vmatprep.subr.mxu0 0.0
      %5534 = vmatpush1.msra.mxu0 0.0
      %5535 = vmatprep.subr.mxu0 0.0
      %5536 = vmatpush1.msra.mxu0 0.0
      %5537 = vmatprep.subr.mxu0 0.0
      %5538 = vmatpush1.msra.mxu0 0.0
      %5539 = vmatprep.subr.mxu0 0.0
      %5540 = vmatpush1.msra.mxu0 0.0
      %5541 = vmatprep.subr.mxu0 0.0
      %5542 = vmatpush1.msra.mxu0 0.0
      %5543 = vmatprep.subr.mxu0 0.0
      %5544 = vmatpush1.msra.mxu0 0.0
      %5545 = vmatprep.subr.mxu0 0.0
      %5546 = vmatpush1.msra.mxu0 0.0
      %5547 = vmatprep.subr.mxu0 0.0
      %5548 = vmatpush1.msra.mxu0 0.0
      %5549 = vmatprep.subr.mxu0 0.0
      %5550 = vmatpush1.msra.mxu0 0.0
      %5551 = vmatprep.subr.mxu0 0.0
      %5552 = vmatpush1.msra.mxu0 0.0
      %5553 = vmatprep.subr.mxu0 0.0
      %5554 = vmatpush1.msra.mxu0 0.0
      %5555 = vmatprep.subr.mxu0 0.0
      %5556 = vmatpush1.msra.mxu0 0.0
      %5557 = vmatprep.subr.mxu0 0.0
      %5558 = vmatpush1.msra.mxu0 0.0
      %5559 = vmatprep.subr.mxu0 0.0
      %5560 = vmatpush1.msra.mxu0 0.0
      %5561 = vmatprep.subr.mxu0 0.0
      %5562 = vmatpush1.msra.mxu0 0.0
      %5563 = vmatprep.subr.mxu0 0.0
      %5564 = vmatpush1.msra.mxu0 0.0
      %5565 = vmatprep.subr.mxu0 0.0
      %5566 = vmatpush1.msra.mxu0 0.0
      %5567 = vmatprep.subr.mxu0 0.0
      %5568 = vmatpush1.msra.mxu0 0.0
      %5569 = vmatprep.subr.mxu0 0.0
      %5570 = vmatpush1.msra.mxu0 0.0
      %5571 = vmatprep.subr.mxu0 0.0
      %5572 = vmatpush1.msra.mxu0 0.0
      %5573 = vmatprep.subr.mxu0 0.0
      %5574 = vmatpush1.msra.mxu0 0.0
      %5575 = vmatprep.subr.mxu0 0.0
      %5576 = vmatpush1.msra.mxu0 0.0
      %5577 = vmatprep.subr.mxu0 0.0
      %5578 = vmatpush1.msra.mxu0 0.0
      %5579 = vmatprep.subr.mxu0 0.0
      %5580 = vmatpush1.msra.mxu0 0.0
      %5581 = vmatprep.subr.mxu0 0.0
      %5582 = vmatpush1.msra.mxu0 0.0
      %5583 = vmatprep.mubr.f32.mxu0 0.0
      %5584 = vmatmul.mubr.f32.gmra.mrb[0].mxu0 %v5448
      %v5585 = vpop.f32.mrb[0].mxu0
      %v5586 = vadd.f32 0.0, %v5585
      %v5587 = vpop.f32.mrb[0].mxu0
      %5588 = vmatprep.mubr.f32.mxu0 0.0
      %5589 = vmatmul.mubr.f32.gmra.mrb[0].mxu0 %v5451
      %v5590 = vpop.f32.mrb[0].mxu0
      %v5591 = vadd.f32 0.0, %v5590
      %v5592 = vpop.f32.mrb[0].mxu0
      %5593 = vmatprep.mubr.f32.mxu0 0.0
      %5594 = vmatmul.mubr.f32.gmra.mrb[0].mxu0 %v5454
      %v5595 = vpop.f32.mrb[0].mxu0
      %v5596 = vadd.f32 0.0, %v5595
      %v5597 = vpop.f32.mrb[0].mxu0
      %5598 = vmatprep.mubr.f32.mxu0 0.0
      %5599 = vmatmul.mubr.f32.gmra.mrb[0].mxu0 %v5457
      %v5600 = vpop.f32.mrb[0].mxu0
      %v5601 = vadd.f32 0.0, %v5600
      %v5602 = vpop.f32.mrb[0].mxu0
      %5603 = vmatprep.mubr.f32.mxu0 0.0
      %5604 = vmatmul.mubr.f32.gmra.mrb[0].mxu0 %v5460
      %v5605 = vpop.f32.mrb[0].mxu0
      %v5606 = vadd.f32 0.0, %v5605
      %v5607 = vpop.f32.mrb[0].mxu0
      %5608 = vmatprep.mubr.f32.mxu0 0.0
      %5609 = vmatmul.mubr.f32.gmra.mrb[0].mxu0 %v5463
      %v5610 = vpop.f32.mrb[0].mxu0
      %v5611 = vadd.f32 0.0, %v5610
      %v5612 = vpop.f32.mrb[0].mxu0
      %5613 = vmatprep.mubr.f32.mxu0 0.0
      %5614 = vmatmul.mubr.f32.gmra.mrb[0].mxu0 %v5466
      %v5615 = vpop.f32.mrb[0].mxu0
      %v5616 = vadd.f32 0.0, %v5615
      %v5617 = vpop.f32.mrb[0].mxu0
      %5618 = vmatprep.mubr.f32.mxu0 0.0
      %5619 = vmatmul.mubr.f32.gmra.mrb[0].mxu0 %v5469
      %v5620 = vpop.f32.mrb[0].mxu0
      %v5621 = vadd.f32 0.0, %v5620
      %v5622 = vpop.f32.mrb[0].mxu0
      %5623 = vmatprep.mubr.f32.mxu0 0.0
      %5624 = vmatmul.mubr.f32.gmra.mrb[0].mxu0 %v5472
      %v5625 = vpop.f32.mrb[0].mxu0
      %v5626 = vadd.f32 0.0, %v5625
      %v5627 = vpop.f32.mrb[0].mxu0
      %5628 = vmatprep.mubr.f32.mxu0 0.0
      %5629 = vmatmul.mubr.f32.gmra.mrb[0].mxu0 %v5475
      %v5630 = vpop.f32.mrb[0].mxu0
      %v5631 = vadd.f32 0.0, %v5630
      %v5632 = vpop.f32.mrb[0].mxu0
      %5633 = vmatprep.mubr.f32.mxu0 0.0
      %5634 = vmatmul.mubr.f32.gmra.mrb[0].mxu0 %v5478
      %v5635 = vpop.f32.mrb[0].mxu0
      %v5636 = vadd.f32 0.0, %v5635
      %v5637 = vpop.f32.mrb[0].mxu0
      %5638 = vmatprep.mubr.f32.mxu0 0.0
      %5639 = vmatmul.mubr.f32.gmra.mrb[0].mxu0 %v5481
      %v5640 = vpop.f32.mrb[0].mxu0
      %v5641 = vadd.f32 0.0, %v5640
      %v5642 = vpop.f32.mrb[0].mxu0
      %5643 = vmatprep.mubr.f32.mxu0 0.0
      %5644 = vmatmul.mubr.f32.gmra.mrb[0].mxu0 %v5484
      %v5645 = vpop.f32.mrb[0].mxu0
      %v5646 = vadd.f32 0.0, %v5645
      %v5647 = vpop.f32.mrb[0].mxu0
      %5648 = vmatprep.mubr.f32.mxu0 0.0
      %5649 = vmatmul.mubr.f32.gmra.mrb[0].mxu0 %v5487
      %v5650 = vpop.f32.mrb[0].mxu0
      %v5651 = vadd.f32 0.0, %v5650
      %v5652 = vpop.f32.mrb[0].mxu0
      %5653 = vmatprep.mubr.f32.mxu0 0.0
      %5654 = vmatmul.mubr.f32.gmra.mrb[0].mxu0 %v5490
      %v5655 = vpop.f32.mrb[0].mxu0
      %v5656 = vadd.f32 0.0, %v5655
      %v5657 = vpop.f32.mrb[0].mxu0
      %5658 = vmatprep.mubr.f32.mxu0 0.0
      %5659 = vmatmul.mubr.f32.gmra.mrb[0].mxu0 %v5493
      %v5660 = vpop.f32.mrb[0].mxu0
      %v5661 = vadd.f32 0.0, %v5660
      %v5662 = vpop.f32.mrb[0].mxu0
      %5663 = vmatprep.mubr.f32.mxu0 0.0
      %5664 = vmatmul.mubr.f32.gmra.mrb[0].mxu0 %v5496
      %v5665 = vpop.f32.mrb[0].mxu0
      %v5666 = vadd.f32 0.0, %v5665
      %v5667 = vpop.f32.mrb[0].mxu0
      %5668 = vmatprep.mubr.f32.mxu0 0.0
      %5669 = vmatmul.mubr.f32.gmra.mrb[0].mxu0 %v5499
      %v5670 = vpop.f32.mrb[0].mxu0
      %v5671 = vadd.f32 0.0, %v5670
      %v5672 = vpop.f32.mrb[0].mxu0
      %5673 = vmatprep.mubr.f32.mxu0 0.0
      %5674 = vmatmul.mubr.f32.gmra.mrb[0].mxu0 %v5502
      %v5675 = vpop.f32.mrb[0].mxu0
      %v5676 = vadd.f32 0.0, %v5675
      %v5677 = vpop.f32.mrb[0].mxu0
      %5678 = vmatprep.mubr.f32.mxu0 0.0
      %5679 = vmatmul.mubr.f32.gmra.mrb[0].mxu0 %v5505
      %v5680 = vpop.f32.mrb[0].mxu0
      %v5681 = vadd.f32 0.0, %v5680
      %v5682 = vpop.f32.mrb[0].mxu0
      %5683 = vmatprep.mubr.f32.mxu0 0.0
      %5684 = vmatmul.mubr.f32.gmra.mrb[0].mxu0 %v5508
      %v5685 = vpop.f32.mrb[0].mxu0
      %v5686 = vadd.f32 0.0, %v5685
      %v5687 = vpop.f32.mrb[0].mxu0
      %5688 = vmatprep.mubr.f32.mxu0 0.0
      %5689 = vmatmul.mubr.f32.gmra.mrb[0].mxu0 %v5511
      %v5690 = vpop.f32.mrb[0].mxu0
      %v5691 = vadd.f32 0.0, %v5690
      %v5692 = vpop.f32.mrb[0].mxu0
      %5693 = vmatprep.mubr.f32.mxu0 0.0
      %5694 = vmatmul.mubr.f32.gmra.mrb[0].mxu0 %v5514
      %v5695 = vpop.f32.mrb[0].mxu0
      %v5696 = vadd.f32 0.0, %v5695
      %v5697 = vpop.f32.mrb[0].mxu0
      %5698 = vmatprep.mubr.f32.mxu0 0.0
      %5699 = vmatmul.mubr.f32.gmra.mrb[0].mxu0 %v5517
      %v5700 = vpop.f32.mrb[0].mxu0
      %v5701 = vadd.f32 0.0, %v5700
      %v5702 = vpop.f32.mrb[0].mxu0
      %5703 = vdwg.mxu0
      %v5704 = vadd.f32 %v5397, %v5586
      %v5705 = vadd.f32 %v5398, %v5591
      %v5706 = vadd.f32 %v5399, %v5596
      %v5707 = vadd.f32 %v5400, %v5601
      %v5708 = vadd.f32 %v5401, %v5606
      %v5709 = vadd.f32 %v5402, %v5611
      %v5710 = vadd.f32 %v5403, %v5616
      %v5711 = vadd.f32 %v5404, %v5621
      %v5712 = vadd.f32 %v5405, %v5626
      %v5713 = vadd.f32 %v5406, %v5631
      %v5714 = vadd.f32 %v5407, %v5636
      %v5715 = vadd.f32 %v5408, %v5641
      %v5716 = vadd.f32 %v5409, %v5646
      %v5717 = vadd.f32 %v5410, %v5651
      %v5718 = vadd.f32 %v5411, %v5656
      %v5719 = vadd.f32 %v5412, %v5661
      %v5720 = vadd.f32 %v5413, %v5666
      %v5721 = vadd.f32 %v5414, %v5671
      %v5722 = vadd.f32 %v5415, %v5676
      %v5723 = vadd.f32 %v5416, %v5681
      %v5724 = vadd.f32 %v5417, %v5686
      %v5725 = vadd.f32 %v5418, %v5691
      %v5726 = vadd.f32 %v5419, %v5696
      %v5727 = vadd.f32 %v5420, %v5701
      %v5728 = vld [vmem:[#allocation2 + $0x21] sm:$0xff]
      %v5729 = vld [vmem:[#allocation2 + $0x29] sm:$0xff]
      %v5730 = vld [vmem:[#allocation2 + $0x31] sm:$0xff]
      %v5731 = vld [vmem:[#allocation2 + $0x39] sm:$0xff]
      %v5732 = vld [vmem:[#allocation2 + $0x41] sm:$0xff]
      %v5733 = vld [vmem:[#allocation2 + $0x49] sm:$0xff]
      %v5734 = vld [vmem:[#allocation2 + $0x51] sm:$0xff]
      %v5735 = vld [vmem:[#allocation2 + $0x59] sm:$0xff]
      %v5736 = vld [vmem:[#allocation2 + $0x61] sm:$0xff]
      %v5737 = vld [vmem:[#allocation2 + $0x69] sm:$0xff]
      %v5738 = vld [vmem:[#allocation2 + $0x71] sm:$0xff]
      %v5739 = vld [vmem:[#allocation2 + $0x79] sm:$0xff]
      %v5740 = vld [vmem:[#allocation2 + $0x81] sm:$0xff]
      %v5741 = vld [vmem:[#allocation2 + $0x89] sm:$0xff]
      %v5742 = vld [vmem:[#allocation2 + $0x91] sm:$0xff]
      %v5743 = vld [vmem:[#allocation2 + $0x99] sm:$0xff]
      %v5744 = vld [vmem:[#allocation2 + $0xa1] sm:$0xff]
      %v5745 = vld [vmem:[#allocation2 + $0xa9] sm:$0xff]
      %v5746 = vld [vmem:[#allocation2 + $0xb1] sm:$0xff]
      %v5747 = vld [vmem:[#allocation2 + $0xb9] sm:$0xff]
      %v5748 = vld [vmem:[#allocation2 + $0xc1] sm:$0xff]
      %v5749 = vld [vmem:[#allocation2 + $0xc9] sm:$0xff]
      %v5750 = vld [vmem:[#allocation2 + $0xd1] sm:$0xff]
      %v5751 = vld [vmem:[#allocation2 + $0xd9] sm:$0xff]
      %s5752 = scalar_lea.vmem %s3, 56
      %v5753 = vld [vmem:[%s5752] sm:$0xff]
      %v5755 = vsel %vm3542, %v5728, 0
      %v5758 = vsel %vm3542, %v5729, 0
      %v5761 = vsel %vm3542, %v5730, 0
      %v5764 = vsel %vm3542, %v5731, 0
      %v5767 = vsel %vm3542, %v5732, 0
      %v5770 = vsel %vm3542, %v5733, 0
      %v5773 = vsel %vm3542, %v5734, 0
      %v5776 = vsel %vm3542, %v5735, 0
      %v5779 = vsel %vm3542, %v5736, 0
      %v5782 = vsel %vm3542, %v5737, 0
      %v5785 = vsel %vm3542, %v5738, 0
      %v5788 = vsel %vm3542, %v5739, 0
      %v5791 = vsel %vm3542, %v5740, 0
      %v5794 = vsel %vm3542, %v5741, 0
      %v5797 = vsel %vm3542, %v5742, 0
      %v5800 = vsel %vm3542, %v5743, 0
      %v5803 = vsel %vm3542, %v5744, 0
      %v5806 = vsel %vm3542, %v5745, 0
      %v5809 = vsel %vm3542, %v5746, 0
      %v5812 = vsel %vm3542, %v5747, 0
      %v5815 = vsel %vm3542, %v5748, 0
      %v5818 = vsel %vm3542, %v5749, 0
      %v5821 = vsel %vm3542, %v5750, 0
      %v5824 = vsel %vm3542, %v5751, 0
      %5826 = vmatprep.subr.mxu0 0.0
      %5827 = vmatpush1.msra.mxu0 %v5753
      %5828 = vmatprep.subr.mxu0 0.0
      %5829 = vmatpush1.msra.mxu0 0.0
      %5830 = vmatprep.subr.mxu0 0.0
      %5831 = vmatpush1.msra.mxu0 0.0
      %5832 = vmatprep.subr.mxu0 0.0
      %5833 = vmatpush1.msra.mxu0 0.0
      %5834 = vmatprep.subr.mxu0 0.0
      %5835 = vmatpush1.msra.mxu0 0.0
      %5836 = vmatprep.subr.mxu0 0.0
      %5837 = vmatpush1.msra.mxu0 0.0
      %5838 = vmatprep.subr.mxu0 0.0
      %5839 = vmatpush1.msra.mxu0 0.0
      %5840 = vmatprep.subr.mxu0 0.0
      %5841 = vmatpush1.msra.mxu0 0.0
      %5842 = vmatprep.subr.mxu0 0.0
      %5843 = vmatpush1.msra.mxu0 0.0
      %5844 = vmatprep.subr.mxu0 0.0
      %5845 = vmatpush1.msra.mxu0 0.0
      %5846 = vmatprep.subr.mxu0 0.0
      %5847 = vmatpush1.msra.mxu0 0.0
      %5848 = vmatprep.subr.mxu0 0.0
      %5849 = vmatpush1.msra.mxu0 0.0
      %5850 = vmatprep.subr.mxu0 0.0
      %5851 = vmatpush1.msra.mxu0 0.0
      %5852 = vmatprep.subr.mxu0 0.0
      %5853 = vmatpush1.msra.mxu0 0.0
      %5854 = vmatprep.subr.mxu0 0.0
      %5855 = vmatpush1.msra.mxu0 0.0
      %5856 = vmatprep.subr.mxu0 0.0
      %5857 = vmatpush1.msra.mxu0 0.0
      %5858 = vmatprep.subr.mxu0 0.0
      %5859 = vmatpush1.msra.mxu0 0.0
      %5860 = vmatprep.subr.mxu0 0.0
      %5861 = vmatpush1.msra.mxu0 0.0
      %5862 = vmatprep.subr.mxu0 0.0
      %5863 = vmatpush1.msra.mxu0 0.0
      %5864 = vmatprep.subr.mxu0 0.0
      %5865 = vmatpush1.msra.mxu0 0.0
      %5866 = vmatprep.subr.mxu0 0.0
      %5867 = vmatpush1.msra.mxu0 0.0
      %5868 = vmatprep.subr.mxu0 0.0
      %5869 = vmatpush1.msra.mxu0 0.0
      %5870 = vmatprep.subr.mxu0 0.0
      %5871 = vmatpush1.msra.mxu0 0.0
      %5872 = vmatprep.subr.mxu0 0.0
      %5873 = vmatpush1.msra.mxu0 0.0
      %5874 = vmatprep.subr.mxu0 0.0
      %5875 = vmatpush1.msra.mxu0 0.0
      %5876 = vmatprep.subr.mxu0 0.0
      %5877 = vmatpush1.msra.mxu0 0.0
      %5878 = vmatprep.subr.mxu0 0.0
      %5879 = vmatpush1.msra.mxu0 0.0
      %5880 = vmatprep.subr.mxu0 0.0
      %5881 = vmatpush1.msra.mxu0 0.0
      %5882 = vmatprep.subr.mxu0 0.0
      %5883 = vmatpush1.msra.mxu0 0.0
      %5884 = vmatprep.subr.mxu0 0.0
      %5885 = vmatpush1.msra.mxu0 0.0
      %5886 = vmatprep.subr.mxu0 0.0
      %5887 = vmatpush1.msra.mxu0 0.0
      %5888 = vmatprep.subr.mxu0 0.0
      %5889 = vmatpush1.msra.mxu0 0.0
      %5890 = vmatprep.mubr.f32.mxu0 0.0
      %5891 = vmatmul.mubr.f32.gmra.mrb[0].mxu0 %v5755
      %v5892 = vpop.f32.mrb[0].mxu0
      %v5893 = vadd.f32 0.0, %v5892
      %v5894 = vpop.f32.mrb[0].mxu0
      %5895 = vmatprep.mubr.f32.mxu0 0.0
      %5896 = vmatmul.mubr.f32.gmra.mrb[0].mxu0 %v5758
      %v5897 = vpop.f32.mrb[0].mxu0
      %v5898 = vadd.f32 0.0, %v5897
      %v5899 = vpop.f32.mrb[0].mxu0
      %5900 = vmatprep.mubr.f32.mxu0 0.0
      %5901 = vmatmul.mubr.f32.gmra.mrb[0].mxu0 %v5761
      %v5902 = vpop.f32.mrb[0].mxu0
      %v5903 = vadd.f32 0.0, %v5902
      %v5904 = vpop.f32.mrb[0].mxu0
      %5905 = vmatprep.mubr.f32.mxu0 0.0
      %5906 = vmatmul.mubr.f32.gmra.mrb[0].mxu0 %v5764
      %v5907 = vpop.f32.mrb[0].mxu0
      %v5908 = vadd.f32 0.0, %v5907
      %v5909 = vpop.f32.mrb[0].mxu0
      %5910 = vmatprep.mubr.f32.mxu0 0.0
      %5911 = vmatmul.mubr.f32.gmra.mrb[0].mxu0 %v5767
      %v5912 = vpop.f32.mrb[0].mxu0
      %v5913 = vadd.f32 0.0, %v5912
      %v5914 = vpop.f32.mrb[0].mxu0
      %5915 = vmatprep.mubr.f32.mxu0 0.0
      %5916 = vmatmul.mubr.f32.gmra.mrb[0].mxu0 %v5770
      %v5917 = vpop.f32.mrb[0].mxu0
      %v5918 = vadd.f32 0.0, %v5917
      %v5919 = vpop.f32.mrb[0].mxu0
      %5920 = vmatprep.mubr.f32.mxu0 0.0
      %5921 = vmatmul.mubr.f32.gmra.mrb[0].mxu0 %v5773
      %v5922 = vpop.f32.mrb[0].mxu0
      %v5923 = vadd.f32 0.0, %v5922
      %v5924 = vpop.f32.mrb[0].mxu0
      %5925 = vmatprep.mubr.f32.mxu0 0.0
      %5926 = vmatmul.mubr.f32.gmra.mrb[0].mxu0 %v5776
      %v5927 = vpop.f32.mrb[0].mxu0
      %v5928 = vadd.f32 0.0, %v5927
      %v5929 = vpop.f32.mrb[0].mxu0
      %5930 = vmatprep.mubr.f32.mxu0 0.0
      %5931 = vmatmul.mubr.f32.gmra.mrb[0].mxu0 %v5779
      %v5932 = vpop.f32.mrb[0].mxu0
      %v5933 = vadd.f32 0.0, %v5932
      %v5934 = vpop.f32.mrb[0].mxu0
      %5935 = vmatprep.mubr.f32.mxu0 0.0
      %5936 = vmatmul.mubr.f32.gmra.mrb[0].mxu0 %v5782
      %v5937 = vpop.f32.mrb[0].mxu0
      %v5938 = vadd.f32 0.0, %v5937
      %v5939 = vpop.f32.mrb[0].mxu0
      %5940 = vmatprep.mubr.f32.mxu0 0.0
      %5941 = vmatmul.mubr.f32.gmra.mrb[0].mxu0 %v5785
      %v5942 = vpop.f32.mrb[0].mxu0
      %v5943 = vadd.f32 0.0, %v5942
      %v5944 = vpop.f32.mrb[0].mxu0
      %5945 = vmatprep.mubr.f32.mxu0 0.0
      %5946 = vmatmul.mubr.f32.gmra.mrb[0].mxu0 %v5788
      %v5947 = vpop.f32.mrb[0].mxu0
      %v5948 = vadd.f32 0.0, %v5947
      %v5949 = vpop.f32.mrb[0].mxu0
      %5950 = vmatprep.mubr.f32.mxu0 0.0
      %5951 = vmatmul.mubr.f32.gmra.mrb[0].mxu0 %v5791
      %v5952 = vpop.f32.mrb[0].mxu0
      %v5953 = vadd.f32 0.0, %v5952
      %v5954 = vpop.f32.mrb[0].mxu0
      %5955 = vmatprep.mubr.f32.mxu0 0.0
      %5956 = vmatmul.mubr.f32.gmra.mrb[0].mxu0 %v5794
      %v5957 = vpop.f32.mrb[0].mxu0
      %v5958 = vadd.f32 0.0, %v5957
      %v5959 = vpop.f32.mrb[0].mxu0
      %5960 = vmatprep.mubr.f32.mxu0 0.0
      %5961 = vmatmul.mubr.f32.gmra.mrb[0].mxu0 %v5797
      %v5962 = vpop.f32.mrb[0].mxu0
      %v5963 = vadd.f32 0.0, %v5962
      %v5964 = vpop.f32.mrb[0].mxu0
      %5965 = vmatprep.mubr.f32.mxu0 0.0
      %5966 = vmatmul.mubr.f32.gmra.mrb[0].mxu0 %v5800
      %v5967 = vpop.f32.mrb[0].mxu0
      %v5968 = vadd.f32 0.0, %v5967
      %v5969 = vpop.f32.mrb[0].mxu0
      %5970 = vmatprep.mubr.f32.mxu0 0.0
      %5971 = vmatmul.mubr.f32.gmra.mrb[0].mxu0 %v5803
      %v5972 = vpop.f32.mrb[0].mxu0
      %v5973 = vadd.f32 0.0, %v5972
      %v5974 = vpop.f32.mrb[0].mxu0
      %5975 = vmatprep.mubr.f32.mxu0 0.0
      %5976 = vmatmul.mubr.f32.gmra.mrb[0].mxu0 %v5806
      %v5977 = vpop.f32.mrb[0].mxu0
      %v5978 = vadd.f32 0.0, %v5977
      %v5979 = vpop.f32.mrb[0].mxu0
      %5980 = vmatprep.mubr.f32.mxu0 0.0
      %5981 = vmatmul.mubr.f32.gmra.mrb[0].mxu0 %v5809
      %v5982 = vpop.f32.mrb[0].mxu0
      %v5983 = vadd.f32 0.0, %v5982
      %v5984 = vpop.f32.mrb[0].mxu0
      %5985 = vmatprep.mubr.f32.mxu0 0.0
      %5986 = vmatmul.mubr.f32.gmra.mrb[0].mxu0 %v5812
      %v5987 = vpop.f32.mrb[0].mxu0
      %v5988 = vadd.f32 0.0, %v5987
      %v5989 = vpop.f32.mrb[0].mxu0
      %5990 = vmatprep.mubr.f32.mxu0 0.0
      %5991 = vmatmul.mubr.f32.gmra.mrb[0].mxu0 %v5815
      %v5992 = vpop.f32.mrb[0].mxu0
      %v5993 = vadd.f32 0.0, %v5992
      %v5994 = vpop.f32.mrb[0].mxu0
      %5995 = vmatprep.mubr.f32.mxu0 0.0
      %5996 = vmatmul.mubr.f32.gmra.mrb[0].mxu0 %v5818
      %v5997 = vpop.f32.mrb[0].mxu0
      %v5998 = vadd.f32 0.0, %v5997
      %v5999 = vpop.f32.mrb[0].mxu0
      %6000 = vmatprep.mubr.f32.mxu0 0.0
      %6001 = vmatmul.mubr.f32.gmra.mrb[0].mxu0 %v5821
      %v6002 = vpop.f32.mrb[0].mxu0
      %v6003 = vadd.f32 0.0, %v6002
      %v6004 = vpop.f32.mrb[0].mxu0
      %6005 = vmatprep.mubr.f32.mxu0 0.0
      %6006 = vmatmul.mubr.f32.gmra.mrb[0].mxu0 %v5824
      %v6007 = vpop.f32.mrb[0].mxu0
      %v6008 = vadd.f32 0.0, %v6007
      %v6009 = vpop.f32.mrb[0].mxu0
      %6010 = vdwg.mxu0
      %v6011 = vadd.f32 %v5704, %v5893
      %v6012 = vadd.f32 %v5705, %v5898
      %v6013 = vadd.f32 %v5706, %v5903
      %v6014 = vadd.f32 %v5707, %v5908
      %v6015 = vadd.f32 %v5708, %v5913
      %v6016 = vadd.f32 %v5709, %v5918
      %v6017 = vadd.f32 %v5710, %v5923
      %v6018 = vadd.f32 %v5711, %v5928
      %v6019 = vadd.f32 %v5712, %v5933
      %v6020 = vadd.f32 %v5713, %v5938
      %v6021 = vadd.f32 %v5714, %v5943
      %v6022 = vadd.f32 %v5715, %v5948
      %v6023 = vadd.f32 %v5716, %v5953
      %v6024 = vadd.f32 %v5717, %v5958
      %v6025 = vadd.f32 %v5718, %v5963
      %v6026 = vadd.f32 %v5719, %v5968
      %v6027 = vadd.f32 %v5720, %v5973
      %v6028 = vadd.f32 %v5721, %v5978
      %v6029 = vadd.f32 %v5722, %v5983
      %v6030 = vadd.f32 %v5723, %v5988
      %v6031 = vadd.f32 %v5724, %v5993
      %v6032 = vadd.f32 %v5725, %v5998
      %v6033 = vadd.f32 %v5726, %v6003
      %v6034 = vadd.f32 %v5727, %v6008
      %v6035 = vld [vmem:[#allocation2 + $0x22] sm:$0xff]
      %v6036 = vld [vmem:[#allocation2 + $0x2a] sm:$0xff]
      %v6037 = vld [vmem:[#allocation2 + $0x32] sm:$0xff]
      %v6038 = vld [vmem:[#allocation2 + $0x3a] sm:$0xff]
      %v6039 = vld [vmem:[#allocation2 + $0x42] sm:$0xff]
      %v6040 = vld [vmem:[#allocation2 + $0x4a] sm:$0xff]
      %v6041 = vld [vmem:[#allocation2 + $0x52] sm:$0xff]
      %v6042 = vld [vmem:[#allocation2 + $0x5a] sm:$0xff]
      %v6043 = vld [vmem:[#allocation2 + $0x62] sm:$0xff]
      %v6044 = vld [vmem:[#allocation2 + $0x6a] sm:$0xff]
      %v6045 = vld [vmem:[#allocation2 + $0x72] sm:$0xff]
      %v6046 = vld [vmem:[#allocation2 + $0x7a] sm:$0xff]
      %v6047 = vld [vmem:[#allocation2 + $0x82] sm:$0xff]
      %v6048 = vld [vmem:[#allocation2 + $0x8a] sm:$0xff]
      %v6049 = vld [vmem:[#allocation2 + $0x92] sm:$0xff]
      %v6050 = vld [vmem:[#allocation2 + $0x9a] sm:$0xff]
      %v6051 = vld [vmem:[#allocation2 + $0xa2] sm:$0xff]
      %v6052 = vld [vmem:[#allocation2 + $0xaa] sm:$0xff]
      %v6053 = vld [vmem:[#allocation2 + $0xb2] sm:$0xff]
      %v6054 = vld [vmem:[#allocation2 + $0xba] sm:$0xff]
      %v6055 = vld [vmem:[#allocation2 + $0xc2] sm:$0xff]
      %v6056 = vld [vmem:[#allocation2 + $0xca] sm:$0xff]
      %v6057 = vld [vmem:[#allocation2 + $0xd2] sm:$0xff]
      %v6058 = vld [vmem:[#allocation2 + $0xda] sm:$0xff]
      %s6059 = scalar_lea.vmem %s3, 64
      %v6060 = vld [vmem:[%s6059] sm:$0xff]
      %v6062 = vsel %vm3542, %v6035, 0
      %v6065 = vsel %vm3542, %v6036, 0
      %v6068 = vsel %vm3542, %v6037, 0
      %v6071 = vsel %vm3542, %v6038, 0
      %v6074 = vsel %vm3542, %v6039, 0
      %v6077 = vsel %vm3542, %v6040, 0
      %v6080 = vsel %vm3542, %v6041, 0
      %v6083 = vsel %vm3542, %v6042, 0
      %v6086 = vsel %vm3542, %v6043, 0
      %v6089 = vsel %vm3542, %v6044, 0
      %v6092 = vsel %vm3542, %v6045, 0
      %v6095 = vsel %vm3542, %v6046, 0
      %v6098 = vsel %vm3542, %v6047, 0
      %v6101 = vsel %vm3542, %v6048, 0
      %v6104 = vsel %vm3542, %v6049, 0
      %v6107 = vsel %vm3542, %v6050, 0
      %v6110 = vsel %vm3542, %v6051, 0
      %v6113 = vsel %vm3542, %v6052, 0
      %v6116 = vsel %vm3542, %v6053, 0
      %v6119 = vsel %vm3542, %v6054, 0
      %v6122 = vsel %vm3542, %v6055, 0
      %v6125 = vsel %vm3542, %v6056, 0
      %v6128 = vsel %vm3542, %v6057, 0
      %v6131 = vsel %vm3542, %v6058, 0
      %6133 = vmatprep.subr.mxu0 0.0
      %6134 = vmatpush1.msra.mxu0 %v6060
      %6135 = vmatprep.subr.mxu0 0.0
      %6136 = vmatpush1.msra.mxu0 0.0
      %6137 = vmatprep.subr.mxu0 0.0
      %6138 = vmatpush1.msra.mxu0 0.0
      %6139 = vmatprep.subr.mxu0 0.0
      %6140 = vmatpush1.msra.mxu0 0.0
      %6141 = vmatprep.subr.mxu0 0.0
      %6142 = vmatpush1.msra.mxu0 0.0
      %6143 = vmatprep.subr.mxu0 0.0
      %6144 = vmatpush1.msra.mxu0 0.0
      %6145 = vmatprep.subr.mxu0 0.0
      %6146 = vmatpush1.msra.mxu0 0.0
      %6147 = vmatprep.subr.mxu0 0.0
      %6148 = vmatpush1.msra.mxu0 0.0
      %6149 = vmatprep.subr.mxu0 0.0
      %6150 = vmatpush1.msra.mxu0 0.0
      %6151 = vmatprep.subr.mxu0 0.0
      %6152 = vmatpush1.msra.mxu0 0.0
      %6153 = vmatprep.subr.mxu0 0.0
      %6154 = vmatpush1.msra.mxu0 0.0
      %6155 = vmatprep.subr.mxu0 0.0
      %6156 = vmatpush1.msra.mxu0 0.0
      %6157 = vmatprep.subr.mxu0 0.0
      %6158 = vmatpush1.msra.mxu0 0.0
      %6159 = vmatprep.subr.mxu0 0.0
      %6160 = vmatpush1.msra.mxu0 0.0
      %6161 = vmatprep.subr.mxu0 0.0
      %6162 = vmatpush1.msra.mxu0 0.0
      %6163 = vmatprep.subr.mxu0 0.0
      %6164 = vmatpush1.msra.mxu0 0.0
      %6165 = vmatprep.subr.mxu0 0.0
      %6166 = vmatpush1.msra.mxu0 0.0
      %6167 = vmatprep.subr.mxu0 0.0
      %6168 = vmatpush1.msra.mxu0 0.0
      %6169 = vmatprep.subr.mxu0 0.0
      %6170 = vmatpush1.msra.mxu0 0.0
      %6171 = vmatprep.subr.mxu0 0.0
      %6172 = vmatpush1.msra.mxu0 0.0
      %6173 = vmatprep.subr.mxu0 0.0
      %6174 = vmatpush1.msra.mxu0 0.0
      %6175 = vmatprep.subr.mxu0 0.0
      %6176 = vmatpush1.msra.mxu0 0.0
      %6177 = vmatprep.subr.mxu0 0.0
      %6178 = vmatpush1.msra.mxu0 0.0
      %6179 = vmatprep.subr.mxu0 0.0
      %6180 = vmatpush1.msra.mxu0 0.0
      %6181 = vmatprep.subr.mxu0 0.0
      %6182 = vmatpush1.msra.mxu0 0.0
      %6183 = vmatprep.subr.mxu0 0.0
      %6184 = vmatpush1.msra.mxu0 0.0
      %6185 = vmatprep.subr.mxu0 0.0
      %6186 = vmatpush1.msra.mxu0 0.0
      %6187 = vmatprep.subr.mxu0 0.0
      %6188 = vmatpush1.msra.mxu0 0.0
      %6189 = vmatprep.subr.mxu0 0.0
      %6190 = vmatpush1.msra.mxu0 0.0
      %6191 = vmatprep.subr.mxu0 0.0
      %6192 = vmatpush1.msra.mxu0 0.0
      %6193 = vmatprep.subr.mxu0 0.0
      %6194 = vmatpush1.msra.mxu0 0.0
      %6195 = vmatprep.subr.mxu0 0.0
      %6196 = vmatpush1.msra.mxu0 0.0
      %6197 = vmatprep.mubr.f32.mxu0 0.0
      %6198 = vmatmul.mubr.f32.gmra.mrb[0].mxu0 %v6062
      %v6199 = vpop.f32.mrb[0].mxu0
      %v6200 = vadd.f32 0.0, %v6199
      %v6201 = vpop.f32.mrb[0].mxu0
      %6202 = vmatprep.mubr.f32.mxu0 0.0
      %6203 = vmatmul.mubr.f32.gmra.mrb[0].mxu0 %v6065
      %v6204 = vpop.f32.mrb[0].mxu0
      %v6205 = vadd.f32 0.0, %v6204
      %v6206 = vpop.f32.mrb[0].mxu0
      %6207 = vmatprep.mubr.f32.mxu0 0.0
      %6208 = vmatmul.mubr.f32.gmra.mrb[0].mxu0 %v6068
      %v6209 = vpop.f32.mrb[0].mxu0
      %v6210 = vadd.f32 0.0, %v6209
      %v6211 = vpop.f32.mrb[0].mxu0
      %6212 = vmatprep.mubr.f32.mxu0 0.0
      %6213 = vmatmul.mubr.f32.gmra.mrb[0].mxu0 %v6071
      %v6214 = vpop.f32.mrb[0].mxu0
      %v6215 = vadd.f32 0.0, %v6214
      %v6216 = vpop.f32.mrb[0].mxu0
      %6217 = vmatprep.mubr.f32.mxu0 0.0
      %6218 = vmatmul.mubr.f32.gmra.mrb[0].mxu0 %v6074
      %v6219 = vpop.f32.mrb[0].mxu0
      %v6220 = vadd.f32 0.0, %v6219
      %v6221 = vpop.f32.mrb[0].mxu0
      %6222 = vmatprep.mubr.f32.mxu0 0.0
      %6223 = vmatmul.mubr.f32.gmra.mrb[0].mxu0 %v6077
      %v6224 = vpop.f32.mrb[0].mxu0
      %v6225 = vadd.f32 0.0, %v6224
      %v6226 = vpop.f32.mrb[0].mxu0
      %6227 = vmatprep.mubr.f32.mxu0 0.0
      %6228 = vmatmul.mubr.f32.gmra.mrb[0].mxu0 %v6080
      %v6229 = vpop.f32.mrb[0].mxu0
      %v6230 = vadd.f32 0.0, %v6229
      %v6231 = vpop.f32.mrb[0].mxu0
      %6232 = vmatprep.mubr.f32.mxu0 0.0
      %6233 = vmatmul.mubr.f32.gmra.mrb[0].mxu0 %v6083
      %v6234 = vpop.f32.mrb[0].mxu0
      %v6235 = vadd.f32 0.0, %v6234
      %v6236 = vpop.f32.mrb[0].mxu0
      %6237 = vmatprep.mubr.f32.mxu0 0.0
      %6238 = vmatmul.mubr.f32.gmra.mrb[0].mxu0 %v6086
      %v6239 = vpop.f32.mrb[0].mxu0
      %v6240 = vadd.f32 0.0, %v6239
      %v6241 = vpop.f32.mrb[0].mxu0
      %6242 = vmatprep.mubr.f32.mxu0 0.0
      %6243 = vmatmul.mubr.f32.gmra.mrb[0].mxu0 %v6089
      %v6244 = vpop.f32.mrb[0].mxu0
      %v6245 = vadd.f32 0.0, %v6244
      %v6246 = vpop.f32.mrb[0].mxu0
      %6247 = vmatprep.mubr.f32.mxu0 0.0
      %6248 = vmatmul.mubr.f32.gmra.mrb[0].mxu0 %v6092
      %v6249 = vpop.f32.mrb[0].mxu0
      %v6250 = vadd.f32 0.0, %v6249
      %v6251 = vpop.f32.mrb[0].mxu0
      %6252 = vmatprep.mubr.f32.mxu0 0.0
      %6253 = vmatmul.mubr.f32.gmra.mrb[0].mxu0 %v6095
      %v6254 = vpop.f32.mrb[0].mxu0
      %v6255 = vadd.f32 0.0, %v6254
      %v6256 = vpop.f32.mrb[0].mxu0
      %6257 = vmatprep.mubr.f32.mxu0 0.0
      %6258 = vmatmul.mubr.f32.gmra.mrb[0].mxu0 %v6098
      %v6259 = vpop.f32.mrb[0].mxu0
      %v6260 = vadd.f32 0.0, %v6259
      %v6261 = vpop.f32.mrb[0].mxu0
      %6262 = vmatprep.mubr.f32.mxu0 0.0
      %6263 = vmatmul.mubr.f32.gmra.mrb[0].mxu0 %v6101
      %v6264 = vpop.f32.mrb[0].mxu0
      %v6265 = vadd.f32 0.0, %v6264
      %v6266 = vpop.f32.mrb[0].mxu0
      %6267 = vmatprep.mubr.f32.mxu0 0.0
      %6268 = vmatmul.mubr.f32.gmra.mrb[0].mxu0 %v6104
      %v6269 = vpop.f32.mrb[0].mxu0
      %v6270 = vadd.f32 0.0, %v6269
      %v6271 = vpop.f32.mrb[0].mxu0
      %6272 = vmatprep.mubr.f32.mxu0 0.0
      %6273 = vmatmul.mubr.f32.gmra.mrb[0].mxu0 %v6107
      %v6274 = vpop.f32.mrb[0].mxu0
      %v6275 = vadd.f32 0.0, %v6274
      %v6276 = vpop.f32.mrb[0].mxu0
      %6277 = vmatprep.mubr.f32.mxu0 0.0
      %6278 = vmatmul.mubr.f32.gmra.mrb[0].mxu0 %v6110
      %v6279 = vpop.f32.mrb[0].mxu0
      %v6280 = vadd.f32 0.0, %v6279
      %v6281 = vpop.f32.mrb[0].mxu0
      %6282 = vmatprep.mubr.f32.mxu0 0.0
      %6283 = vmatmul.mubr.f32.gmra.mrb[0].mxu0 %v6113
      %v6284 = vpop.f32.mrb[0].mxu0
      %v6285 = vadd.f32 0.0, %v6284
      %v6286 = vpop.f32.mrb[0].mxu0
      %6287 = vmatprep.mubr.f32.mxu0 0.0
      %6288 = vmatmul.mubr.f32.gmra.mrb[0].mxu0 %v6116
      %v6289 = vpop.f32.mrb[0].mxu0
      %v6290 = vadd.f32 0.0, %v6289
      %v6291 = vpop.f32.mrb[0].mxu0
      %6292 = vmatprep.mubr.f32.mxu0 0.0
      %6293 = vmatmul.mubr.f32.gmra.mrb[0].mxu0 %v6119
      %v6294 = vpop.f32.mrb[0].mxu0
      %v6295 = vadd.f32 0.0, %v6294
      %v6296 = vpop.f32.mrb[0].mxu0
      %6297 = vmatprep.mubr.f32.mxu0 0.0
      %6298 = vmatmul.mubr.f32.gmra.mrb[0].mxu0 %v6122
      %v6299 = vpop.f32.mrb[0].mxu0
      %v6300 = vadd.f32 0.0, %v6299
      %v6301 = vpop.f32.mrb[0].mxu0
      %6302 = vmatprep.mubr.f32.mxu0 0.0
      %6303 = vmatmul.mubr.f32.gmra.mrb[0].mxu0 %v6125
      %v6304 = vpop.f32.mrb[0].mxu0
      %v6305 = vadd.f32 0.0, %v6304
      %v6306 = vpop.f32.mrb[0].mxu0
      %6307 = vmatprep.mubr.f32.mxu0 0.0
      %6308 = vmatmul.mubr.f32.gmra.mrb[0].mxu0 %v6128
      %v6309 = vpop.f32.mrb[0].mxu0
      %v6310 = vadd.f32 0.0, %v6309
      %v6311 = vpop.f32.mrb[0].mxu0
      %6312 = vmatprep.mubr.f32.mxu0 0.0
      %6313 = vmatmul.mubr.f32.gmra.mrb[0].mxu0 %v6131
      %v6314 = vpop.f32.mrb[0].mxu0
      %v6315 = vadd.f32 0.0, %v6314
      %v6316 = vpop.f32.mrb[0].mxu0
      %6317 = vdwg.mxu0
      %v6318 = vadd.f32 %v6011, %v6200
      %v6319 = vadd.f32 %v6012, %v6205
      %v6320 = vadd.f32 %v6013, %v6210
      %v6321 = vadd.f32 %v6014, %v6215
      %v6322 = vadd.f32 %v6015, %v6220
      %v6323 = vadd.f32 %v6016, %v6225
      %v6324 = vadd.f32 %v6017, %v6230
      %v6325 = vadd.f32 %v6018, %v6235
      %v6326 = vadd.f32 %v6019, %v6240
      %v6327 = vadd.f32 %v6020, %v6245
      %v6328 = vadd.f32 %v6021, %v6250
      %v6329 = vadd.f32 %v6022, %v6255
      %v6330 = vadd.f32 %v6023, %v6260
      %v6331 = vadd.f32 %v6024, %v6265
      %v6332 = vadd.f32 %v6025, %v6270
      %v6333 = vadd.f32 %v6026, %v6275
      %v6334 = vadd.f32 %v6027, %v6280
      %v6335 = vadd.f32 %v6028, %v6285
      %v6336 = vadd.f32 %v6029, %v6290
      %v6337 = vadd.f32 %v6030, %v6295
      %v6338 = vadd.f32 %v6031, %v6300
      %v6339 = vadd.f32 %v6032, %v6305
      %v6340 = vadd.f32 %v6033, %v6310
      %v6341 = vadd.f32 %v6034, %v6315
      %v6342 = vmax.f32 %v6318, 0.0
      %v6343 = vmax.f32 %v6319, 0.0
      %v6344 = vmax.f32 %v6320, 0.0
      %v6345 = vmax.f32 %v6321, 0.0
      %v6346 = vmax.f32 %v6322, 0.0
      %v6347 = vmax.f32 %v6323, 0.0
      %v6348 = vmax.f32 %v6324, 0.0
      %v6349 = vmax.f32 %v6325, 0.0
      %v6350 = vmax.f32 %v6326, 0.0
      %v6351 = vmax.f32 %v6327, 0.0
      %v6352 = vmax.f32 %v6328, 0.0
      %v6353 = vmax.f32 %v6329, 0.0
      %v6354 = vmax.f32 %v6330, 0.0
      %v6355 = vmax.f32 %v6331, 0.0
      %v6356 = vmax.f32 %v6332, 0.0
      %v6357 = vmax.f32 %v6333, 0.0
      %v6358 = vmax.f32 %v6334, 0.0
      %v6359 = vmax.f32 %v6335, 0.0
      %v6360 = vmax.f32 %v6336, 0.0
      %v6361 = vmax.f32 %v6337, 0.0
      %v6362 = vmax.f32 %v6338, 0.0
      %v6363 = vmax.f32 %v6339, 0.0
      %v6364 = vmax.f32 %v6340, 0.0
      %v6365 = vmax.f32 %v6341, 0.0
      %6366 = vst.msk [vmem:[%s259] sm:$0xff] %vm3542, %v6342
      %vm6367 = vcmask 60416
      %6368 = vst.msk [vmem:[%s259 + $0x8] sm:$0xf] %vm6367, %v6343
      %6369 = vst.msk [vmem:[%s259 + $0x10] sm:$0xff] %vm3542, %v6344
      %6370 = vst.msk [vmem:[%s259 + $0x18] sm:$0xf] %vm6367, %v6345
      %6371 = vst.msk [vmem:[%s259 + $0x20] sm:$0xff] %vm3542, %v6346
      %6372 = vst.msk [vmem:[%s259 + $0x28] sm:$0xf] %vm6367, %v6347
      %6373 = vst.msk [vmem:[%s259 + $0x30] sm:$0xff] %vm3542, %v6348
      %6374 = vst.msk [vmem:[%s259 + $0x38] sm:$0xf] %vm6367, %v6349
      %6375 = vst.msk [vmem:[%s259 + $0x40] sm:$0xff] %vm3542, %v6350
      %6376 = vst.msk [vmem:[%s259 + $0x48] sm:$0xf] %vm6367, %v6351
      %6377 = vst.msk [vmem:[%s259 + $0x50] sm:$0xff] %vm3542, %v6352
      %6378 = vst.msk [vmem:[%s259 + $0x58] sm:$0xf] %vm6367, %v6353
      %6379 = vst.msk [vmem:[%s259 + $0x60] sm:$0xff] %vm3542, %v6354
      %6380 = vst.msk [vmem:[%s259 + $0x68] sm:$0xf] %vm6367, %v6355
      %6381 = vst.msk [vmem:[%s259 + $0x70] sm:$0xff] %vm3542, %v6356
      %6382 = vst.msk [vmem:[%s259 + $0x78] sm:$0xf] %vm6367, %v6357
      %6383 = vst.msk [vmem:[%s259 + $0x80] sm:$0xff] %vm3542, %v6358
      %6384 = vst.msk [vmem:[%s259 + $0x88] sm:$0xf] %vm6367, %v6359
      %6385 = vst.msk [vmem:[%s259 + $0x90] sm:$0xff] %vm3542, %v6360
      %6386 = vst.msk [vmem:[%s259 + $0x98] sm:$0xf] %vm6367, %v6361
      %6387 = vst.msk [vmem:[%s259 + $0xa0] sm:$0xff] %vm3542, %v6362
      %6388 = vst.msk [vmem:[%s259 + $0xa8] sm:$0xf] %vm6367, %v6363
      %6389 = vst.msk [vmem:[%s259 + $0xb0] sm:$0xff] %vm3542, %v6364
      %6390 = vst.msk [vmem:[%s259 + $0xb8] sm:$0xf] %vm6367, %v6365
      %v6391 = vld [vmem:[%s259] ss:$2 sm:$0x3f]
      %s6392 = scalar_lea.vmem %s259, 32
      %v6393 = vld [vmem:[%s6392] ss:$2 sm:$0x3f]
      %s6394 = scalar_lea.vmem %s259, 64
      %v6395 = vld [vmem:[%s6394] ss:$2 sm:$0x3f]
      %s6396 = scalar_lea.vmem %s259, 96
      %v6397 = vld [vmem:[%s6396] ss:$2 sm:$0x3f]
      %s6398 = scalar_lea.vmem %s259, 128
      %v6399 = vld [vmem:[%s6398] ss:$2 sm:$0x3f]
      %s6400 = scalar_lea.vmem %s259, 160
      %v6401 = vld [vmem:[%s6400] ss:$2 sm:$0x3f]
      %s6402 = scalar_lea.vmem %s259, 1
      %v6403 = vld [vmem:[%s6402] ss:$2 sm:$0x3f]
      %s6404 = scalar_lea.vmem %s259, 33
      %v6405 = vld [vmem:[%s6404] ss:$2 sm:$0x3f]
      %s6406 = scalar_lea.vmem %s259, 65
      %v6407 = vld [vmem:[%s6406] ss:$2 sm:$0x3f]
      %s6408 = scalar_lea.vmem %s259, 97
      %v6409 = vld [vmem:[%s6408] ss:$2 sm:$0x3f]
      %s6410 = scalar_lea.vmem %s259, 129
      %v6411 = vld [vmem:[%s6410] ss:$2 sm:$0x3f]
      %s6412 = scalar_lea.vmem %s259, 161
      %v6413 = vld [vmem:[%s6412] ss:$2 sm:$0x3f]
      %s6414 = scalar_lea.vmem %s259, 16
      %v6415 = vld [vmem:[%s6414] ss:$2 sm:$0x3f]
      %s6416 = scalar_lea.vmem %s6414, 32
      %v6417 = vld [vmem:[%s6416] ss:$2 sm:$0x3f]
      %s6418 = scalar_lea.vmem %s6414, 64
      %v6419 = vld [vmem:[%s6418] ss:$2 sm:$0x3f]
      %s6420 = scalar_lea.vmem %s6414, 96
      %v6421 = vld [vmem:[%s6420] ss:$2 sm:$0x3f]
      %s6422 = scalar_lea.vmem %s6414, 128
      %v6423 = vld [vmem:[%s6422] ss:$2 sm:$0x3f]
      %s6424 = scalar_lea.vmem %s6414, 160
      %v6425 = vld [vmem:[%s6424] ss:$2 sm:$0x3f]
      %s6426 = scalar_lea.vmem %s6414, 1
      %v6427 = vld [vmem:[%s6426] ss:$2 sm:$0x3f]
      %s6428 = scalar_lea.vmem %s6414, 33
      %v6429 = vld [vmem:[%s6428] ss:$2 sm:$0x3f]
      %s6430 = scalar_lea.vmem %s6414, 65
      %v6431 = vld [vmem:[%s6430] ss:$2 sm:$0x3f]
      %s6432 = scalar_lea.vmem %s6414, 97
      %v6433 = vld [vmem:[%s6432] ss:$2 sm:$0x3f]
      %s6434 = scalar_lea.vmem %s6414, 129
      %v6435 = vld [vmem:[%s6434] ss:$2 sm:$0x3f]
      %s6436 = scalar_lea.vmem %s6414, 161
      %v6437 = vld [vmem:[%s6436] ss:$2 sm:$0x3f]
      %v6438 = vmax.f32 %v6391, %v6403
      %v6439 = vmax.f32 %v6393, %v6405
      %v6440 = vmax.f32 %v6395, %v6407
      %v6441 = vmax.f32 %v6397, %v6409
      %v6442 = vmax.f32 %v6399, %v6411
      %v6443 = vmax.f32 %v6401, %v6413
      %v6444 = vmax.f32 %v6415, %v6427
      %v6445 = vmax.f32 %v6417, %v6429
      %v6446 = vmax.f32 %v6419, %v6431
      %v6447 = vmax.f32 %v6421, %v6433
      %v6448 = vmax.f32 %v6423, %v6435
      %v6449 = vmax.f32 %v6425, %v6437
      %v6450 = vmax.f32 %v6438, %v6444
      %v6451 = vmax.f32 %v6439, %v6445
      %v6452 = vmax.f32 %v6440, %v6446
      %v6453 = vmax.f32 %v6441, %v6447
      %v6454 = vmax.f32 %v6442, %v6448
      %v6455 = vmax.f32 %v6443, %v6449
      %vm6456 = vcmask 62464
      %6457 = vst.msk [vmem:[%s264] sm:$0x3f] %vm6456, %v6450
      %6458 = vst.msk [vmem:[%s264 + $0x8] sm:$0x3f] %vm6456, %v6451
      %6459 = vst.msk [vmem:[%s264 + $0x10] sm:$0x3f] %vm6456, %v6452
      %6460 = vst.msk [vmem:[%s264 + $0x18] sm:$0x3f] %vm6456, %v6453
      %6461 = vst.msk [vmem:[%s264 + $0x20] sm:$0x3f] %vm6456, %v6454
      %6462 = vst.msk [vmem:[%s264 + $0x28] sm:$0x3f] %vm6456, %v6455
      %p6463 = scmp.lt.s32.totalorder %s18, 1
      %s6464 = scalar_select %p6463, %s18, 1
      %s6465 = smul.addr %s6464, 24
      %s6466 = smul.addr %s6465, 8
      %s6467 = scalar_lea.vmem %s5, %s6466
      %p6468 = scmp.lt.s32.totalorder %s18, 1
      %s6469 = scalar_select %p6468, %s18, 1
      %s6470 = smul.addr %s6469, 6
      %s6471 = smul.addr %s6470, 8
      %s6472 = scalar_lea.vmem %s6, %s6471
      // Predicated region
      $region41: #{tpu_custom_call.1} parent=39 // pred_check
        %p6473 = pneg %p146
      $region42: #{tpu_custom_call.1} parent=39 // pred_check_branch
        %6475 = sbr.rel (%p6473) target = $region44
      $region43: #{tpu_custom_call.1} parent=39 // pred_region
        _
      $region44: #{tpu_custom_call.1} parent=39 // pred_fallthru
        _
      // Predicated region
      $region45: #{tpu_custom_call.1} parent=39 // pred_check
        %p6476 = pneg %p172
      $region46: #{tpu_custom_call.1} parent=39 // pred_check_branch
        %6478 = sbr.rel (%p6476) target = $region48
      $region47: #{tpu_custom_call.1} parent=39 // pred_region
        _
      $region48: #{tpu_custom_call.1} parent=39 // pred_fallthru
        _
    $region40: #{tpu_custom_call.1} parent=5 // pred_fallthru
      _
    %p6479 = scmp.le.s32.totalorder 2, %s13
    // Predicated region
    $region49: #{tpu_custom_call.1} parent=5 // pred_check
      %p6480 = pneg %p6479
    $region50: #{tpu_custom_call.1} parent=5 // pred_check_branch
      %6482 = sbr.rel (%p6480) target = $region52
    $region51: #{tpu_custom_call.1} parent=5 // pred_region
      %s6483 = ssub.s32 %s13, 2
      // Predicated region
      $region53: #{tpu_custom_call.1} parent=51 // pred_check
        %p6484 = pneg %p152
      $region54: #{tpu_custom_call.1} parent=51 // pred_check_branch
        %6486 = sbr.rel (%p6484) target = $region56
      $region55: #{tpu_custom_call.1} parent=51 // pred_region
        %p6487 = scmp.lt.s32.totalorder %s19, 1
        %s6488 = scalar_select %p6487, %s19, 1
        %s6489 = smul.addr %s6488, 24
        %s6490 = smul.addr %s6489, 8
        %s6491 = scalar_lea.vmem %s5, %s6490
      $region56: #{tpu_custom_call.1} parent=51 // pred_fallthru
        _
      // Predicated region
      $region57: #{tpu_custom_call.1} parent=51 // pred_check
        %p6492 = pneg %p178
      $region58: #{tpu_custom_call.1} parent=51 // pred_check_branch
        %6494 = sbr.rel (%p6492) target = $region60
      $region59: #{tpu_custom_call.1} parent=51 // pred_region
        %p6495 = scmp.lt.s32.totalorder %s19, 1
        %s6496 = scalar_select %p6495, %s19, 1
        %s6497 = smul.addr %s6496, 6
        %s6498 = smul.addr %s6497, 8
        %s6499 = scalar_lea.vmem %s6, %s6498
      $region60: #{tpu_custom_call.1} parent=51 // pred_fallthru
        _
    $region52: #{tpu_custom_call.1} parent=5 // pred_fallthru
      _
  $region6: #{tpu_custom_call.1} parent=0 // loop_footer
    %s17 = sadd.s32 1, %s13
  $region7: #{tpu_custom_call.1} parent=0 // loop_footer_branch
    %12 = sbr.rel target = $region3
  $region8: #{tpu_custom_call.1} parent=0 // loop_exit
    _

</llo_original>
